<compile_context>
chip_gen: v7x
topology: tpu7x:2x2x1
jax: 0.10.0
libtpu: 0.0.40
codegen_flags: <defaults>
</compile_context>

<pallas_src>
import math

import jax
import jax.numpy as jnp
from jax import lax
from jax.experimental import pallas as pl
from jax.experimental.pallas import tpu as pltpu  # noqa: F401

# ---------------- model config (synthetic mini-BERT) ----------------
VOCAB = 64
TYPE_VOCAB = 4
MAX_POS = 64
HIDDEN = 32
NUM_HEADS = 2
HEAD_DIM = HIDDEN // NUM_HEADS
FFN = 64
NLAYERS = 2
LN_EPS = 1e-12
TBL = VOCAB + TYPE_VOCAB + MAX_POS        # stacked embedding table rows
VEC_ROWS = 2 + 10 * NLAYERS               # packed bias/LN slab rows


# ---------------- small in-kernel helpers ----------------
def _layernorm(x, g, b):
    mu = jnp.mean(x, axis=-1, keepdims=True)
    var = jnp.mean(jnp.square(x - mu), axis=-1, keepdims=True)
    return (x - mu) * lax.rsqrt(var + LN_EPS) * g + b


def _gelu(x):
    # tanh approximation of GELU (EUP-friendly on TPU)
    return 0.5 * x * (1.0 + jnp.tanh(0.7978845608028654 * (x + 0.044715 * x * x * x)))


# ---------------- fused Pallas kernel ----------------
def fused_bert_kernel(idx_ref, amask_ref, gidx_ref,
                      emb_ref, wa_ref, w2_ref, vec_ref,
                      out_ref):
    # idx_ref   : (flh, 3)   int32  pre-biased word / type / position table indices
    # amask_ref : (flh, flh) f32    additive attention mask (block-diag + padding)
    # gidx_ref  : (NG, 1)    int32  pre-biased gather rows into the (flh, H) seq output
    # emb_ref   : (TBL, H)   bf16   stacked word|type|pos embedding table
    # wa_ref    : (NL, H, 3H+H+F) bf16   per-layer wq|wk|wv | wo | w1
    # w2_ref    : (NL, F, H) bf16
    # vec_ref   : (VEC_ROWS, F) f32 packed biases + LN params
    flh = idx_ref.shape[0]
    H, F, hd = HIDDEN, FFN, HEAD_DIM
    bf = jnp.bfloat16

    def vrow(r, w=H):
        return vec_ref[r:r + 1, 0:w]           # (1, w) static slice

    # ---------- fused word + type + position embedding (one bf16 one-hot matmul) ----------
    idx = idx_ref[...]
    ti = lax.broadcasted_iota(jnp.int32, (flh, TBL), 1)
    oh = ((ti == idx[:, 0:1]) | (ti == idx[:, 1:2]) | (ti == idx[:, 2:3])).astype(bf)
    x = jnp.dot(oh, emb_ref[...], preferred_element_type=jnp.float32)   # (flh, H) f32
    x = _layernorm(x, vrow(0), vrow(1))

    # ---------- hoisted attention helpers ----------
    amask = amask_ref[...]                                               # (flh, flh)
    lane = lax.broadcasted_iota(jnp.int32, (1, H), 1)
    head_masks = [((lane >= h * hd) & (lane < (h + 1) * hd)).astype(jnp.float32)
                  for h in range(NUM_HEADS)]
    scale = 1.0 / math.sqrt(hd)

    # ---------- encoder layers ----------
    for l in range(NLAYERS):
        base = 2 + l * 10
        xb = x.astype(bf)

        # fused QKV projection: one MXU push -> (flh, 3H), biases added after split
        qkv = jnp.dot(xb, wa_ref[l, :, 0:3 * H], preferred_element_type=jnp.float32)
        q = qkv[:, 0:H] + vrow(base + 0)
        k = qkv[:, H:2 * H] + vrow(base + 1)
        v = qkv[:, 2 * H:3 * H] + vrow(base + 2)

        qb = q.astype(bf)
        ctx = jnp.zeros((flh, H), jnp.float32)
        for h in range(NUM_HEADS):
            hm = head_masks[h]
            kh = (k * hm).astype(bf)                                     # head-h lanes only
            s = lax.dot_general(qb, kh, (((1,), (1,)), ((), ())),
                                preferred_element_type=jnp.float32) * scale  # (flh, flh)
            s = s + amask
            s = s - jnp.max(s, axis=-1, keepdims=True)
            p = jnp.exp(s)
            p = p * pl.reciprocal(jnp.sum(p, axis=-1, keepdims=True), approx=True)
            vh = (v * hm).astype(bf)
            ctx = ctx + jnp.dot(p.astype(bf), vh, preferred_element_type=jnp.float32)

        attn = jnp.dot(ctx.astype(bf), wa_ref[l, :, 3 * H:4 * H],
                       preferred_element_type=jnp.float32) + vrow(base + 3)
        h1 = _layernorm(x + attn, vrow(base + 4), vrow(base + 5))

        ff = jnp.dot(h1.astype(bf), wa_ref[l, :, 4 * H:4 * H + F],
                     preferred_element_type=jnp.float32) + vrow(base + 6, F)
        ff = _gelu(ff)
        ff = jnp.dot(ff.astype(bf), w2_ref[l], preferred_element_type=jnp.float32) + vrow(base + 7)
        x = _layernorm(h1 + ff, vrow(base + 8), vrow(base + 9))

    # ---------- non-word-piece gathers: one bf16 one-hot matmul on the 2-D seq output ----------
    ng = gidx_ref.shape[0]
    gi = lax.broadcasted_iota(jnp.int32, (ng, flh), 1)
    goh = (gi == gidx_ref[...]).astype(bf)
    out_ref[...] = jnp.dot(goh, x.astype(bf), preferred_element_type=jnp.float32)


# ---------------- one-time parameter packing (outside the jitted forward) ----------------
def pack_params(params):
    bf = jnp.bfloat16
    F, NL = FFN, NLAYERS

    emb_table = jnp.concatenate(
        [params['word_emb'], params['type_emb'], params['pos_emb']], axis=0).astype(bf)  # (TBL, H)
    wa = jnp.concatenate(
        [params['wq'], params['wk'], params['wv'], params['wo'], params['w1']],
        axis=-1).astype(bf)                                                  # (NL, H, 3H+H+F)
    w2 = params['w2'].astype(bf)                                             # (NL, F, H)

    def row(v):  # pad a (1, H)/(1, F) row vector out to F lanes
        return jnp.pad(v, ((0, 0), (0, F - v.shape[-1])))

    rows = [row(params['emb_ln_g']), row(params['emb_ln_b'])]
    for l in range(NL):
        rows += [row(params['bq'][l]), row(params['bk'][l]), row(params['bv'][l]),
                 row(params['bo'][l]), row(params['ln1_g'][l]), row(params['ln1_b'][l]),
                 row(params['b1'][l]),
                 row(params['b2'][l]), row(params['ln2_g'][l]), row(params['ln2_b'][l])]
    vec = jnp.concatenate(rows, axis=0).astype(jnp.float32)                  # (VEC_ROWS, F)

    return {'emb_table': emb_table, 'wa': wa, 'w2': w2, 'vec': vec}


# ---------------- embedder forward (mirrors BertContextEmbedder.concatenate_reps) ----------------
def bert_context_embedder_forward(packed,
                                  test_token_ids, test_segment_ids, test_adj,
                                  test_nwp_index, test_input_mask,
                                  support_token_ids, support_segment_ids, support_adj,
                                  support_nwp_index, support_input_mask):
    """opt.gcns = 0 path. test_adj / support_adj are accepted but unused."""
    B, S, Ls = support_token_ids.shape
    Lt = test_token_ids.shape[-1]
    test_len = Lt - 2
    support_len = Ls - 1
    flat = B * S

    def expand(x):
        return jnp.broadcast_to(x[:, None, ...], (B, S) + x.shape[1:])

    input_ids = jnp.concatenate([expand(test_token_ids), support_token_ids], axis=-1)
    segment_ids = jnp.concatenate([expand(test_segment_ids), support_segment_ids], axis=-1)
    input_mask = jnp.concatenate([expand(test_input_mask), support_input_mask], axis=-1)

    L = input_ids.shape[-1]
    flh = flat * L

    # packed embedding indices (word | type | position), pre-biased into the stacked table
    ids_f = input_ids.reshape(flh).astype(jnp.int32)
    seg_f = segment_ids.reshape(flh).astype(jnp.int32)
    pos_f = jnp.tile(jnp.arange(L, dtype=jnp.int32), flat)
    idx = jnp.stack([ids_f, VOCAB + seg_f, VOCAB + TYPE_VOCAB + pos_f], axis=1)   # (flh, 3)

    # 2-D additive attention mask: block-diagonal per sequence + key padding
    keep = input_mask.astype(jnp.float32).reshape(flh)
    row_seq = jnp.repeat(jnp.arange(flat, dtype=jnp.int32), L)
    same = (row_seq[:, None] == row_seq[None, :]).astype(jnp.float32)
    amask = (same * keep[None, :] - 1.0) * 10000.0                                # (flh, flh)

    # gather rows in the (flh, H) sequence output:
    #   test tokens at rows f*L + 1 + idx,  support tokens at rows f*L + (2+test_len) + idx
    roff = (jnp.arange(flat, dtype=jnp.int32) * L)[:, None]
    tg = expand(test_nwp_index).reshape(flat, test_len).astype(jnp.int32) + 1 + roff
    sg = support_nwp_index.reshape(flat, support_len).astype(jnp.int32) + (2 + test_len) + roff
    gidx = jnp.concatenate([tg.reshape(-1, 1), sg.reshape(-1, 1)], axis=0)        # (NG, 1)

    ng = flat * (test_len + support_len)
    out = pl.pallas_call(
        fused_bert_kernel,
        out_shape=jax.ShapeDtypeStruct((ng, HIDDEN), jnp.float32),
    )(idx, amask, gidx, packed['emb_table'], packed['wa'], packed['w2'], packed['vec'])

    nwp_test = out[:flat * test_len].reshape(B, S, test_len, HIDDEN)
    nwp_support = out[flat * test_len:].reshape(B, S, support_len, HIDDEN)
    return nwp_test, nwp_support, 1, 1


# ---------------- deterministic parameter init (layer-stacked weights) ----------------
def init_params(key):
    ks = iter(jax.random.split(key, 64))

    def nrm(shape):
        return (0.02 * jax.random.normal(next(ks), shape)).astype(jnp.float32)

    H, F, NL = HIDDEN, FFN, NLAYERS
    params = {
        'word_emb': nrm((VOCAB, H)),
        'pos_emb': nrm((MAX_POS, H)),
        'type_emb': nrm((TYPE_VOCAB, H)),
        'emb_ln_g': jnp.ones((1, H), jnp.float32),
        'emb_ln_b': jnp.zeros((1, H), jnp.float32),
        'wq': nrm((NL, H, H)), 'bq': jnp.zeros((NL, 1, H), jnp.float32),
        'wk': nrm((NL, H, H)), 'bk': jnp.zeros((NL, 1, H), jnp.float32),
        'wv': nrm((NL, H, H)), 'bv': jnp.zeros((NL, 1, H), jnp.float32),
        'wo': nrm((NL, H, H)), 'bo': jnp.zeros((NL, 1, H), jnp.float32),
        'ln1_g': jnp.ones((NL, 1, H), jnp.float32),
        'ln1_b': jnp.zeros((NL, 1, H), jnp.float32),
        'w1': nrm((NL, H, F)), 'b1': jnp.zeros((NL, 1, F), jnp.float32),
        'w2': nrm((NL, F, H)), 'b2': jnp.zeros((NL, 1, H), jnp.float32),
        'ln2_g': jnp.ones((NL, 1, H), jnp.float32),
        'ln2_b': jnp.zeros((NL, 1, H), jnp.float32),
    }
    return params


if __name__ == "__main__":
    B, S = 2, 2
    Lt, Ls = 8, 8              # test seq len (incl [CLS]+[SEP]), support seq len (incl [SEP])
    test_len, support_len = Lt - 2, Ls - 1

    key = jax.random.PRNGKey(0)
    kp, k1, k2, k3, k4 = jax.random.split(key, 5)
    params = init_params(kp)
    packed = pack_params(params)           # one-time packing, outside the jitted forward

    test_token_ids = jax.random.randint(k1, (B, Lt), 1, VOCAB)
    support_token_ids = jax.random.randint(k2, (B, S, Ls), 1, VOCAB)
    test_segment_ids = jnp.zeros((B, Lt), jnp.int32)
    support_segment_ids = jnp.ones((B, S, Ls), jnp.int32)
    test_input_mask = jnp.ones((B, Lt), jnp.int32).at[:, -1].set(0)
    support_input_mask = jnp.ones((B, S, Ls), jnp.int32).at[:, :, -1].set(0)
    test_nwp_index = jax.random.randint(k3, (B, test_len, 1), 0, test_len)
    support_nwp_index = jax.random.randint(k4, (B, S, support_len, 1), 0, support_len)
    test_adj = jnp.zeros((B, 3, test_len, test_len), jnp.float32)              # unused (gcns=0)
    support_adj = jnp.zeros((B, S, 3, support_len, support_len), jnp.float32)  # unused (gcns=0)

    fwd = jax.jit(bert_context_embedder_forward)
    nwp_test, nwp_support, _, _ = fwd(
        packed,
        test_token_ids, test_segment_ids, test_adj, test_nwp_index, test_input_mask,
        support_token_ids, support_segment_ids, support_adj, support_nwp_index,
        support_input_mask)

    jax.block_until_ready((nwp_test, nwp_support))
    assert nwp_test.shape == (B, S, test_len, HIDDEN), nwp_test.shape
    assert nwp_support.shape == (B, S, support_len, HIDDEN), nwp_support.shape
    assert jnp.all(jnp.isfinite(nwp_test)) and jnp.all(jnp.isfinite(nwp_support))
    print("KERNEL_OK")
</pallas_src>

<mosaic_0001>
module attributes {stable_mosaic.version = 11 : i64} {
  func.func @fused_bert_kernel(%arg0: memref<64x3xi32, #tpu.memory_space<vmem>>, %arg1: memref<64x64xf32, #tpu.memory_space<vmem>>, %arg2: memref<52x1xi32, #tpu.memory_space<vmem>>, %arg3: memref<132x32xbf16, #tpu.memory_space<vmem>>, %arg4: memref<2x32x192xbf16, #tpu.memory_space<vmem>>, %arg5: memref<2x64x32xbf16, #tpu.memory_space<vmem>>, %arg6: memref<22x64xf32, #tpu.memory_space<vmem>>, %arg7: memref<52x32xf32, #tpu.memory_space<vmem>>) attributes {dimension_semantics = [], scalar_prefetch = 0 : i64, scratch_operands = 0 : i64, tpu.core_type = #tpu.core_type<tc>} {
    %c0 = arith.constant 0 : index
    %c0_0 = arith.constant 0 : index
    %0 = vector.load %arg0[%c0, %c0_0] : memref<64x3xi32, #tpu.memory_space<vmem>>, vector<64x3xi32>
    %1 = tpu.iota {dimensions = array<i32: 1>} : vector<64x132xi32>
    %2 = vector.extract_strided_slice %0 {offsets = [0, 0], sizes = [64, 1], strides = [1, 1]} : vector<64x3xi32> to vector<64x1xi32>
    %3 = vector.broadcast %2 : vector<64x1xi32> to vector<64x132xi32>
    %4 = arith.cmpi eq, %1, %3 : vector<64x132xi32>
    %5 = vector.extract_strided_slice %0 {offsets = [0, 1], sizes = [64, 1], strides = [1, 1]} : vector<64x3xi32> to vector<64x1xi32>
    %6 = vector.broadcast %5 : vector<64x1xi32> to vector<64x132xi32>
    %7 = arith.cmpi eq, %1, %6 : vector<64x132xi32>
    %8 = arith.ori %4, %7 : vector<64x132xi1>
    %9 = vector.extract_strided_slice %0 {offsets = [0, 2], sizes = [64, 1], strides = [1, 1]} : vector<64x3xi32> to vector<64x1xi32>
    %10 = vector.broadcast %9 : vector<64x1xi32> to vector<64x132xi32>
    %11 = arith.cmpi eq, %1, %10 : vector<64x132xi32>
    %12 = arith.ori %8, %11 : vector<64x132xi1>
    %13 = arith.extui %12 : vector<64x132xi1> to vector<64x132xi32>
    %14 = arith.sitofp %13 : vector<64x132xi32> to vector<64x132xf32>
    %15 = arith.truncf %14 : vector<64x132xf32> to vector<64x132xbf16>
    %c0_1 = arith.constant 0 : index
    %c0_2 = arith.constant 0 : index
    %16 = vector.load %arg3[%c0_1, %c0_2] : memref<132x32xbf16, #tpu.memory_space<vmem>>, vector<132x32xbf16>
    %cst = arith.constant dense<0.000000e+00> : vector<64x32xf32>
    %17 = tpu.matmul %15, %16, %cst {dimension_numbers = #tpu.dot_dimension_numbers<[1], [0], [0], [1], [0, 0, 1, 1], [], []>} : vector<64x132xbf16>, vector<132x32xbf16>, vector<64x32xf32> -> vector<64x32xf32>
    %c0_3 = arith.constant 0 : index
    %c0_4 = arith.constant 0 : index
    %18 = vector.load %arg6[%c0_3, %c0_4] : memref<22x64xf32, #tpu.memory_space<vmem>>, vector<1x32xf32>
    %c1 = arith.constant 1 : index
    %c0_5 = arith.constant 0 : index
    %19 = vector.load %arg6[%c1, %c0_5] : memref<22x64xf32, #tpu.memory_space<vmem>>, vector<1x32xf32>
    %cst_6 = arith.constant dense<0.000000e+00> : vector<64xf32>
    %20 = vector.multi_reduction <add>, %17, %cst_6 [1] : vector<64x32xf32> to vector<64xf32>
    %21 = vector.shape_cast %20 : vector<64xf32> to vector<64x1xf32>
    %cst_7 = arith.constant 3.200000e+01 : f32
    %22 = vector.broadcast %cst_7 : f32 to vector<64x1xf32>
    %23 = arith.divf %21, %22 : vector<64x1xf32>
    %24 = vector.broadcast %23 : vector<64x1xf32> to vector<64x32xf32>
    %25 = arith.subf %17, %24 : vector<64x32xf32>
    %26 = arith.mulf %25, %25 : vector<64x32xf32>
    %cst_8 = arith.constant dense<0.000000e+00> : vector<64xf32>
    %27 = vector.multi_reduction <add>, %26, %cst_8 [1] : vector<64x32xf32> to vector<64xf32>
    %28 = vector.shape_cast %27 : vector<64xf32> to vector<64x1xf32>
    %cst_9 = arith.constant 3.200000e+01 : f32
    %29 = vector.broadcast %cst_9 : f32 to vector<64x1xf32>
    %30 = arith.divf %28, %29 : vector<64x1xf32>
    %31 = vector.broadcast %23 : vector<64x1xf32> to vector<64x32xf32>
    %32 = arith.subf %17, %31 : vector<64x32xf32>
    %cst_10 = arith.constant 9.99999996E-13 : f32
    %33 = vector.broadcast %cst_10 : f32 to vector<64x1xf32>
    %34 = arith.addf %30, %33 : vector<64x1xf32>
    %35 = math.rsqrt %34 : vector<64x1xf32>
    %36 = vector.broadcast %35 : vector<64x1xf32> to vector<64x32xf32>
    %37 = arith.mulf %32, %36 : vector<64x32xf32>
    %38 = vector.broadcast %18 : vector<1x32xf32> to vector<64x32xf32>
    %39 = arith.mulf %37, %38 : vector<64x32xf32>
    %40 = vector.broadcast %19 : vector<1x32xf32> to vector<64x32xf32>
    %41 = arith.addf %39, %40 : vector<64x32xf32>
    %c0_11 = arith.constant 0 : index
    %c0_12 = arith.constant 0 : index
    %42 = vector.load %arg1[%c0_11, %c0_12] : memref<64x64xf32, #tpu.memory_space<vmem>>, vector<64x64xf32>
    %43 = tpu.iota {dimensions = array<i32: 1>} : vector<1x32xi32>
    %c0_i32 = arith.constant 0 : i32
    %44 = vector.broadcast %c0_i32 : i32 to vector<1x32xi32>
    %45 = arith.cmpi sge, %43, %44 : vector<1x32xi32>
    %c16_i32 = arith.constant 16 : i32
    %46 = vector.broadcast %c16_i32 : i32 to vector<1x32xi32>
    %47 = arith.cmpi slt, %43, %46 : vector<1x32xi32>
    %48 = arith.andi %45, %47 : vector<1x32xi1>
    %49 = arith.extui %48 : vector<1x32xi1> to vector<1x32xi32>
    %50 = arith.sitofp %49 : vector<1x32xi32> to vector<1x32xf32>
    %c16_i32_13 = arith.constant 16 : i32
    %51 = vector.broadcast %c16_i32_13 : i32 to vector<1x32xi32>
    %52 = arith.cmpi sge, %43, %51 : vector<1x32xi32>
    %c32_i32 = arith.constant 32 : i32
    %53 = vector.broadcast %c32_i32 : i32 to vector<1x32xi32>
    %54 = arith.cmpi slt, %43, %53 : vector<1x32xi32>
    %55 = arith.andi %52, %54 : vector<1x32xi1>
    %56 = arith.extui %55 : vector<1x32xi1> to vector<1x32xi32>
    %57 = arith.sitofp %56 : vector<1x32xi32> to vector<1x32xf32>
    %58 = arith.truncf %41 : vector<64x32xf32> to vector<64x32xbf16>
    %c0_14 = arith.constant 0 : index
    %c0_15 = arith.constant 0 : index
    %c0_16 = arith.constant 0 : index
    %59 = vector.load %arg4[%c0_14, %c0_15, %c0_16] : memref<2x32x192xbf16, #tpu.memory_space<vmem>>, vector<1x32x96xbf16>
    %60 = vector.shape_cast %59 : vector<1x32x96xbf16> to vector<32x96xbf16>
    %cst_17 = arith.constant dense<0.000000e+00> : vector<64x96xf32>
    %61 = tpu.matmul %58, %60, %cst_17 {dimension_numbers = #tpu.dot_dimension_numbers<[1], [0], [0], [1], [0, 0, 1, 1], [], []>} : vector<64x32xbf16>, vector<32x96xbf16>, vector<64x96xf32> -> vector<64x96xf32>
    %62 = vector.extract_strided_slice %61 {offsets = [0, 0], sizes = [64, 32], strides = [1, 1]} : vector<64x96xf32> to vector<64x32xf32>
    %c2 = arith.constant 2 : index
    %c0_18 = arith.constant 0 : index
    %63 = vector.load %arg6[%c2, %c0_18] : memref<22x64xf32, #tpu.memory_space<vmem>>, vector<1x32xf32>
    %64 = vector.broadcast %63 : vector<1x32xf32> to vector<64x32xf32>
    %65 = arith.addf %62, %64 : vector<64x32xf32>
    %66 = vector.extract_strided_slice %61 {offsets = [0, 32], sizes = [64, 32], strides = [1, 1]} : vector<64x96xf32> to vector<64x32xf32>
    %c3 = arith.constant 3 : index
    %c0_19 = arith.constant 0 : index
    %67 = vector.load %arg6[%c3, %c0_19] : memref<22x64xf32, #tpu.memory_space<vmem>>, vector<1x32xf32>
    %68 = vector.broadcast %67 : vector<1x32xf32> to vector<64x32xf32>
    %69 = arith.addf %66, %68 : vector<64x32xf32>
    %70 = vector.extract_strided_slice %61 {offsets = [0, 64], sizes = [64, 32], strides = [1, 1]} : vector<64x96xf32> to vector<64x32xf32>
    %c4 = arith.constant 4 : index
    %c0_20 = arith.constant 0 : index
    %71 = vector.load %arg6[%c4, %c0_20] : memref<22x64xf32, #tpu.memory_space<vmem>>, vector<1x32xf32>
    %72 = vector.broadcast %71 : vector<1x32xf32> to vector<64x32xf32>
    %73 = arith.addf %70, %72 : vector<64x32xf32>
    %74 = arith.truncf %65 : vector<64x32xf32> to vector<64x32xbf16>
    %cst_21 = arith.constant 0.000000e+00 : f32
    %75 = vector.broadcast %cst_21 : f32 to vector<64x32xf32>
    %76 = vector.broadcast %50 : vector<1x32xf32> to vector<64x32xf32>
    %77 = arith.mulf %69, %76 : vector<64x32xf32>
    %78 = arith.truncf %77 : vector<64x32xf32> to vector<64x32xbf16>
    %cst_22 = arith.constant dense<0.000000e+00> : vector<64x64xf32>
    %79 = tpu.matmul %74, %78, %cst_22 {dimension_numbers = #tpu.dot_dimension_numbers<[1], [1], [0], [0], [0, 0, 1, 0], [], []>} : vector<64x32xbf16>, vector<64x32xbf16>, vector<64x64xf32> -> vector<64x64xf32>
    %cst_23 = arith.constant 2.500000e-01 : f32
    %80 = vector.broadcast %cst_23 : f32 to vector<64x64xf32>
    %81 = arith.mulf %79, %80 : vector<64x64xf32>
    %82 = arith.addf %81, %42 : vector<64x64xf32>
    %cst_24 = arith.constant dense<0xFF800000> : vector<64xf32>
    %83 = vector.multi_reduction <maximumf>, %82, %cst_24 [1] : vector<64x64xf32> to vector<64xf32>
    %84 = vector.shape_cast %83 : vector<64xf32> to vector<64x1xf32>
    %85 = vector.broadcast %84 : vector<64x1xf32> to vector<64x64xf32>
    %86 = arith.subf %82, %85 : vector<64x64xf32>
    %87 = math.exp %86 : vector<64x64xf32>
    %cst_25 = arith.constant dense<0.000000e+00> : vector<64xf32>
    %88 = vector.multi_reduction <add>, %87, %cst_25 [1] : vector<64x64xf32> to vector<64xf32>
    %89 = vector.shape_cast %88 : vector<64xf32> to vector<64x1xf32>
    %90 = tpu.reciprocal %89 {approx = true} : vector<64x1xf32> -> vector<64x1xf32>
    %91 = vector.broadcast %90 : vector<64x1xf32> to vector<64x64xf32>
    %92 = arith.mulf %87, %91 : vector<64x64xf32>
    %93 = vector.broadcast %50 : vector<1x32xf32> to vector<64x32xf32>
    %94 = arith.mulf %73, %93 : vector<64x32xf32>
    %95 = arith.truncf %94 : vector<64x32xf32> to vector<64x32xbf16>
    %96 = arith.truncf %92 : vector<64x64xf32> to vector<64x64xbf16>
    %cst_26 = arith.constant dense<0.000000e+00> : vector<64x32xf32>
    %97 = tpu.matmul %96, %95, %cst_26 {dimension_numbers = #tpu.dot_dimension_numbers<[1], [0], [0], [1], [0, 0, 1, 1], [], []>} : vector<64x64xbf16>, vector<64x32xbf16>, vector<64x32xf32> -> vector<64x32xf32>
    %98 = arith.addf %75, %97 : vector<64x32xf32>
    %99 = vector.broadcast %57 : vector<1x32xf32> to vector<64x32xf32>
    %100 = arith.mulf %69, %99 : vector<64x32xf32>
    %101 = arith.truncf %100 : vector<64x32xf32> to vector<64x32xbf16>
    %cst_27 = arith.constant dense<0.000000e+00> : vector<64x64xf32>
    %102 = tpu.matmul %74, %101, %cst_27 {dimension_numbers = #tpu.dot_dimension_numbers<[1], [1], [0], [0], [0, 0, 1, 0], [], []>} : vector<64x32xbf16>, vector<64x32xbf16>, vector<64x64xf32> -> vector<64x64xf32>
    %cst_28 = arith.constant 2.500000e-01 : f32
    %103 = vector.broadcast %cst_28 : f32 to vector<64x64xf32>
    %104 = arith.mulf %102, %103 : vector<64x64xf32>
    %105 = arith.addf %104, %42 : vector<64x64xf32>
    %cst_29 = arith.constant dense<0xFF800000> : vector<64xf32>
    %106 = vector.multi_reduction <maximumf>, %105, %cst_29 [1] : vector<64x64xf32> to vector<64xf32>
    %107 = vector.shape_cast %106 : vector<64xf32> to vector<64x1xf32>
    %108 = vector.broadcast %107 : vector<64x1xf32> to vector<64x64xf32>
    %109 = arith.subf %105, %108 : vector<64x64xf32>
    %110 = math.exp %109 : vector<64x64xf32>
    %cst_30 = arith.constant dense<0.000000e+00> : vector<64xf32>
    %111 = vector.multi_reduction <add>, %110, %cst_30 [1] : vector<64x64xf32> to vector<64xf32>
    %112 = vector.shape_cast %111 : vector<64xf32> to vector<64x1xf32>
    %113 = tpu.reciprocal %112 {approx = true} : vector<64x1xf32> -> vector<64x1xf32>
    %114 = vector.broadcast %113 : vector<64x1xf32> to vector<64x64xf32>
    %115 = arith.mulf %110, %114 : vector<64x64xf32>
    %116 = vector.broadcast %57 : vector<1x32xf32> to vector<64x32xf32>
    %117 = arith.mulf %73, %116 : vector<64x32xf32>
    %118 = arith.truncf %117 : vector<64x32xf32> to vector<64x32xbf16>
    %119 = arith.truncf %115 : vector<64x64xf32> to vector<64x64xbf16>
    %cst_31 = arith.constant dense<0.000000e+00> : vector<64x32xf32>
    %120 = tpu.matmul %119, %118, %cst_31 {dimension_numbers = #tpu.dot_dimension_numbers<[1], [0], [0], [1], [0, 0, 1, 1], [], []>} : vector<64x64xbf16>, vector<64x32xbf16>, vector<64x32xf32> -> vector<64x32xf32>
    %121 = arith.addf %98, %120 : vector<64x32xf32>
    %122 = arith.truncf %121 : vector<64x32xf32> to vector<64x32xbf16>
    %c0_32 = arith.constant 0 : index
    %c0_33 = arith.constant 0 : index
    %c96 = arith.constant 96 : index
    %123 = vector.load %arg4[%c0_32, %c0_33, %c96] : memref<2x32x192xbf16, #tpu.memory_space<vmem>>, vector<1x32x32xbf16>
    %124 = vector.shape_cast %123 : vector<1x32x32xbf16> to vector<32x32xbf16>
    %cst_34 = arith.constant dense<0.000000e+00> : vector<64x32xf32>
    %125 = tpu.matmul %122, %124, %cst_34 {dimension_numbers = #tpu.dot_dimension_numbers<[1], [0], [0], [1], [0, 0, 1, 1], [], []>} : vector<64x32xbf16>, vector<32x32xbf16>, vector<64x32xf32> -> vector<64x32xf32>
    %c5 = arith.constant 5 : index
    %c0_35 = arith.constant 0 : index
    %126 = vector.load %arg6[%c5, %c0_35] : memref<22x64xf32, #tpu.memory_space<vmem>>, vector<1x32xf32>
    %127 = vector.broadcast %126 : vector<1x32xf32> to vector<64x32xf32>
    %128 = arith.addf %125, %127 : vector<64x32xf32>
    %129 = arith.addf %41, %128 : vector<64x32xf32>
    %c6 = arith.constant 6 : index
    %c0_36 = arith.constant 0 : index
    %130 = vector.load %arg6[%c6, %c0_36] : memref<22x64xf32, #tpu.memory_space<vmem>>, vector<1x32xf32>
    %c7 = arith.constant 7 : index
    %c0_37 = arith.constant 0 : index
    %131 = vector.load %arg6[%c7, %c0_37] : memref<22x64xf32, #tpu.memory_space<vmem>>, vector<1x32xf32>
    %cst_38 = arith.constant dense<0.000000e+00> : vector<64xf32>
    %132 = vector.multi_reduction <add>, %129, %cst_38 [1] : vector<64x32xf32> to vector<64xf32>
    %133 = vector.shape_cast %132 : vector<64xf32> to vector<64x1xf32>
    %cst_39 = arith.constant 3.200000e+01 : f32
    %134 = vector.broadcast %cst_39 : f32 to vector<64x1xf32>
    %135 = arith.divf %133, %134 : vector<64x1xf32>
    %136 = vector.broadcast %135 : vector<64x1xf32> to vector<64x32xf32>
    %137 = arith.subf %129, %136 : vector<64x32xf32>
    %138 = arith.mulf %137, %137 : vector<64x32xf32>
    %cst_40 = arith.constant dense<0.000000e+00> : vector<64xf32>
    %139 = vector.multi_reduction <add>, %138, %cst_40 [1] : vector<64x32xf32> to vector<64xf32>
    %140 = vector.shape_cast %139 : vector<64xf32> to vector<64x1xf32>
    %cst_41 = arith.constant 3.200000e+01 : f32
    %141 = vector.broadcast %cst_41 : f32 to vector<64x1xf32>
    %142 = arith.divf %140, %141 : vector<64x1xf32>
    %143 = vector.broadcast %135 : vector<64x1xf32> to vector<64x32xf32>
    %144 = arith.subf %129, %143 : vector<64x32xf32>
    %cst_42 = arith.constant 9.99999996E-13 : f32
    %145 = vector.broadcast %cst_42 : f32 to vector<64x1xf32>
    %146 = arith.addf %142, %145 : vector<64x1xf32>
    %147 = math.rsqrt %146 : vector<64x1xf32>
    %148 = vector.broadcast %147 : vector<64x1xf32> to vector<64x32xf32>
    %149 = arith.mulf %144, %148 : vector<64x32xf32>
    %150 = vector.broadcast %130 : vector<1x32xf32> to vector<64x32xf32>
    %151 = arith.mulf %149, %150 : vector<64x32xf32>
    %152 = vector.broadcast %131 : vector<1x32xf32> to vector<64x32xf32>
    %153 = arith.addf %151, %152 : vector<64x32xf32>
    %154 = arith.truncf %153 : vector<64x32xf32> to vector<64x32xbf16>
    %c0_43 = arith.constant 0 : index
    %c0_44 = arith.constant 0 : index
    %c128 = arith.constant 128 : index
    %155 = vector.load %arg4[%c0_43, %c0_44, %c128] : memref<2x32x192xbf16, #tpu.memory_space<vmem>>, vector<1x32x64xbf16>
    %156 = vector.shape_cast %155 : vector<1x32x64xbf16> to vector<32x64xbf16>
    %cst_45 = arith.constant dense<0.000000e+00> : vector<64x64xf32>
    %157 = tpu.matmul %154, %156, %cst_45 {dimension_numbers = #tpu.dot_dimension_numbers<[1], [0], [0], [1], [0, 0, 1, 1], [], []>} : vector<64x32xbf16>, vector<32x64xbf16>, vector<64x64xf32> -> vector<64x64xf32>
    %c8 = arith.constant 8 : index
    %c0_46 = arith.constant 0 : index
    %158 = vector.load %arg6[%c8, %c0_46] : memref<22x64xf32, #tpu.memory_space<vmem>>, vector<1x64xf32>
    %159 = vector.broadcast %158 : vector<1x64xf32> to vector<64x64xf32>
    %160 = arith.addf %157, %159 : vector<64x64xf32>
    %cst_47 = arith.constant 5.000000e-01 : f32
    %161 = vector.broadcast %cst_47 : f32 to vector<64x64xf32>
    %162 = arith.mulf %161, %160 : vector<64x64xf32>
    %cst_48 = arith.constant 4.471500e-02 : f32
    %163 = vector.broadcast %cst_48 : f32 to vector<64x64xf32>
    %164 = arith.mulf %163, %160 : vector<64x64xf32>
    %165 = arith.mulf %164, %160 : vector<64x64xf32>
    %166 = arith.mulf %165, %160 : vector<64x64xf32>
    %167 = arith.addf %160, %166 : vector<64x64xf32>
    %cst_49 = arith.constant 0.797884583 : f32
    %168 = vector.broadcast %cst_49 : f32 to vector<64x64xf32>
    %169 = arith.mulf %168, %167 : vector<64x64xf32>
    %170 = math.tanh %169 : vector<64x64xf32>
    %cst_50 = arith.constant 1.000000e+00 : f32
    %171 = vector.broadcast %cst_50 : f32 to vector<64x64xf32>
    %172 = arith.addf %171, %170 : vector<64x64xf32>
    %173 = arith.mulf %162, %172 : vector<64x64xf32>
    %174 = arith.truncf %173 : vector<64x64xf32> to vector<64x64xbf16>
    %c0_51 = arith.constant 0 : index
    %c0_52 = arith.constant 0 : index
    %c0_53 = arith.constant 0 : index
    %175 = vector.load %arg5[%c0_51, %c0_52, %c0_53] : memref<2x64x32xbf16, #tpu.memory_space<vmem>>, vector<1x64x32xbf16>
    %176 = vector.shape_cast %175 : vector<1x64x32xbf16> to vector<64x32xbf16>
    %cst_54 = arith.constant dense<0.000000e+00> : vector<64x32xf32>
    %177 = tpu.matmul %174, %176, %cst_54 {dimension_numbers = #tpu.dot_dimension_numbers<[1], [0], [0], [1], [0, 0, 1, 1], [], []>} : vector<64x64xbf16>, vector<64x32xbf16>, vector<64x32xf32> -> vector<64x32xf32>
    %c9 = arith.constant 9 : index
    %c0_55 = arith.constant 0 : index
    %178 = vector.load %arg6[%c9, %c0_55] : memref<22x64xf32, #tpu.memory_space<vmem>>, vector<1x32xf32>
    %179 = vector.broadcast %178 : vector<1x32xf32> to vector<64x32xf32>
    %180 = arith.addf %177, %179 : vector<64x32xf32>
    %181 = arith.addf %153, %180 : vector<64x32xf32>
    %c10 = arith.constant 10 : index
    %c0_56 = arith.constant 0 : index
    %182 = vector.load %arg6[%c10, %c0_56] : memref<22x64xf32, #tpu.memory_space<vmem>>, vector<1x32xf32>
    %c11 = arith.constant 11 : index
    %c0_57 = arith.constant 0 : index
    %183 = vector.load %arg6[%c11, %c0_57] : memref<22x64xf32, #tpu.memory_space<vmem>>, vector<1x32xf32>
    %cst_58 = arith.constant dense<0.000000e+00> : vector<64xf32>
    %184 = vector.multi_reduction <add>, %181, %cst_58 [1] : vector<64x32xf32> to vector<64xf32>
    %185 = vector.shape_cast %184 : vector<64xf32> to vector<64x1xf32>
    %cst_59 = arith.constant 3.200000e+01 : f32
    %186 = vector.broadcast %cst_59 : f32 to vector<64x1xf32>
    %187 = arith.divf %185, %186 : vector<64x1xf32>
    %188 = vector.broadcast %187 : vector<64x1xf32> to vector<64x32xf32>
    %189 = arith.subf %181, %188 : vector<64x32xf32>
    %190 = arith.mulf %189, %189 : vector<64x32xf32>
    %cst_60 = arith.constant dense<0.000000e+00> : vector<64xf32>
    %191 = vector.multi_reduction <add>, %190, %cst_60 [1] : vector<64x32xf32> to vector<64xf32>
    %192 = vector.shape_cast %191 : vector<64xf32> to vector<64x1xf32>
    %cst_61 = arith.constant 3.200000e+01 : f32
    %193 = vector.broadcast %cst_61 : f32 to vector<64x1xf32>
    %194 = arith.divf %192, %193 : vector<64x1xf32>
    %195 = vector.broadcast %187 : vector<64x1xf32> to vector<64x32xf32>
    %196 = arith.subf %181, %195 : vector<64x32xf32>
    %cst_62 = arith.constant 9.99999996E-13 : f32
    %197 = vector.broadcast %cst_62 : f32 to vector<64x1xf32>
    %198 = arith.addf %194, %197 : vector<64x1xf32>
    %199 = math.rsqrt %198 : vector<64x1xf32>
    %200 = vector.broadcast %199 : vector<64x1xf32> to vector<64x32xf32>
    %201 = arith.mulf %196, %200 : vector<64x32xf32>
    %202 = vector.broadcast %182 : vector<1x32xf32> to vector<64x32xf32>
    %203 = arith.mulf %201, %202 : vector<64x32xf32>
    %204 = vector.broadcast %183 : vector<1x32xf32> to vector<64x32xf32>
    %205 = arith.addf %203, %204 : vector<64x32xf32>
    %206 = arith.truncf %205 : vector<64x32xf32> to vector<64x32xbf16>
    %c1_63 = arith.constant 1 : index
    %c0_64 = arith.constant 0 : index
    %c0_65 = arith.constant 0 : index
    %207 = vector.load %arg4[%c1_63, %c0_64, %c0_65] : memref<2x32x192xbf16, #tpu.memory_space<vmem>>, vector<1x32x96xbf16>
    %208 = vector.shape_cast %207 : vector<1x32x96xbf16> to vector<32x96xbf16>
    %cst_66 = arith.constant dense<0.000000e+00> : vector<64x96xf32>
    %209 = tpu.matmul %206, %208, %cst_66 {dimension_numbers = #tpu.dot_dimension_numbers<[1], [0], [0], [1], [0, 0, 1, 1], [], []>} : vector<64x32xbf16>, vector<32x96xbf16>, vector<64x96xf32> -> vector<64x96xf32>
    %210 = vector.extract_strided_slice %209 {offsets = [0, 0], sizes = [64, 32], strides = [1, 1]} : vector<64x96xf32> to vector<64x32xf32>
    %c12 = arith.constant 12 : index
    %c0_67 = arith.constant 0 : index
    %211 = vector.load %arg6[%c12, %c0_67] : memref<22x64xf32, #tpu.memory_space<vmem>>, vector<1x32xf32>
    %212 = vector.broadcast %211 : vector<1x32xf32> to vector<64x32xf32>
    %213 = arith.addf %210, %212 : vector<64x32xf32>
    %214 = vector.extract_strided_slice %209 {offsets = [0, 32], sizes = [64, 32], strides = [1, 1]} : vector<64x96xf32> to vector<64x32xf32>
    %c13 = arith.constant 13 : index
    %c0_68 = arith.constant 0 : index
    %215 = vector.load %arg6[%c13, %c0_68] : memref<22x64xf32, #tpu.memory_space<vmem>>, vector<1x32xf32>
    %216 = vector.broadcast %215 : vector<1x32xf32> to vector<64x32xf32>
    %217 = arith.addf %214, %216 : vector<64x32xf32>
    %218 = vector.extract_strided_slice %209 {offsets = [0, 64], sizes = [64, 32], strides = [1, 1]} : vector<64x96xf32> to vector<64x32xf32>
    %c14 = arith.constant 14 : index
    %c0_69 = arith.constant 0 : index
    %219 = vector.load %arg6[%c14, %c0_69] : memref<22x64xf32, #tpu.memory_space<vmem>>, vector<1x32xf32>
    %220 = vector.broadcast %219 : vector<1x32xf32> to vector<64x32xf32>
    %221 = arith.addf %218, %220 : vector<64x32xf32>
    %222 = arith.truncf %213 : vector<64x32xf32> to vector<64x32xbf16>
    %cst_70 = arith.constant 0.000000e+00 : f32
    %223 = vector.broadcast %cst_70 : f32 to vector<64x32xf32>
    %224 = vector.broadcast %50 : vector<1x32xf32> to vector<64x32xf32>
    %225 = arith.mulf %217, %224 : vector<64x32xf32>
    %226 = arith.truncf %225 : vector<64x32xf32> to vector<64x32xbf16>
    %cst_71 = arith.constant dense<0.000000e+00> : vector<64x64xf32>
    %227 = tpu.matmul %222, %226, %cst_71 {dimension_numbers = #tpu.dot_dimension_numbers<[1], [1], [0], [0], [0, 0, 1, 0], [], []>} : vector<64x32xbf16>, vector<64x32xbf16>, vector<64x64xf32> -> vector<64x64xf32>
    %cst_72 = arith.constant 2.500000e-01 : f32
    %228 = vector.broadcast %cst_72 : f32 to vector<64x64xf32>
    %229 = arith.mulf %227, %228 : vector<64x64xf32>
    %230 = arith.addf %229, %42 : vector<64x64xf32>
    %cst_73 = arith.constant dense<0xFF800000> : vector<64xf32>
    %231 = vector.multi_reduction <maximumf>, %230, %cst_73 [1] : vector<64x64xf32> to vector<64xf32>
    %232 = vector.shape_cast %231 : vector<64xf32> to vector<64x1xf32>
    %233 = vector.broadcast %232 : vector<64x1xf32> to vector<64x64xf32>
    %234 = arith.subf %230, %233 : vector<64x64xf32>
    %235 = math.exp %234 : vector<64x64xf32>
    %cst_74 = arith.constant dense<0.000000e+00> : vector<64xf32>
    %236 = vector.multi_reduction <add>, %235, %cst_74 [1] : vector<64x64xf32> to vector<64xf32>
    %237 = vector.shape_cast %236 : vector<64xf32> to vector<64x1xf32>
    %238 = tpu.reciprocal %237 {approx = true} : vector<64x1xf32> -> vector<64x1xf32>
    %239 = vector.broadcast %238 : vector<64x1xf32> to vector<64x64xf32>
    %240 = arith.mulf %235, %239 : vector<64x64xf32>
    %241 = vector.broadcast %50 : vector<1x32xf32> to vector<64x32xf32>
    %242 = arith.mulf %221, %241 : vector<64x32xf32>
    %243 = arith.truncf %242 : vector<64x32xf32> to vector<64x32xbf16>
    %244 = arith.truncf %240 : vector<64x64xf32> to vector<64x64xbf16>
    %cst_75 = arith.constant dense<0.000000e+00> : vector<64x32xf32>
    %245 = tpu.matmul %244, %243, %cst_75 {dimension_numbers = #tpu.dot_dimension_numbers<[1], [0], [0], [1], [0, 0, 1, 1], [], []>} : vector<64x64xbf16>, vector<64x32xbf16>, vector<64x32xf32> -> vector<64x32xf32>
    %246 = arith.addf %223, %245 : vector<64x32xf32>
    %247 = vector.broadcast %57 : vector<1x32xf32> to vector<64x32xf32>
    %248 = arith.mulf %217, %247 : vector<64x32xf32>
    %249 = arith.truncf %248 : vector<64x32xf32> to vector<64x32xbf16>
    %cst_76 = arith.constant dense<0.000000e+00> : vector<64x64xf32>
    %250 = tpu.matmul %222, %249, %cst_76 {dimension_numbers = #tpu.dot_dimension_numbers<[1], [1], [0], [0], [0, 0, 1, 0], [], []>} : vector<64x32xbf16>, vector<64x32xbf16>, vector<64x64xf32> -> vector<64x64xf32>
    %cst_77 = arith.constant 2.500000e-01 : f32
    %251 = vector.broadcast %cst_77 : f32 to vector<64x64xf32>
    %252 = arith.mulf %250, %251 : vector<64x64xf32>
    %253 = arith.addf %252, %42 : vector<64x64xf32>
    %cst_78 = arith.constant dense<0xFF800000> : vector<64xf32>
    %254 = vector.multi_reduction <maximumf>, %253, %cst_78 [1] : vector<64x64xf32> to vector<64xf32>
    %255 = vector.shape_cast %254 : vector<64xf32> to vector<64x1xf32>
    %256 = vector.broadcast %255 : vector<64x1xf32> to vector<64x64xf32>
    %257 = arith.subf %253, %256 : vector<64x64xf32>
    %258 = math.exp %257 : vector<64x64xf32>
    %cst_79 = arith.constant dense<0.000000e+00> : vector<64xf32>
    %259 = vector.multi_reduction <add>, %258, %cst_79 [1] : vector<64x64xf32> to vector<64xf32>
    %260 = vector.shape_cast %259 : vector<64xf32> to vector<64x1xf32>
    %261 = tpu.reciprocal %260 {approx = true} : vector<64x1xf32> -> vector<64x1xf32>
    %262 = vector.broadcast %261 : vector<64x1xf32> to vector<64x64xf32>
    %263 = arith.mulf %258, %262 : vector<64x64xf32>
    %264 = vector.broadcast %57 : vector<1x32xf32> to vector<64x32xf32>
    %265 = arith.mulf %221, %264 : vector<64x32xf32>
    %266 = arith.truncf %265 : vector<64x32xf32> to vector<64x32xbf16>
    %267 = arith.truncf %263 : vector<64x64xf32> to vector<64x64xbf16>
    %cst_80 = arith.constant dense<0.000000e+00> : vector<64x32xf32>
    %268 = tpu.matmul %267, %266, %cst_80 {dimension_numbers = #tpu.dot_dimension_numbers<[1], [0], [0], [1], [0, 0, 1, 1], [], []>} : vector<64x64xbf16>, vector<64x32xbf16>, vector<64x32xf32> -> vector<64x32xf32>
    %269 = arith.addf %246, %268 : vector<64x32xf32>
    %270 = arith.truncf %269 : vector<64x32xf32> to vector<64x32xbf16>
    %c1_81 = arith.constant 1 : index
    %c0_82 = arith.constant 0 : index
    %c96_83 = arith.constant 96 : index
    %271 = vector.load %arg4[%c1_81, %c0_82, %c96_83] : memref<2x32x192xbf16, #tpu.memory_space<vmem>>, vector<1x32x32xbf16>
    %272 = vector.shape_cast %271 : vector<1x32x32xbf16> to vector<32x32xbf16>
    %cst_84 = arith.constant dense<0.000000e+00> : vector<64x32xf32>
    %273 = tpu.matmul %270, %272, %cst_84 {dimension_numbers = #tpu.dot_dimension_numbers<[1], [0], [0], [1], [0, 0, 1, 1], [], []>} : vector<64x32xbf16>, vector<32x32xbf16>, vector<64x32xf32> -> vector<64x32xf32>
    %c15 = arith.constant 15 : index
    %c0_85 = arith.constant 0 : index
    %274 = vector.load %arg6[%c15, %c0_85] : memref<22x64xf32, #tpu.memory_space<vmem>>, vector<1x32xf32>
    %275 = vector.broadcast %274 : vector<1x32xf32> to vector<64x32xf32>
    %276 = arith.addf %273, %275 : vector<64x32xf32>
    %277 = arith.addf %205, %276 : vector<64x32xf32>
    %c16 = arith.constant 16 : index
    %c0_86 = arith.constant 0 : index
    %278 = vector.load %arg6[%c16, %c0_86] : memref<22x64xf32, #tpu.memory_space<vmem>>, vector<1x32xf32>
    %c17 = arith.constant 17 : index
    %c0_87 = arith.constant 0 : index
    %279 = vector.load %arg6[%c17, %c0_87] : memref<22x64xf32, #tpu.memory_space<vmem>>, vector<1x32xf32>
    %cst_88 = arith.constant dense<0.000000e+00> : vector<64xf32>
    %280 = vector.multi_reduction <add>, %277, %cst_88 [1] : vector<64x32xf32> to vector<64xf32>
    %281 = vector.shape_cast %280 : vector<64xf32> to vector<64x1xf32>
    %cst_89 = arith.constant 3.200000e+01 : f32
    %282 = vector.broadcast %cst_89 : f32 to vector<64x1xf32>
    %283 = arith.divf %281, %282 : vector<64x1xf32>
    %284 = vector.broadcast %283 : vector<64x1xf32> to vector<64x32xf32>
    %285 = arith.subf %277, %284 : vector<64x32xf32>
    %286 = arith.mulf %285, %285 : vector<64x32xf32>
    %cst_90 = arith.constant dense<0.000000e+00> : vector<64xf32>
    %287 = vector.multi_reduction <add>, %286, %cst_90 [1] : vector<64x32xf32> to vector<64xf32>
    %288 = vector.shape_cast %287 : vector<64xf32> to vector<64x1xf32>
    %cst_91 = arith.constant 3.200000e+01 : f32
    %289 = vector.broadcast %cst_91 : f32 to vector<64x1xf32>
    %290 = arith.divf %288, %289 : vector<64x1xf32>
    %291 = vector.broadcast %283 : vector<64x1xf32> to vector<64x32xf32>
    %292 = arith.subf %277, %291 : vector<64x32xf32>
    %cst_92 = arith.constant 9.99999996E-13 : f32
    %293 = vector.broadcast %cst_92 : f32 to vector<64x1xf32>
    %294 = arith.addf %290, %293 : vector<64x1xf32>
    %295 = math.rsqrt %294 : vector<64x1xf32>
    %296 = vector.broadcast %295 : vector<64x1xf32> to vector<64x32xf32>
    %297 = arith.mulf %292, %296 : vector<64x32xf32>
    %298 = vector.broadcast %278 : vector<1x32xf32> to vector<64x32xf32>
    %299 = arith.mulf %297, %298 : vector<64x32xf32>
    %300 = vector.broadcast %279 : vector<1x32xf32> to vector<64x32xf32>
    %301 = arith.addf %299, %300 : vector<64x32xf32>
    %302 = arith.truncf %301 : vector<64x32xf32> to vector<64x32xbf16>
    %c1_93 = arith.constant 1 : index
    %c0_94 = arith.constant 0 : index
    %c128_95 = arith.constant 128 : index
    %303 = vector.load %arg4[%c1_93, %c0_94, %c128_95] : memref<2x32x192xbf16, #tpu.memory_space<vmem>>, vector<1x32x64xbf16>
    %304 = vector.shape_cast %303 : vector<1x32x64xbf16> to vector<32x64xbf16>
    %cst_96 = arith.constant dense<0.000000e+00> : vector<64x64xf32>
    %305 = tpu.matmul %302, %304, %cst_96 {dimension_numbers = #tpu.dot_dimension_numbers<[1], [0], [0], [1], [0, 0, 1, 1], [], []>} : vector<64x32xbf16>, vector<32x64xbf16>, vector<64x64xf32> -> vector<64x64xf32>
    %c18 = arith.constant 18 : index
    %c0_97 = arith.constant 0 : index
    %306 = vector.load %arg6[%c18, %c0_97] : memref<22x64xf32, #tpu.memory_space<vmem>>, vector<1x64xf32>
    %307 = vector.broadcast %306 : vector<1x64xf32> to vector<64x64xf32>
    %308 = arith.addf %305, %307 : vector<64x64xf32>
    %cst_98 = arith.constant 5.000000e-01 : f32
    %309 = vector.broadcast %cst_98 : f32 to vector<64x64xf32>
    %310 = arith.mulf %309, %308 : vector<64x64xf32>
    %cst_99 = arith.constant 4.471500e-02 : f32
    %311 = vector.broadcast %cst_99 : f32 to vector<64x64xf32>
    %312 = arith.mulf %311, %308 : vector<64x64xf32>
    %313 = arith.mulf %312, %308 : vector<64x64xf32>
    %314 = arith.mulf %313, %308 : vector<64x64xf32>
    %315 = arith.addf %308, %314 : vector<64x64xf32>
    %cst_100 = arith.constant 0.797884583 : f32
    %316 = vector.broadcast %cst_100 : f32 to vector<64x64xf32>
    %317 = arith.mulf %316, %315 : vector<64x64xf32>
    %318 = math.tanh %317 : vector<64x64xf32>
    %cst_101 = arith.constant 1.000000e+00 : f32
    %319 = vector.broadcast %cst_101 : f32 to vector<64x64xf32>
    %320 = arith.addf %319, %318 : vector<64x64xf32>
    %321 = arith.mulf %310, %320 : vector<64x64xf32>
    %322 = arith.truncf %321 : vector<64x64xf32> to vector<64x64xbf16>
    %c1_102 = arith.constant 1 : index
    %c0_103 = arith.constant 0 : index
    %c0_104 = arith.constant 0 : index
    %323 = vector.load %arg5[%c1_102, %c0_103, %c0_104] : memref<2x64x32xbf16, #tpu.memory_space<vmem>>, vector<1x64x32xbf16>
    %324 = vector.shape_cast %323 : vector<1x64x32xbf16> to vector<64x32xbf16>
    %cst_105 = arith.constant dense<0.000000e+00> : vector<64x32xf32>
    %325 = tpu.matmul %322, %324, %cst_105 {dimension_numbers = #tpu.dot_dimension_numbers<[1], [0], [0], [1], [0, 0, 1, 1], [], []>} : vector<64x64xbf16>, vector<64x32xbf16>, vector<64x32xf32> -> vector<64x32xf32>
    %c19 = arith.constant 19 : index
    %c0_106 = arith.constant 0 : index
    %326 = vector.load %arg6[%c19, %c0_106] : memref<22x64xf32, #tpu.memory_space<vmem>>, vector<1x32xf32>
    %327 = vector.broadcast %326 : vector<1x32xf32> to vector<64x32xf32>
    %328 = arith.addf %325, %327 : vector<64x32xf32>
    %329 = arith.addf %301, %328 : vector<64x32xf32>
    %c20 = arith.constant 20 : index
    %c0_107 = arith.constant 0 : index
    %330 = vector.load %arg6[%c20, %c0_107] : memref<22x64xf32, #tpu.memory_space<vmem>>, vector<1x32xf32>
    %c21 = arith.constant 21 : index
    %c0_108 = arith.constant 0 : index
    %331 = vector.load %arg6[%c21, %c0_108] : memref<22x64xf32, #tpu.memory_space<vmem>>, vector<1x32xf32>
    %cst_109 = arith.constant dense<0.000000e+00> : vector<64xf32>
    %332 = vector.multi_reduction <add>, %329, %cst_109 [1] : vector<64x32xf32> to vector<64xf32>
    %333 = vector.shape_cast %332 : vector<64xf32> to vector<64x1xf32>
    %cst_110 = arith.constant 3.200000e+01 : f32
    %334 = vector.broadcast %cst_110 : f32 to vector<64x1xf32>
    %335 = arith.divf %333, %334 : vector<64x1xf32>
    %336 = vector.broadcast %335 : vector<64x1xf32> to vector<64x32xf32>
    %337 = arith.subf %329, %336 : vector<64x32xf32>
    %338 = arith.mulf %337, %337 : vector<64x32xf32>
    %cst_111 = arith.constant dense<0.000000e+00> : vector<64xf32>
    %339 = vector.multi_reduction <add>, %338, %cst_111 [1] : vector<64x32xf32> to vector<64xf32>
    %340 = vector.shape_cast %339 : vector<64xf32> to vector<64x1xf32>
    %cst_112 = arith.constant 3.200000e+01 : f32
    %341 = vector.broadcast %cst_112 : f32 to vector<64x1xf32>
    %342 = arith.divf %340, %341 : vector<64x1xf32>
    %343 = vector.broadcast %335 : vector<64x1xf32> to vector<64x32xf32>
    %344 = arith.subf %329, %343 : vector<64x32xf32>
    %cst_113 = arith.constant 9.99999996E-13 : f32
    %345 = vector.broadcast %cst_113 : f32 to vector<64x1xf32>
    %346 = arith.addf %342, %345 : vector<64x1xf32>
    %347 = math.rsqrt %346 : vector<64x1xf32>
    %348 = vector.broadcast %347 : vector<64x1xf32> to vector<64x32xf32>
    %349 = arith.mulf %344, %348 : vector<64x32xf32>
    %350 = vector.broadcast %330 : vector<1x32xf32> to vector<64x32xf32>
    %351 = arith.mulf %349, %350 : vector<64x32xf32>
    %352 = vector.broadcast %331 : vector<1x32xf32> to vector<64x32xf32>
    %353 = arith.addf %351, %352 : vector<64x32xf32>
    %354 = tpu.iota {dimensions = array<i32: 1>} : vector<52x64xi32>
    %c0_114 = arith.constant 0 : index
    %c0_115 = arith.constant 0 : index
    %355 = vector.load %arg2[%c0_114, %c0_115] : memref<52x1xi32, #tpu.memory_space<vmem>>, vector<52x1xi32>
    %356 = vector.broadcast %355 : vector<52x1xi32> to vector<52x64xi32>
    %357 = arith.cmpi eq, %354, %356 : vector<52x64xi32>
    %358 = arith.extui %357 : vector<52x64xi1> to vector<52x64xi32>
    %359 = arith.sitofp %358 : vector<52x64xi32> to vector<52x64xf32>
    %360 = arith.truncf %359 : vector<52x64xf32> to vector<52x64xbf16>
    %361 = arith.truncf %353 : vector<64x32xf32> to vector<64x32xbf16>
    %cst_116 = arith.constant dense<0.000000e+00> : vector<52x32xf32>
    %362 = tpu.matmul %360, %361, %cst_116 {dimension_numbers = #tpu.dot_dimension_numbers<[1], [0], [0], [1], [0, 0, 1, 1], [], []>} : vector<52x64xbf16>, vector<64x32xbf16>, vector<52x32xf32> -> vector<52x32xf32>
    %c0_117 = arith.constant 0 : index
    %c0_118 = arith.constant 0 : index
    %363 = vector.load %arg7[%c0_117, %c0_118] : memref<52x32xf32, #tpu.memory_space<vmem>>, vector<52x32xf32>
    tpu.vector_store %arg7[%c0_117, %c0_118], %362 {strides = array<i32>} : memref<52x32xf32, #tpu.memory_space<vmem>>, vector<52x32xf32>,
    return
  }
}

</mosaic_0001>

<llo_original>
// kernel: eq.8
$region0: #{eq.8}
  %s0 = inlined_call_operand.vmem [shape: s32[4,16], index: 0, kind: input, shape index: {}]
  %s1 = inlined_call_operand.vmem [shape: s32[64], index: 1, kind: output, shape index: {}]
  $region1: #{eq.8} parent=0
    #allocation0 [shape = 'u8[4096]{0}', space=vmem, size = 0x1000, scoped, tag = 'scoped mem for output reshape']
    #allocation1 [shape = 'u8[4096]{0}', space=vmem, size = 0x1000, scoped, tag = 'scoped mem for input reshape']
    %s3 = sshllo.u32 0, 4
    %v4 = vld [vmem:[%s0] sm:%s3]
    %5 = vst [vmem:[#allocation1] sm:%s3] %v4
    %v6 = vld [vmem:[#allocation1] sm:$0x1]
    %vm7 = vcmask 130048
    %8 = vst.msk [vmem:[#allocation0] sm:$0x1] %vm7, %v6
    %s9 = scalar_lea.vmem [#allocation1], 3
    %v10 = vld [vmem:[%s9] sm:$0x1]
    %11 = vrot.lane.b32.xlu0 %v10, 48
    %v12 = vpop.permute.xlu0 %11
    %vm13 = vcmask 523648
    %14 = vst.msk [vmem:[#allocation0] sm:$0x1] %vm13, %v12
    %s15 = scalar_lea.vmem [#allocation1], 2
    %v16 = vld [vmem:[%s15] sm:$0x1]
    %17 = vrot.lane.b32.xlu0 %v16, 32
    %v18 = vpop.permute.xlu0 %17
    %vm19 = vcmask 392448
    %20 = vst.msk [vmem:[#allocation0] sm:$0x1] %vm19, %v18
    %s21 = scalar_lea.vmem [#allocation1], 1
    %v22 = vld [vmem:[%s21] sm:$0x1]
    %23 = vrot.lane.b32.xlu0 %v22, 16
    %v24 = vpop.permute.xlu0 %23
    %vm25 = vcmask 261248
    %26 = vst.msk [vmem:[#allocation0] sm:$0x1] %vm25, %v24
    %s28 = sshllo.u32 0, 1
    %v30 = vld [vmem:[#allocation0] sm:%s28]
    %s31 = sshllo.u32 0, 1
    %32 = vst [vmem:[%s1] sm:%s31] %v30

// kernel: bert_context_embedder_forward.1
$region0: #{bert_context_embedder_forward.1}
  #allocation0 [shape = 'u32[]', space=smem, size = 0x4, offset = 0x4, fixed_abs, tag = 'smem constant byte address 0x4 - core index']
  #allocation1 [shape = 'u32[144,128]{1,0:T(1,128)}', space=vmem, size = 0x12000, scoped, tag = 'internal scratch']
  %s0 = inlined_call_operand.vmem [shape: s32[64,3], index: 0, kind: input, shape index: {}]
  %s1 = inlined_call_operand.vmem [shape: f32[64,64], index: 1, kind: input, shape index: {}]
  %s2 = inlined_call_operand.vmem [shape: s32[52,1], index: 2, kind: input, shape index: {}]
  %s3 = inlined_call_operand.vmem [shape: bf16[132,32], index: 3, kind: input, shape index: {}]
  %s4 = inlined_call_operand.vmem [shape: bf16[2,32,192], index: 4, kind: input, shape index: {}]
  %s5 = inlined_call_operand.vmem [shape: bf16[2,64,32], index: 5, kind: input, shape index: {}]
  %s6 = inlined_call_operand.vmem [shape: f32[22,64], index: 6, kind: input, shape index: {}]
  %s7 = inlined_call_operand.vmem [shape: f32[52,32], index: 7, kind: output, shape index: {}]
  %s8 = sld [smem:[#allocation0]]
  $region38: #{bert_context_embedder_forward.1} parent=0
    _
  %s10 = ssub.s32 1, %s8
  %s11 = scalar_select 0, %s10, %s8
  // Predicated region
  $region2: #{bert_context_embedder_forward.1} parent=0 // pred_check
    _
  $region3: #{bert_context_embedder_forward.1} parent=0 // pred_check_branch
    %13 = sbr.rel (0) target = $region5
  $region4: #{bert_context_embedder_forward.1} parent=0 // pred_region
    _
  $region5: #{bert_context_embedder_forward.1} parent=0 // pred_fallthru
    _
  // Predicated region
  $region6: #{bert_context_embedder_forward.1} parent=0 // pred_check
    _
  $region7: #{bert_context_embedder_forward.1} parent=0 // pred_check_branch
    %15 = sbr.rel (0) target = $region9
  $region8: #{bert_context_embedder_forward.1} parent=0 // pred_region
    _
  $region9: #{bert_context_embedder_forward.1} parent=0 // pred_fallthru
    _
  // Predicated region
  $region10: #{bert_context_embedder_forward.1} parent=0 // pred_check
    _
  $region11: #{bert_context_embedder_forward.1} parent=0 // pred_check_branch
    %17 = sbr.rel (0) target = $region13
  $region12: #{bert_context_embedder_forward.1} parent=0 // pred_region
    _
  $region13: #{bert_context_embedder_forward.1} parent=0 // pred_fallthru
    _
  // Predicated region
  $region14: #{bert_context_embedder_forward.1} parent=0 // pred_check
    _
  $region15: #{bert_context_embedder_forward.1} parent=0 // pred_check_branch
    %19 = sbr.rel (0) target = $region17
  $region16: #{bert_context_embedder_forward.1} parent=0 // pred_region
    _
  $region17: #{bert_context_embedder_forward.1} parent=0 // pred_fallthru
    _
  // Predicated region
  $region18: #{bert_context_embedder_forward.1} parent=0 // pred_check
    _
  $region19: #{bert_context_embedder_forward.1} parent=0 // pred_check_branch
    %21 = sbr.rel (0) target = $region21
  $region20: #{bert_context_embedder_forward.1} parent=0 // pred_region
    _
  $region21: #{bert_context_embedder_forward.1} parent=0 // pred_fallthru
    _
  // Predicated region
  $region22: #{bert_context_embedder_forward.1} parent=0 // pred_check
    _
  $region23: #{bert_context_embedder_forward.1} parent=0 // pred_check_branch
    %23 = sbr.rel (0) target = $region25
  $region24: #{bert_context_embedder_forward.1} parent=0 // pred_region
    _
  $region25: #{bert_context_embedder_forward.1} parent=0 // pred_fallthru
    _
  // Predicated region
  $region26: #{bert_context_embedder_forward.1} parent=0 // pred_check
    _
  $region27: #{bert_context_embedder_forward.1} parent=0 // pred_check_branch
    %25 = sbr.rel (0) target = $region29
  $region28: #{bert_context_embedder_forward.1} parent=0 // pred_region
    _
  $region29: #{bert_context_embedder_forward.1} parent=0 // pred_fallthru
    _
  %v27 = vld [vmem:[%s0] sm:$0xff]
  %v28 = vld [vmem:[%s0 + $0x8] sm:$0xff]
  %v29 = vld [vmem:[%s0 + $0x10] sm:$0xff]
  %v30 = vld [vmem:[%s0 + $0x18] sm:$0xff]
  %v31 = vld [vmem:[%s0 + $0x20] sm:$0xff]
  %v32 = vld [vmem:[%s0 + $0x28] sm:$0xff]
  %v33 = vld [vmem:[%s0 + $0x30] sm:$0xff]
  %v34 = vld [vmem:[%s0 + $0x38] sm:$0xff]
  %v35 = vlaneseq
  %v36 = vand.u32 %v35, 127
  %v37 = vadd.s32 %v36, 128
  %38 = vset.pattern.permute.xlu0 0
  %39 = vperm.xlu0 %38, %v27
  %v40 = vpop.permute.xlu0 %39
  %41 = vset.pattern.permute.xlu0 0
  %42 = vperm.xlu0 %41, %v28
  %v43 = vpop.permute.xlu0 %42
  %44 = vset.pattern.permute.xlu0 0
  %45 = vperm.xlu0 %44, %v29
  %v46 = vpop.permute.xlu0 %45
  %47 = vset.pattern.permute.xlu0 0
  %48 = vperm.xlu0 %47, %v30
  %v49 = vpop.permute.xlu0 %48
  %50 = vset.pattern.permute.xlu0 0
  %51 = vperm.xlu0 %50, %v31
  %v52 = vpop.permute.xlu0 %51
  %53 = vset.pattern.permute.xlu0 0
  %54 = vperm.xlu0 %53, %v32
  %v55 = vpop.permute.xlu0 %54
  %56 = vset.pattern.permute.xlu0 0
  %57 = vperm.xlu0 %56, %v33
  %v58 = vpop.permute.xlu0 %57
  %59 = vset.pattern.permute.xlu0 0
  %60 = vperm.xlu0 %59, %v34
  %v61 = vpop.permute.xlu0 %60
  %vm62 = vcmp.eq.s32.totalorder %v36, %v40
  %vm63 = vcmp.eq.s32.totalorder %v37, %v40
  %vm64 = vcmp.eq.s32.totalorder %v36, %v43
  %vm65 = vcmp.eq.s32.totalorder %v37, %v43
  %vm66 = vcmp.eq.s32.totalorder %v36, %v46
  %vm67 = vcmp.eq.s32.totalorder %v37, %v46
  %vm68 = vcmp.eq.s32.totalorder %v36, %v49
  %vm69 = vcmp.eq.s32.totalorder %v37, %v49
  %vm70 = vcmp.eq.s32.totalorder %v36, %v52
  %vm71 = vcmp.eq.s32.totalorder %v37, %v52
  %vm72 = vcmp.eq.s32.totalorder %v36, %v55
  %vm73 = vcmp.eq.s32.totalorder %v37, %v55
  %vm74 = vcmp.eq.s32.totalorder %v36, %v58
  %vm75 = vcmp.eq.s32.totalorder %v37, %v58
  %vm76 = vcmp.eq.s32.totalorder %v36, %v61
  %vm77 = vcmp.eq.s32.totalorder %v37, %v61
  %78 = vset.pattern.permute.xlu0 1
  %79 = vperm.xlu0 %78, %v27
  %v80 = vpop.permute.xlu0 %79
  %81 = vset.pattern.permute.xlu0 1
  %82 = vperm.xlu0 %81, %v28
  %v83 = vpop.permute.xlu0 %82
  %84 = vset.pattern.permute.xlu0 1
  %85 = vperm.xlu0 %84, %v29
  %v86 = vpop.permute.xlu0 %85
  %87 = vset.pattern.permute.xlu0 1
  %88 = vperm.xlu0 %87, %v30
  %v89 = vpop.permute.xlu0 %88
  %90 = vset.pattern.permute.xlu0 1
  %91 = vperm.xlu0 %90, %v31
  %v92 = vpop.permute.xlu0 %91
  %93 = vset.pattern.permute.xlu0 1
  %94 = vperm.xlu0 %93, %v32
  %v95 = vpop.permute.xlu0 %94
  %96 = vset.pattern.permute.xlu0 1
  %97 = vperm.xlu0 %96, %v33
  %v98 = vpop.permute.xlu0 %97
  %99 = vset.pattern.permute.xlu0 1
  %100 = vperm.xlu0 %99, %v34
  %v101 = vpop.permute.xlu0 %100
  %vm102 = vcmp.eq.s32.totalorder %v36, %v80
  %vm103 = vcmp.eq.s32.totalorder %v37, %v80
  %vm104 = vcmp.eq.s32.totalorder %v36, %v83
  %vm105 = vcmp.eq.s32.totalorder %v37, %v83
  %vm106 = vcmp.eq.s32.totalorder %v36, %v86
  %vm107 = vcmp.eq.s32.totalorder %v37, %v86
  %vm108 = vcmp.eq.s32.totalorder %v36, %v89
  %vm109 = vcmp.eq.s32.totalorder %v37, %v89
  %vm110 = vcmp.eq.s32.totalorder %v36, %v92
  %vm111 = vcmp.eq.s32.totalorder %v37, %v92
  %vm112 = vcmp.eq.s32.totalorder %v36, %v95
  %vm113 = vcmp.eq.s32.totalorder %v37, %v95
  %vm114 = vcmp.eq.s32.totalorder %v36, %v98
  %vm115 = vcmp.eq.s32.totalorder %v37, %v98
  %vm116 = vcmp.eq.s32.totalorder %v36, %v101
  %vm117 = vcmp.eq.s32.totalorder %v37, %v101
  %vm118 = vmor %vm62, %vm102
  %vm119 = vmor %vm63, %vm103
  %vm120 = vmor %vm64, %vm104
  %vm121 = vmor %vm65, %vm105
  %vm122 = vmor %vm66, %vm106
  %vm123 = vmor %vm67, %vm107
  %vm124 = vmor %vm68, %vm108
  %vm125 = vmor %vm69, %vm109
  %vm126 = vmor %vm70, %vm110
  %vm127 = vmor %vm71, %vm111
  %vm128 = vmor %vm72, %vm112
  %vm129 = vmor %vm73, %vm113
  %vm130 = vmor %vm74, %vm114
  %vm131 = vmor %vm75, %vm115
  %vm132 = vmor %vm76, %vm116
  %vm133 = vmor %vm77, %vm117
  %134 = vset.pattern.permute.xlu0 2
  %135 = vperm.xlu0 %134, %v27
  %v136 = vpop.permute.xlu0 %135
  %137 = vset.pattern.permute.xlu0 2
  %138 = vperm.xlu0 %137, %v28
  %v139 = vpop.permute.xlu0 %138
  %140 = vset.pattern.permute.xlu0 2
  %141 = vperm.xlu0 %140, %v29
  %v142 = vpop.permute.xlu0 %141
  %143 = vset.pattern.permute.xlu0 2
  %144 = vperm.xlu0 %143, %v30
  %v145 = vpop.permute.xlu0 %144
  %146 = vset.pattern.permute.xlu0 2
  %147 = vperm.xlu0 %146, %v31
  %v148 = vpop.permute.xlu0 %147
  %149 = vset.pattern.permute.xlu0 2
  %150 = vperm.xlu0 %149, %v32
  %v151 = vpop.permute.xlu0 %150
  %152 = vset.pattern.permute.xlu0 2
  %153 = vperm.xlu0 %152, %v33
  %v154 = vpop.permute.xlu0 %153
  %155 = vset.pattern.permute.xlu0 2
  %156 = vperm.xlu0 %155, %v34
  %v157 = vpop.permute.xlu0 %156
  %vm158 = vcmp.eq.s32.totalorder %v36, %v136
  %vm159 = vcmp.eq.s32.totalorder %v37, %v136
  %vm160 = vcmp.eq.s32.totalorder %v36, %v139
  %vm161 = vcmp.eq.s32.totalorder %v37, %v139
  %vm162 = vcmp.eq.s32.totalorder %v36, %v142
  %vm163 = vcmp.eq.s32.totalorder %v37, %v142
  %vm164 = vcmp.eq.s32.totalorder %v36, %v145
  %vm165 = vcmp.eq.s32.totalorder %v37, %v145
  %vm166 = vcmp.eq.s32.totalorder %v36, %v148
  %vm167 = vcmp.eq.s32.totalorder %v37, %v148
  %vm168 = vcmp.eq.s32.totalorder %v36, %v151
  %vm169 = vcmp.eq.s32.totalorder %v37, %v151
  %vm170 = vcmp.eq.s32.totalorder %v36, %v154
  %vm171 = vcmp.eq.s32.totalorder %v37, %v154
  %vm172 = vcmp.eq.s32.totalorder %v36, %v157
  %vm173 = vcmp.eq.s32.totalorder %v37, %v157
  %vm174 = vmor %vm118, %vm158
  %vm175 = vmor %vm119, %vm159
  %vm176 = vmor %vm120, %vm160
  %vm177 = vmor %vm121, %vm161
  %vm178 = vmor %vm122, %vm162
  %vm179 = vmor %vm123, %vm163
  %vm180 = vmor %vm124, %vm164
  %vm181 = vmor %vm125, %vm165
  %vm182 = vmor %vm126, %vm166
  %vm183 = vmor %vm127, %vm167
  %vm184 = vmor %vm128, %vm168
  %vm185 = vmor %vm129, %vm169
  %vm186 = vmor %vm130, %vm170
  %vm187 = vmor %vm131, %vm171
  %vm188 = vmor %vm132, %vm172
  %vm189 = vmor %vm133, %vm173
  %v190 = vsel %vm174, 1, 0
  %v191 = vsel %vm175, 1, 0
  %v192 = vsel %vm176, 1, 0
  %v193 = vsel %vm177, 1, 0
  %v194 = vsel %vm178, 1, 0
  %v195 = vsel %vm179, 1, 0
  %v196 = vsel %vm180, 1, 0
  %v197 = vsel %vm181, 1, 0
  %v198 = vsel %vm182, 1, 0
  %v199 = vsel %vm183, 1, 0
  %v200 = vsel %vm184, 1, 0
  %v201 = vsel %vm185, 1, 0
  %v202 = vsel %vm186, 1, 0
  %v203 = vsel %vm187, 1, 0
  %v204 = vsel %vm188, 1, 0
  %v205 = vsel %vm189, 1, 0
  %v206 = vcvt.s32.f32 %v190
  %v207 = vcvt.s32.f32 %v191
  %v208 = vcvt.s32.f32 %v192
  %v209 = vcvt.s32.f32 %v193
  %v210 = vcvt.s32.f32 %v194
  %v211 = vcvt.s32.f32 %v195
  %v212 = vcvt.s32.f32 %v196
  %v213 = vcvt.s32.f32 %v197
  %v214 = vcvt.s32.f32 %v198
  %v215 = vcvt.s32.f32 %v199
  %v216 = vcvt.s32.f32 %v200
  %v217 = vcvt.s32.f32 %v201
  %v218 = vcvt.s32.f32 %v202
  %v219 = vcvt.s32.f32 %v203
  %v220 = vcvt.s32.f32 %v204
  %v221 = vcvt.s32.f32 %v205
  %v222 = vpack.c.bf16 %v208, %v206
  %v223 = vpack.c.bf16 %v209, %v207
  %v224 = vpack.c.bf16 %v212, %v210
  %v225 = vpack.c.bf16 %v213, %v211
  %v226 = vpack.c.bf16 %v216, %v214
  %v227 = vpack.c.bf16 %v217, %v215
  %v228 = vpack.c.bf16 %v220, %v218
  %v229 = vpack.c.bf16 %v221, %v219
  %v230 = vld [vmem:[%s3] sm:$0xf]
  %v231 = vld [vmem:[%s3 + $0x4] sm:$0xf]
  %v232 = vld [vmem:[%s3 + $0x8] sm:$0xf]
  %v233 = vld [vmem:[%s3 + $0xc] sm:$0xf]
  %v234 = vld [vmem:[%s3 + $0x10] sm:$0xf]
  %v235 = vld [vmem:[%s3 + $0x14] sm:$0xf]
  %v236 = vld [vmem:[%s3 + $0x18] sm:$0xf]
  %v237 = vld [vmem:[%s3 + $0x1c] sm:$0xf]
  %v238 = vld [vmem:[%s3 + $0x20] sm:$0xf]
  %v239 = vld [vmem:[%s3 + $0x24] sm:$0xf]
  %v240 = vld [vmem:[%s3 + $0x28] sm:$0xf]
  %v241 = vld [vmem:[%s3 + $0x2c] sm:$0xf]
  %v242 = vld [vmem:[%s3 + $0x30] sm:$0xf]
  %v243 = vld [vmem:[%s3 + $0x34] sm:$0xf]
  %v244 = vld [vmem:[%s3 + $0x38] sm:$0xf]
  %v245 = vld [vmem:[%s3 + $0x3c] sm:$0xf]
  %v246 = vld [vmem:[%s3 + $0x40] sm:$0x3]
  %v264 = vunpack.c.l.b16 %v230
  %v265 = vunpack.c.l.b16 %v231
  %v266 = vunpack.c.l.b16 %v232
  %v267 = vunpack.c.l.b16 %v233
  %v268 = vunpack.c.l.b16 %v234
  %v269 = vunpack.c.l.b16 %v235
  %v270 = vunpack.c.l.b16 %v236
  %v271 = vunpack.c.l.b16 %v237
  %v272 = vunpack.c.l.b16 %v238
  %v273 = vunpack.c.l.b16 %v239
  %v274 = vunpack.c.l.b16 %v240
  %v275 = vunpack.c.l.b16 %v241
  %v276 = vunpack.c.l.b16 %v242
  %v277 = vunpack.c.l.b16 %v243
  %v278 = vunpack.c.l.b16 %v244
  %v279 = vunpack.c.l.b16 %v245
  %v280 = vunpack.c.l.b16 %v246
  %v281 = vpack.c.b16 %v265, %v264
  %v282 = vpack.c.b16 %v267, %v266
  %v283 = vpack.c.b16 %v269, %v268
  %v284 = vpack.c.b16 %v271, %v270
  %v285 = vpack.c.b16 %v273, %v272
  %v286 = vpack.c.b16 %v275, %v274
  %v287 = vpack.c.b16 %v277, %v276
  %v288 = vpack.c.b16 %v279, %v278
  %v289 = vpack.c.b16 %v280, %v280
  %vm298 = vcmask 31744
  %v300 = vsel %vm298, %v223, 0
  %v303 = vsel %vm298, %v225, 0
  %v306 = vsel %vm298, %v227, 0
  %v309 = vsel %vm298, %v229, 0
  %vm311 = vcmask 1041408
  %v313 = vsel %vm311, %v289, 0
  %315 = vmatprep.subr.bf16.mxu0 0
  %316 = vmatpush1.bf16.msra.mxu0 %v281
  %317 = vmatprep.subr.bf16.mxu0 0
  %318 = vmatpush1.bf16.msra.mxu0 %v282
  %319 = vmatprep.subr.bf16.mxu0 0
  %320 = vmatpush1.bf16.msra.mxu0 %v283
  %321 = vmatprep.subr.bf16.mxu0 0
  %322 = vmatpush1.bf16.msra.mxu0 %v284
  %323 = vmatprep.subr.bf16.mxu0 0
  %324 = vmatpush1.bf16.msra.mxu0 %v285
  %325 = vmatprep.subr.bf16.mxu0 0
  %326 = vmatpush1.bf16.msra.mxu0 %v286
  %327 = vmatprep.subr.bf16.mxu0 0
  %328 = vmatpush1.bf16.msra.mxu0 %v287
  %329 = vmatprep.subr.bf16.mxu0 0
  %330 = vmatpush1.bf16.msra.mxu0 %v288
  %331 = vmatprep.subr.bf16.mxu0 0
  %332 = vmatpush1.bf16.msra.mxu0 %v313
  %333 = vmatprep.subr.bf16.mxu0 0
  %334 = vmatpush1.bf16.msra.mxu0 0
  %335 = vmatprep.subr.bf16.mxu0 0
  %336 = vmatpush1.bf16.msra.mxu0 0
  %337 = vmatprep.subr.bf16.mxu0 0
  %338 = vmatpush1.bf16.msra.mxu0 0
  %339 = vmatprep.subr.bf16.mxu0 0
  %340 = vmatpush1.bf16.msra.mxu0 0
  %341 = vmatprep.subr.bf16.mxu0 0
  %342 = vmatpush1.bf16.msra.mxu0 0
  %343 = vmatprep.subr.bf16.mxu0 0
  %344 = vmatpush1.bf16.msra.mxu0 0
  %345 = vmatprep.subr.bf16.mxu0 0
  %346 = vmatpush1.bf16.msra.mxu0 0
  %347 = vmatprep.mubr.bf16.mxu0 %v300
  %348 = vmatmul.mubr.bf16.gmra.mrb[0].mxu0 %v222
  %v349 = vpop.f32.mrb[0].mxu0
  %v350 = vadd.f32 0.0, %v349
  %v351 = vpop.f32.mrb[0].mxu0
  %v352 = vpop.f32.mrb[0].mxu0
  %v353 = vadd.f32 0.0, %v352
  %v354 = vpop.f32.mrb[0].mxu0
  %355 = vmatprep.mubr.bf16.mxu0 %v303
  %356 = vmatmul.mubr.bf16.gmra.mrb[0].mxu0 %v224
  %v357 = vpop.f32.mrb[0].mxu0
  %v358 = vadd.f32 0.0, %v357
  %v359 = vpop.f32.mrb[0].mxu0
  %v360 = vpop.f32.mrb[0].mxu0
  %v361 = vadd.f32 0.0, %v360
  %v362 = vpop.f32.mrb[0].mxu0
  %363 = vmatprep.mubr.bf16.mxu0 %v306
  %364 = vmatmul.mubr.bf16.gmra.mrb[0].mxu0 %v226
  %v365 = vpop.f32.mrb[0].mxu0
  %v366 = vadd.f32 0.0, %v365
  %v367 = vpop.f32.mrb[0].mxu0
  %v368 = vpop.f32.mrb[0].mxu0
  %v369 = vadd.f32 0.0, %v368
  %v370 = vpop.f32.mrb[0].mxu0
  %371 = vmatprep.mubr.bf16.mxu0 %v309
  %372 = vmatmul.mubr.bf16.gmra.mrb[0].mxu0 %v228
  %v373 = vpop.f32.mrb[0].mxu0
  %v374 = vadd.f32 0.0, %v373
  %v375 = vpop.f32.mrb[0].mxu0
  %v376 = vpop.f32.mrb[0].mxu0
  %v377 = vadd.f32 0.0, %v376
  %v378 = vpop.f32.mrb[0].mxu0
  %379 = vdwg.mxu0
  %v380 = vld [vmem:[%s6] sm:$0x1]
  %v381 = vld [vmem:[%s6 + $0x1] sm:$0x1]
  %vm382 = vcmask 261120
  %v383 = vsel %vm382, %v350, 0.0
  %384 = vadd.xlane.f32.xlu0 %v383
  %v385 = vpop.xlane.xlu0 %384
  %v386 = vsel %vm382, %v353, 0.0
  %387 = vadd.xlane.f32.xlu0 %v386
  %v388 = vpop.xlane.xlu0 %387
  %v389 = vsel %vm382, %v358, 0.0
  %390 = vadd.xlane.f32.xlu0 %v389
  %v391 = vpop.xlane.xlu0 %390
  %v392 = vsel %vm382, %v361, 0.0
  %393 = vadd.xlane.f32.xlu0 %v392
  %v394 = vpop.xlane.xlu0 %393
  %v395 = vsel %vm382, %v366, 0.0
  %396 = vadd.xlane.f32.xlu0 %v395
  %v397 = vpop.xlane.xlu0 %396
  %v398 = vsel %vm382, %v369, 0.0
  %399 = vadd.xlane.f32.xlu0 %v398
  %v400 = vpop.xlane.xlu0 %399
  %v401 = vsel %vm382, %v374, 0.0
  %402 = vadd.xlane.f32.xlu0 %v401
  %v403 = vpop.xlane.xlu0 %402
  %v404 = vsel %vm382, %v377, 0.0
  %405 = vadd.xlane.f32.xlu0 %v404
  %v406 = vpop.xlane.xlu0 %405
  %v407 = vrcp.pop 32.0
  %v408 = vmul.f32 %v385, %v407
  %v409 = vmul.f32 %v388, %v407
  %v410 = vmul.f32 %v391, %v407
  %v411 = vmul.f32 %v394, %v407
  %v412 = vmul.f32 %v397, %v407
  %v413 = vmul.f32 %v400, %v407
  %v414 = vmul.f32 %v403, %v407
  %v415 = vmul.f32 %v406, %v407
  %v416 = vsub.f32 %v350, %v408
  %v417 = vsub.f32 %v353, %v409
  %v418 = vsub.f32 %v358, %v410
  %v419 = vsub.f32 %v361, %v411
  %v420 = vsub.f32 %v366, %v412
  %v421 = vsub.f32 %v369, %v413
  %v422 = vsub.f32 %v374, %v414
  %v423 = vsub.f32 %v377, %v415
  %v424 = vmul.f32 %v416, %v416
  %v425 = vmul.f32 %v417, %v417
  %v426 = vmul.f32 %v418, %v418
  %v427 = vmul.f32 %v419, %v419
  %v428 = vmul.f32 %v420, %v420
  %v429 = vmul.f32 %v421, %v421
  %v430 = vmul.f32 %v422, %v422
  %v431 = vmul.f32 %v423, %v423
  %v432 = vsel %vm382, %v424, 0.0
  %433 = vadd.xlane.f32.xlu0 %v432
  %v434 = vpop.xlane.xlu0 %433
  %v435 = vsel %vm382, %v425, 0.0
  %436 = vadd.xlane.f32.xlu0 %v435
  %v437 = vpop.xlane.xlu0 %436
  %v438 = vsel %vm382, %v426, 0.0
  %439 = vadd.xlane.f32.xlu0 %v438
  %v440 = vpop.xlane.xlu0 %439
  %v441 = vsel %vm382, %v427, 0.0
  %442 = vadd.xlane.f32.xlu0 %v441
  %v443 = vpop.xlane.xlu0 %442
  %v444 = vsel %vm382, %v428, 0.0
  %445 = vadd.xlane.f32.xlu0 %v444
  %v446 = vpop.xlane.xlu0 %445
  %v447 = vsel %vm382, %v429, 0.0
  %448 = vadd.xlane.f32.xlu0 %v447
  %v449 = vpop.xlane.xlu0 %448
  %v450 = vsel %vm382, %v430, 0.0
  %451 = vadd.xlane.f32.xlu0 %v450
  %v452 = vpop.xlane.xlu0 %451
  %v453 = vsel %vm382, %v431, 0.0
  %454 = vadd.xlane.f32.xlu0 %v453
  %v455 = vpop.xlane.xlu0 %454
  %v456 = vmul.f32 %v434, %v407
  %v457 = vmul.f32 %v437, %v407
  %v458 = vmul.f32 %v440, %v407
  %v459 = vmul.f32 %v443, %v407
  %v460 = vmul.f32 %v446, %v407
  %v461 = vmul.f32 %v449, %v407
  %v462 = vmul.f32 %v452, %v407
  %v463 = vmul.f32 %v455, %v407
  %v464 = vadd.f32 %v456, 1e-12
  %v465 = vadd.f32 %v457, 1e-12
  %v466 = vadd.f32 %v458, 1e-12
  %v467 = vadd.f32 %v459, 1e-12
  %v468 = vadd.f32 %v460, 1e-12
  %v469 = vadd.f32 %v461, 1e-12
  %v470 = vadd.f32 %v462, 1e-12
  %v471 = vadd.f32 %v463, 1e-12
  %v472 = vrsqrt.pop %v464
  %v473 = vrsqrt.pop %v465
  %v474 = vrsqrt.pop %v466
  %v475 = vrsqrt.pop %v467
  %v476 = vrsqrt.pop %v468
  %v477 = vrsqrt.pop %v469
  %v478 = vrsqrt.pop %v470
  %v479 = vrsqrt.pop %v471
  %v480 = vmul.f32 %v416, %v472
  %v481 = vmul.f32 %v417, %v473
  %v482 = vmul.f32 %v418, %v474
  %v483 = vmul.f32 %v419, %v475
  %v484 = vmul.f32 %v420, %v476
  %v485 = vmul.f32 %v421, %v477
  %v486 = vmul.f32 %v422, %v478
  %v487 = vmul.f32 %v423, %v479
  %v488 = vlaneseq
  %v489 = vshrl.u32 %v488, 7
  %v490 = vsub.s32 0, %v489
  %v491 = vrot.slane %v380, %v490
  %v492 = vmul.f32 %v480, %v491
  %v493 = vmul.f32 %v481, %v491
  %v494 = vmul.f32 %v482, %v491
  %v495 = vmul.f32 %v483, %v491
  %v496 = vmul.f32 %v484, %v491
  %v497 = vmul.f32 %v485, %v491
  %v498 = vmul.f32 %v486, %v491
  %v499 = vmul.f32 %v487, %v491
  %v500 = vlaneseq
  %v501 = vshrl.u32 %v500, 7
  %v502 = vsub.s32 0, %v501
  %v503 = vrot.slane %v381, %v502
  %v504 = vadd.f32 %v492, %v503
  %v505 = vadd.f32 %v493, %v503
  %v506 = vadd.f32 %v494, %v503
  %v507 = vadd.f32 %v495, %v503
  %v508 = vadd.f32 %v496, %v503
  %v509 = vadd.f32 %v497, %v503
  %v510 = vadd.f32 %v498, %v503
  %v511 = vadd.f32 %v499, %v503
  %v512 = vld [vmem:[%s1] sm:$0xff]
  %v513 = vld [vmem:[%s1 + $0x8] sm:$0xff]
  %v514 = vld [vmem:[%s1 + $0x10] sm:$0xff]
  %v515 = vld [vmem:[%s1 + $0x18] sm:$0xff]
  %v516 = vld [vmem:[%s1 + $0x20] sm:$0xff]
  %v517 = vld [vmem:[%s1 + $0x28] sm:$0xff]
  %v518 = vld [vmem:[%s1 + $0x30] sm:$0xff]
  %v519 = vld [vmem:[%s1 + $0x38] sm:$0xff]
  %vm520 = vcmp.ge.s32.totalorder %v36, 0
  %vm521 = vcmp.lt.s32.totalorder %v36, 16
  %vm522 = vmand %vm520, %vm521
  %v523 = vsel %vm522, 1, 0
  %v524 = vcvt.s32.f32 %v523
  %vm525 = vcmp.ge.s32.totalorder %v36, 16
  %vm526 = vcmp.lt.s32.totalorder %v36, 32
  %vm527 = vmand %vm525, %vm526
  %v528 = vsel %vm527, 1, 0
  %v529 = vcvt.s32.f32 %v528
  %v530 = vpack.c.bf16 %v505, %v504
  %v531 = vpack.c.bf16 %v507, %v506
  %v532 = vpack.c.bf16 %v509, %v508
  %v533 = vpack.c.bf16 %v511, %v510
  %v534 = vld [vmem:[%s4] sm:$0xf]
  %v535 = vld [vmem:[%s4 + $0x8] sm:$0xf]
  %v536 = vld [vmem:[%s4 + $0x10] sm:$0xf]
  %v537 = vld [vmem:[%s4 + $0x18] sm:$0xf]
  %v542 = vunpack.c.l.b16 %v534
  %v543 = vunpack.c.l.b16 %v535
  %v544 = vunpack.c.l.b16 %v536
  %v545 = vunpack.c.l.b16 %v537
  %v546 = vpack.c.b16 %v543, %v542
  %v547 = vpack.c.b16 %v545, %v544
  %v551 = vsel %vm382, %v530, 0
  %v554 = vsel %vm382, %v531, 0
  %v557 = vsel %vm382, %v532, 0
  %v560 = vsel %vm382, %v533, 0
  %562 = vmatprep.subr.bf16.mxu0 0
  %563 = vmatpush1.bf16.msra.mxu0 %v546
  %564 = vmatprep.subr.bf16.mxu0 0
  %565 = vmatpush1.bf16.msra.mxu0 %v547
  %566 = vmatprep.subr.bf16.mxu0 0
  %567 = vmatpush1.bf16.msra.mxu0 0
  %568 = vmatprep.subr.bf16.mxu0 0
  %569 = vmatpush1.bf16.msra.mxu0 0
  %570 = vmatprep.subr.bf16.mxu0 0
  %571 = vmatpush1.bf16.msra.mxu0 0
  %572 = vmatprep.subr.bf16.mxu0 0
  %573 = vmatpush1.bf16.msra.mxu0 0
  %574 = vmatprep.subr.bf16.mxu0 0
  %575 = vmatpush1.bf16.msra.mxu0 0
  %576 = vmatprep.subr.bf16.mxu0 0
  %577 = vmatpush1.bf16.msra.mxu0 0
  %578 = vmatprep.subr.bf16.mxu0 0
  %579 = vmatpush1.bf16.msra.mxu0 0
  %580 = vmatprep.subr.bf16.mxu0 0
  %581 = vmatpush1.bf16.msra.mxu0 0
  %582 = vmatprep.subr.bf16.mxu0 0
  %583 = vmatpush1.bf16.msra.mxu0 0
  %584 = vmatprep.subr.bf16.mxu0 0
  %585 = vmatpush1.bf16.msra.mxu0 0
  %586 = vmatprep.subr.bf16.mxu0 0
  %587 = vmatpush1.bf16.msra.mxu0 0
  %588 = vmatprep.subr.bf16.mxu0 0
  %589 = vmatpush1.bf16.msra.mxu0 0
  %590 = vmatprep.subr.bf16.mxu0 0
  %591 = vmatpush1.bf16.msra.mxu0 0
  %592 = vmatprep.subr.bf16.mxu0 0
  %593 = vmatpush1.bf16.msra.mxu0 0
  %594 = vmatprep.mubr.bf16.mxu0 0
  %595 = vmatmul.mubr.bf16.gmra.mrb[0].mxu0 %v551
  %v596 = vpop.f32.mrb[0].mxu0
  %v597 = vadd.f32 0.0, %v596
  %v598 = vpop.f32.mrb[0].mxu0
  %v599 = vpop.f32.mrb[0].mxu0
  %v600 = vadd.f32 0.0, %v599
  %v601 = vpop.f32.mrb[0].mxu0
  %602 = vmatprep.mubr.bf16.mxu0 0
  %603 = vmatmul.mubr.bf16.gmra.mrb[0].mxu0 %v554
  %v604 = vpop.f32.mrb[0].mxu0
  %v605 = vadd.f32 0.0, %v604
  %v606 = vpop.f32.mrb[0].mxu0
  %v607 = vpop.f32.mrb[0].mxu0
  %v608 = vadd.f32 0.0, %v607
  %v609 = vpop.f32.mrb[0].mxu0
  %610 = vmatprep.mubr.bf16.mxu0 0
  %611 = vmatmul.mubr.bf16.gmra.mrb[0].mxu0 %v557
  %v612 = vpop.f32.mrb[0].mxu0
  %v613 = vadd.f32 0.0, %v612
  %v614 = vpop.f32.mrb[0].mxu0
  %v615 = vpop.f32.mrb[0].mxu0
  %v616 = vadd.f32 0.0, %v615
  %v617 = vpop.f32.mrb[0].mxu0
  %618 = vmatprep.mubr.bf16.mxu0 0
  %619 = vmatmul.mubr.bf16.gmra.mrb[0].mxu0 %v560
  %v620 = vpop.f32.mrb[0].mxu0
  %v621 = vadd.f32 0.0, %v620
  %v622 = vpop.f32.mrb[0].mxu0
  %v623 = vpop.f32.mrb[0].mxu0
  %v624 = vadd.f32 0.0, %v623
  %v625 = vpop.f32.mrb[0].mxu0
  %626 = vdwg.mxu0
  %v627 = vld [vmem:[%s6 + $0x2] sm:$0x1]
  %v628 = vlaneseq
  %v629 = vshrl.u32 %v628, 7
  %v630 = vsub.s32 0, %v629
  %v631 = vrot.slane %v627, %v630
  %v632 = vadd.f32 %v597, %v631
  %v633 = vadd.f32 %v600, %v631
  %v634 = vadd.f32 %v605, %v631
  %v635 = vadd.f32 %v608, %v631
  %v636 = vadd.f32 %v613, %v631
  %v637 = vadd.f32 %v616, %v631
  %v638 = vadd.f32 %v621, %v631
  %v639 = vadd.f32 %v624, %v631
  %v640 = vld [vmem:[%s6 + $0x3] sm:$0x1]
  %v641 = vlaneseq
  %v642 = vshrl.u32 %v641, 7
  %v643 = vsub.s32 0, %v642
  %v644 = vrot.slane %v640, %v643
  %646 = vrot.lane.b32.xlu0 %v644, 32
  %v647 = vpop.permute.xlu0 %646
  %v649 = vadd.f32 %v597, %v647
  %v650 = vadd.f32 %v600, %v647
  %v651 = vadd.f32 %v605, %v647
  %v652 = vadd.f32 %v608, %v647
  %v653 = vadd.f32 %v613, %v647
  %v654 = vadd.f32 %v616, %v647
  %v655 = vadd.f32 %v621, %v647
  %v656 = vadd.f32 %v624, %v647
  %v657 = vld [vmem:[%s6 + $0x4] sm:$0x1]
  %v658 = vlaneseq
  %v659 = vshrl.u32 %v658, 7
  %v660 = vsub.s32 0, %v659
  %v661 = vrot.slane %v657, %v660
  %663 = vrot.lane.b32.xlu0 %v661, 64
  %v664 = vpop.permute.xlu0 %663
  %v666 = vadd.f32 %v597, %v664
  %v667 = vadd.f32 %v600, %v664
  %v668 = vadd.f32 %v605, %v664
  %v669 = vadd.f32 %v608, %v664
  %v670 = vadd.f32 %v613, %v664
  %v671 = vadd.f32 %v616, %v664
  %v672 = vadd.f32 %v621, %v664
  %v673 = vadd.f32 %v624, %v664
  %v674 = vpack.c.bf16 %v633, %v632
  %v675 = vpack.c.bf16 %v635, %v634
  %v676 = vpack.c.bf16 %v637, %v636
  %v677 = vpack.c.bf16 %v639, %v638
  %679 = vrot.lane.b32.xlu0 %v524, 32
  %v680 = vpop.permute.xlu0 %679
  %v682 = vmul.f32 %v649, %v680
  %v683 = vmul.f32 %v650, %v680
  %v684 = vmul.f32 %v651, %v680
  %v685 = vmul.f32 %v652, %v680
  %v686 = vmul.f32 %v653, %v680
  %v687 = vmul.f32 %v654, %v680
  %v688 = vmul.f32 %v655, %v680
  %v689 = vmul.f32 %v656, %v680
  %v690 = vpack.c.bf16 %v683, %v682
  %v691 = vpack.c.bf16 %v685, %v684
  %v692 = vpack.c.bf16 %v687, %v686
  %v693 = vpack.c.bf16 %v689, %v688
  %698 = vrot.lane.b32.xlu0 %v690, 96
  %v699 = vpop.permute.xlu0 %698
  %700 = vrot.lane.b32.xlu0 %v691, 96
  %v701 = vpop.permute.xlu0 %700
  %702 = vrot.lane.b32.xlu0 %v692, 96
  %v703 = vpop.permute.xlu0 %702
  %704 = vrot.lane.b32.xlu0 %v693, 96
  %v705 = vpop.permute.xlu0 %704
  %v707 = vsel %vm382, %v674, 0
  %v710 = vsel %vm382, %v675, 0
  %v713 = vsel %vm382, %v676, 0
  %v716 = vsel %vm382, %v677, 0
  %v719 = vsel %vm382, %v699, 0
  %v722 = vsel %vm382, %v701, 0
  %v725 = vsel %vm382, %v703, 0
  %v728 = vsel %vm382, %v705, 0
  %730 = vmatprep.subr.bf16.mxu0 0
  %731 = vmatpush1.bf16.xpose.msra.mxu0 %v719
  %732 = vmatprep.subr.bf16.mxu0 0
  %733 = vmatpush1.bf16.xpose.msra.mxu0 %v722
  %734 = vmatprep.subr.bf16.mxu0 0
  %735 = vmatpush1.bf16.xpose.msra.mxu0 %v725
  %736 = vmatprep.subr.bf16.mxu0 0
  %737 = vmatpush1.bf16.xpose.msra.mxu0 %v728
  %738 = vmatprep.subr.bf16.mxu0 0
  %739 = vmatpush1.bf16.xpose.msra.mxu0 0
  %740 = vmatprep.subr.bf16.mxu0 0
  %741 = vmatpush1.bf16.xpose.msra.mxu0 0
  %742 = vmatprep.subr.bf16.mxu0 0
  %743 = vmatpush1.bf16.xpose.msra.mxu0 0
  %744 = vmatprep.subr.bf16.mxu0 0
  %745 = vmatpush1.bf16.xpose.msra.mxu0 0
  %746 = vmatprep.subr.bf16.mxu0 0
  %747 = vmatpush1.bf16.xpose.msra.mxu0 0
  %748 = vmatprep.subr.bf16.mxu0 0
  %749 = vmatpush1.bf16.xpose.msra.mxu0 0
  %750 = vmatprep.subr.bf16.mxu0 0
  %751 = vmatpush1.bf16.xpose.msra.mxu0 0
  %752 = vmatprep.subr.bf16.mxu0 0
  %753 = vmatpush1.bf16.xpose.msra.mxu0 0
  %754 = vmatprep.subr.bf16.mxu0 0
  %755 = vmatpush1.bf16.xpose.msra.mxu0 0
  %756 = vmatprep.subr.bf16.mxu0 0
  %757 = vmatpush1.bf16.xpose.msra.mxu0 0
  %758 = vmatprep.subr.bf16.mxu0 0
  %759 = vmatpush1.bf16.xpose.msra.mxu0 0
  %760 = vmatprep.subr.bf16.mxu0 0
  %761 = vmatpush1.bf16.xpose.msra.mxu0 0
  %762 = vmatprep.mubr.bf16.mxu0 0
  %763 = vmatmul.mubr.bf16.gmra.mrb[0].mxu0 %v707
  %v764 = vpop.f32.mrb[0].mxu0
  %v765 = vadd.f32 0.0, %v764
  %v766 = vpop.f32.mrb[0].mxu0
  %v767 = vpop.f32.mrb[0].mxu0
  %v768 = vadd.f32 0.0, %v767
  %v769 = vpop.f32.mrb[0].mxu0
  %770 = vmatprep.mubr.bf16.mxu0 0
  %771 = vmatmul.mubr.bf16.gmra.mrb[0].mxu0 %v710
  %v772 = vpop.f32.mrb[0].mxu0
  %v773 = vadd.f32 0.0, %v772
  %v774 = vpop.f32.mrb[0].mxu0
  %v775 = vpop.f32.mrb[0].mxu0
  %v776 = vadd.f32 0.0, %v775
  %v777 = vpop.f32.mrb[0].mxu0
  %778 = vmatprep.mubr.bf16.mxu0 0
  %779 = vmatmul.mubr.bf16.gmra.mrb[0].mxu0 %v713
  %v780 = vpop.f32.mrb[0].mxu0
  %v781 = vadd.f32 0.0, %v780
  %v782 = vpop.f32.mrb[0].mxu0
  %v783 = vpop.f32.mrb[0].mxu0
  %v784 = vadd.f32 0.0, %v783
  %v785 = vpop.f32.mrb[0].mxu0
  %786 = vmatprep.mubr.bf16.mxu0 0
  %787 = vmatmul.mubr.bf16.gmra.mrb[0].mxu0 %v716
  %v788 = vpop.f32.mrb[0].mxu0
  %v789 = vadd.f32 0.0, %v788
  %v790 = vpop.f32.mrb[0].mxu0
  %v791 = vpop.f32.mrb[0].mxu0
  %v792 = vadd.f32 0.0, %v791
  %v793 = vpop.f32.mrb[0].mxu0
  %794 = vdwg.mxu0
  %v795 = vmul.f32 %v765, 0.25
  %v796 = vmul.f32 %v768, 0.25
  %v797 = vmul.f32 %v773, 0.25
  %v798 = vmul.f32 %v776, 0.25
  %v799 = vmul.f32 %v781, 0.25
  %v800 = vmul.f32 %v784, 0.25
  %v801 = vmul.f32 %v789, 0.25
  %v802 = vmul.f32 %v792, 0.25
  %v803 = vadd.f32 %v795, %v512
  %v804 = vadd.f32 %v796, %v513
  %v805 = vadd.f32 %v797, %v514
  %v806 = vadd.f32 %v798, %v515
  %v807 = vadd.f32 %v799, %v516
  %v808 = vadd.f32 %v800, %v517
  %v809 = vadd.f32 %v801, %v518
  %v810 = vadd.f32 %v802, %v519
  %vm811 = vcmask 523264
  %v812 = vsel %vm811, %v803, -inf
  %813 = vmax.xlane.f32.xlu0 %v812
  %v814 = vpop.xlane.xlu0 %813
  %v815 = vsel %vm811, %v804, -inf
  %816 = vmax.xlane.f32.xlu0 %v815
  %v817 = vpop.xlane.xlu0 %816
  %v818 = vsel %vm811, %v805, -inf
  %819 = vmax.xlane.f32.xlu0 %v818
  %v820 = vpop.xlane.xlu0 %819
  %v821 = vsel %vm811, %v806, -inf
  %822 = vmax.xlane.f32.xlu0 %v821
  %v823 = vpop.xlane.xlu0 %822
  %v824 = vsel %vm811, %v807, -inf
  %825 = vmax.xlane.f32.xlu0 %v824
  %v826 = vpop.xlane.xlu0 %825
  %v827 = vsel %vm811, %v808, -inf
  %828 = vmax.xlane.f32.xlu0 %v827
  %v829 = vpop.xlane.xlu0 %828
  %v830 = vsel %vm811, %v809, -inf
  %831 = vmax.xlane.f32.xlu0 %v830
  %v832 = vpop.xlane.xlu0 %831
  %v833 = vsel %vm811, %v810, -inf
  %834 = vmax.xlane.f32.xlu0 %v833
  %v835 = vpop.xlane.xlu0 %834
  %v836 = vsub.f32 %v803, %v814
  %v837 = vsub.f32 %v804, %v817
  %v838 = vsub.f32 %v805, %v820
  %v839 = vsub.f32 %v806, %v823
  %v840 = vsub.f32 %v807, %v826
  %v841 = vsub.f32 %v808, %v829
  %v842 = vsub.f32 %v809, %v832
  %v843 = vsub.f32 %v810, %v835
  %v844 = vmul.f32 %v836, 1.442695
  %v845 = vpow.pop %v844
  %v846 = vmul.f32 %v837, 1.442695
  %v847 = vpow.pop %v846
  %v848 = vmul.f32 %v838, 1.442695
  %v849 = vpow.pop %v848
  %v850 = vmul.f32 %v839, 1.442695
  %v851 = vpow.pop %v850
  %v852 = vmul.f32 %v840, 1.442695
  %v853 = vpow.pop %v852
  %v854 = vmul.f32 %v841, 1.442695
  %v855 = vpow.pop %v854
  %v856 = vmul.f32 %v842, 1.442695
  %v857 = vpow.pop %v856
  %v858 = vmul.f32 %v843, 1.442695
  %v859 = vpow.pop %v858
  %v860 = vsel %vm811, %v845, 0.0
  %861 = vadd.xlane.f32.xlu0 %v860
  %v862 = vpop.xlane.xlu0 %861
  %v863 = vsel %vm811, %v847, 0.0
  %864 = vadd.xlane.f32.xlu0 %v863
  %v865 = vpop.xlane.xlu0 %864
  %v866 = vsel %vm811, %v849, 0.0
  %867 = vadd.xlane.f32.xlu0 %v866
  %v868 = vpop.xlane.xlu0 %867
  %v869 = vsel %vm811, %v851, 0.0
  %870 = vadd.xlane.f32.xlu0 %v869
  %v871 = vpop.xlane.xlu0 %870
  %v872 = vsel %vm811, %v853, 0.0
  %873 = vadd.xlane.f32.xlu0 %v872
  %v874 = vpop.xlane.xlu0 %873
  %v875 = vsel %vm811, %v855, 0.0
  %876 = vadd.xlane.f32.xlu0 %v875
  %v877 = vpop.xlane.xlu0 %876
  %v878 = vsel %vm811, %v857, 0.0
  %879 = vadd.xlane.f32.xlu0 %v878
  %v880 = vpop.xlane.xlu0 %879
  %v881 = vsel %vm811, %v859, 0.0
  %882 = vadd.xlane.f32.xlu0 %v881
  %v883 = vpop.xlane.xlu0 %882
  %v884 = vrcp.pop %v862
  %v885 = vrcp.pop %v865
  %v886 = vrcp.pop %v868
  %v887 = vrcp.pop %v871
  %v888 = vrcp.pop %v874
  %v889 = vrcp.pop %v877
  %v890 = vrcp.pop %v880
  %v891 = vrcp.pop %v883
  %v892 = vmul.f32 %v845, %v884
  %v893 = vmul.f32 %v847, %v885
  %v894 = vmul.f32 %v849, %v886
  %v895 = vmul.f32 %v851, %v887
  %v896 = vmul.f32 %v853, %v888
  %v897 = vmul.f32 %v855, %v889
  %v898 = vmul.f32 %v857, %v890
  %v899 = vmul.f32 %v859, %v891
  %900 = vrot.lane.b32.xlu0 %v524, 64
  %v901 = vpop.permute.xlu0 %900
  %v903 = vmul.f32 %v666, %v901
  %v904 = vmul.f32 %v667, %v901
  %v905 = vmul.f32 %v668, %v901
  %v906 = vmul.f32 %v669, %v901
  %v907 = vmul.f32 %v670, %v901
  %v908 = vmul.f32 %v671, %v901
  %v909 = vmul.f32 %v672, %v901
  %v910 = vmul.f32 %v673, %v901
  %v911 = vpack.c.bf16 %v904, %v903
  %v912 = vpack.c.bf16 %v906, %v905
  %v913 = vpack.c.bf16 %v908, %v907
  %v914 = vpack.c.bf16 %v910, %v909
  %v915 = vpack.c.bf16 %v893, %v892
  %v916 = vpack.c.bf16 %v895, %v894
  %v917 = vpack.c.bf16 %v897, %v896
  %v918 = vpack.c.bf16 %v899, %v898
  %920 = vrot.lane.b32.xlu0 %v529, 32
  %v921 = vpop.permute.xlu0 %920
  %v923 = vmul.f32 %v649, %v921
  %v924 = vmul.f32 %v650, %v921
  %v925 = vmul.f32 %v651, %v921
  %v926 = vmul.f32 %v652, %v921
  %v927 = vmul.f32 %v653, %v921
  %v928 = vmul.f32 %v654, %v921
  %v929 = vmul.f32 %v655, %v921
  %v930 = vmul.f32 %v656, %v921
  %v931 = vpack.c.bf16 %v924, %v923
  %v932 = vpack.c.bf16 %v926, %v925
  %v933 = vpack.c.bf16 %v928, %v927
  %v934 = vpack.c.bf16 %v930, %v929
  %939 = vrot.lane.b32.xlu0 %v931, 96
  %v940 = vpop.permute.xlu0 %939
  %941 = vrot.lane.b32.xlu0 %v932, 96
  %v942 = vpop.permute.xlu0 %941
  %943 = vrot.lane.b32.xlu0 %v933, 96
  %v944 = vpop.permute.xlu0 %943
  %945 = vrot.lane.b32.xlu0 %v934, 96
  %v946 = vpop.permute.xlu0 %945
  %v948 = vsel %vm382, %v940, 0
  %v951 = vsel %vm382, %v942, 0
  %v954 = vsel %vm382, %v944, 0
  %v957 = vsel %vm382, %v946, 0
  %959 = vmatprep.subr.bf16.mxu0 0
  %960 = vmatpush1.bf16.xpose.msra.mxu0 %v948
  %961 = vmatprep.subr.bf16.mxu0 0
  %962 = vmatpush1.bf16.xpose.msra.mxu0 %v951
  %963 = vmatprep.subr.bf16.mxu0 0
  %964 = vmatpush1.bf16.xpose.msra.mxu0 %v954
  %965 = vmatprep.subr.bf16.mxu0 0
  %966 = vmatpush1.bf16.xpose.msra.mxu0 %v957
  %967 = vmatprep.subr.bf16.mxu0 0
  %968 = vmatpush1.bf16.xpose.msra.mxu0 0
  %969 = vmatprep.subr.bf16.mxu0 0
  %970 = vmatpush1.bf16.xpose.msra.mxu0 0
  %971 = vmatprep.subr.bf16.mxu0 0
  %972 = vmatpush1.bf16.xpose.msra.mxu0 0
  %973 = vmatprep.subr.bf16.mxu0 0
  %974 = vmatpush1.bf16.xpose.msra.mxu0 0
  %975 = vmatprep.subr.bf16.mxu0 0
  %976 = vmatpush1.bf16.xpose.msra.mxu0 0
  %977 = vmatprep.subr.bf16.mxu0 0
  %978 = vmatpush1.bf16.xpose.msra.mxu0 0
  %979 = vmatprep.subr.bf16.mxu0 0
  %980 = vmatpush1.bf16.xpose.msra.mxu0 0
  %981 = vmatprep.subr.bf16.mxu0 0
  %982 = vmatpush1.bf16.xpose.msra.mxu0 0
  %983 = vmatprep.subr.bf16.mxu0 0
  %984 = vmatpush1.bf16.xpose.msra.mxu0 0
  %985 = vmatprep.subr.bf16.mxu0 0
  %986 = vmatpush1.bf16.xpose.msra.mxu0 0
  %987 = vmatprep.subr.bf16.mxu0 0
  %988 = vmatpush1.bf16.xpose.msra.mxu0 0
  %989 = vmatprep.subr.bf16.mxu0 0
  %990 = vmatpush1.bf16.xpose.msra.mxu0 0
  %991 = vmatprep.mubr.bf16.mxu0 0
  %992 = vmatmul.mubr.bf16.gmra.mrb[0].mxu0 %v707
  %v993 = vpop.f32.mrb[0].mxu0
  %v994 = vadd.f32 0.0, %v993
  %v995 = vpop.f32.mrb[0].mxu0
  %v996 = vpop.f32.mrb[0].mxu0
  %v997 = vadd.f32 0.0, %v996
  %v998 = vpop.f32.mrb[0].mxu0
  %999 = vmatprep.mubr.bf16.mxu0 0
  %1000 = vmatmul.mubr.bf16.gmra.mrb[0].mxu0 %v710
  %v1001 = vpop.f32.mrb[0].mxu0
  %v1002 = vadd.f32 0.0, %v1001
  %v1003 = vpop.f32.mrb[0].mxu0
  %v1004 = vpop.f32.mrb[0].mxu0
  %v1005 = vadd.f32 0.0, %v1004
  %v1006 = vpop.f32.mrb[0].mxu0
  %1007 = vmatprep.mubr.bf16.mxu0 0
  %1008 = vmatmul.mubr.bf16.gmra.mrb[0].mxu0 %v713
  %v1009 = vpop.f32.mrb[0].mxu0
  %v1010 = vadd.f32 0.0, %v1009
  %v1011 = vpop.f32.mrb[0].mxu0
  %v1012 = vpop.f32.mrb[0].mxu0
  %v1013 = vadd.f32 0.0, %v1012
  %v1014 = vpop.f32.mrb[0].mxu0
  %1015 = vmatprep.mubr.bf16.mxu0 0
  %1016 = vmatmul.mubr.bf16.gmra.mrb[0].mxu0 %v716
  %v1017 = vpop.f32.mrb[0].mxu0
  %v1018 = vadd.f32 0.0, %v1017
  %v1019 = vpop.f32.mrb[0].mxu0
  %v1020 = vpop.f32.mrb[0].mxu0
  %v1021 = vadd.f32 0.0, %v1020
  %v1022 = vpop.f32.mrb[0].mxu0
  %1023 = vdwg.mxu0
  %v1024 = vmul.f32 %v994, 0.25
  %v1025 = vmul.f32 %v997, 0.25
  %v1026 = vmul.f32 %v1002, 0.25
  %v1027 = vmul.f32 %v1005, 0.25
  %v1028 = vmul.f32 %v1010, 0.25
  %v1029 = vmul.f32 %v1013, 0.25
  %v1030 = vmul.f32 %v1018, 0.25
  %v1031 = vmul.f32 %v1021, 0.25
  %v1032 = vadd.f32 %v1024, %v512
  %v1033 = vadd.f32 %v1025, %v513
  %v1034 = vadd.f32 %v1026, %v514
  %v1035 = vadd.f32 %v1027, %v515
  %v1036 = vadd.f32 %v1028, %v516
  %v1037 = vadd.f32 %v1029, %v517
  %v1038 = vadd.f32 %v1030, %v518
  %v1039 = vadd.f32 %v1031, %v519
  %v1040 = vsel %vm811, %v1032, -inf
  %1041 = vmax.xlane.f32.xlu0 %v1040
  %v1042 = vpop.xlane.xlu0 %1041
  %v1043 = vsel %vm811, %v1033, -inf
  %1044 = vmax.xlane.f32.xlu0 %v1043
  %v1045 = vpop.xlane.xlu0 %1044
  %v1046 = vsel %vm811, %v1034, -inf
  %1047 = vmax.xlane.f32.xlu0 %v1046
  %v1048 = vpop.xlane.xlu0 %1047
  %v1049 = vsel %vm811, %v1035, -inf
  %1050 = vmax.xlane.f32.xlu0 %v1049
  %v1051 = vpop.xlane.xlu0 %1050
  %v1052 = vsel %vm811, %v1036, -inf
  %1053 = vmax.xlane.f32.xlu0 %v1052
  %v1054 = vpop.xlane.xlu0 %1053
  %v1055 = vsel %vm811, %v1037, -inf
  %1056 = vmax.xlane.f32.xlu0 %v1055
  %v1057 = vpop.xlane.xlu0 %1056
  %v1058 = vsel %vm811, %v1038, -inf
  %1059 = vmax.xlane.f32.xlu0 %v1058
  %v1060 = vpop.xlane.xlu0 %1059
  %v1061 = vsel %vm811, %v1039, -inf
  %1062 = vmax.xlane.f32.xlu0 %v1061
  %v1063 = vpop.xlane.xlu0 %1062
  %v1064 = vsub.f32 %v1032, %v1042
  %v1065 = vsub.f32 %v1033, %v1045
  %v1066 = vsub.f32 %v1034, %v1048
  %v1067 = vsub.f32 %v1035, %v1051
  %v1068 = vsub.f32 %v1036, %v1054
  %v1069 = vsub.f32 %v1037, %v1057
  %v1070 = vsub.f32 %v1038, %v1060
  %v1071 = vsub.f32 %v1039, %v1063
  %v1072 = vmul.f32 %v1064, 1.442695
  %v1073 = vpow.pop %v1072
  %v1074 = vmul.f32 %v1065, 1.442695
  %v1075 = vpow.pop %v1074
  %v1076 = vmul.f32 %v1066, 1.442695
  %v1077 = vpow.pop %v1076
  %v1078 = vmul.f32 %v1067, 1.442695
  %v1079 = vpow.pop %v1078
  %v1080 = vmul.f32 %v1068, 1.442695
  %v1081 = vpow.pop %v1080
  %v1082 = vmul.f32 %v1069, 1.442695
  %v1083 = vpow.pop %v1082
  %v1084 = vmul.f32 %v1070, 1.442695
  %v1085 = vpow.pop %v1084
  %v1086 = vmul.f32 %v1071, 1.442695
  %v1087 = vpow.pop %v1086
  %v1088 = vsel %vm811, %v1073, 0.0
  %1089 = vadd.xlane.f32.xlu0 %v1088
  %v1090 = vpop.xlane.xlu0 %1089
  %v1091 = vsel %vm811, %v1075, 0.0
  %1092 = vadd.xlane.f32.xlu0 %v1091
  %v1093 = vpop.xlane.xlu0 %1092
  %v1094 = vsel %vm811, %v1077, 0.0
  %1095 = vadd.xlane.f32.xlu0 %v1094
  %v1096 = vpop.xlane.xlu0 %1095
  %v1097 = vsel %vm811, %v1079, 0.0
  %1098 = vadd.xlane.f32.xlu0 %v1097
  %v1099 = vpop.xlane.xlu0 %1098
  %v1100 = vsel %vm811, %v1081, 0.0
  %1101 = vadd.xlane.f32.xlu0 %v1100
  %v1102 = vpop.xlane.xlu0 %1101
  %v1103 = vsel %vm811, %v1083, 0.0
  %1104 = vadd.xlane.f32.xlu0 %v1103
  %v1105 = vpop.xlane.xlu0 %1104
  %v1106 = vsel %vm811, %v1085, 0.0
  %1107 = vadd.xlane.f32.xlu0 %v1106
  %v1108 = vpop.xlane.xlu0 %1107
  %v1109 = vsel %vm811, %v1087, 0.0
  %1110 = vadd.xlane.f32.xlu0 %v1109
  %v1111 = vpop.xlane.xlu0 %1110
  %v1112 = vrcp.pop %v1090
  %v1113 = vrcp.pop %v1093
  %v1114 = vrcp.pop %v1096
  %v1115 = vrcp.pop %v1099
  %v1116 = vrcp.pop %v1102
  %v1117 = vrcp.pop %v1105
  %v1118 = vrcp.pop %v1108
  %v1119 = vrcp.pop %v1111
  %v1120 = vmul.f32 %v1073, %v1112
  %v1121 = vmul.f32 %v1075, %v1113
  %v1122 = vmul.f32 %v1077, %v1114
  %v1123 = vmul.f32 %v1079, %v1115
  %v1124 = vmul.f32 %v1081, %v1116
  %v1125 = vmul.f32 %v1083, %v1117
  %v1126 = vmul.f32 %v1085, %v1118
  %v1127 = vmul.f32 %v1087, %v1119
  %1128 = vrot.lane.b32.xlu0 %v529, 64
  %v1129 = vpop.permute.xlu0 %1128
  %v1131 = vmul.f32 %v666, %v1129
  %v1132 = vmul.f32 %v667, %v1129
  %v1133 = vmul.f32 %v668, %v1129
  %v1134 = vmul.f32 %v669, %v1129
  %v1135 = vmul.f32 %v670, %v1129
  %v1136 = vmul.f32 %v671, %v1129
  %v1137 = vmul.f32 %v672, %v1129
  %v1138 = vmul.f32 %v673, %v1129
  %v1139 = vpack.c.bf16 %v1132, %v1131
  %v1140 = vpack.c.bf16 %v1134, %v1133
  %v1141 = vpack.c.bf16 %v1136, %v1135
  %v1142 = vpack.c.bf16 %v1138, %v1137
  %v1143 = vpack.c.bf16 %v1121, %v1120
  %v1144 = vpack.c.bf16 %v1123, %v1122
  %v1145 = vpack.c.bf16 %v1125, %v1124
  %v1146 = vpack.c.bf16 %v1127, %v1126
  %1151 = vrot.lane.b32.xlu0 %v1139, 64
  %v1152 = vpop.permute.xlu0 %1151
  %1153 = vrot.lane.b32.xlu0 %v1140, 64
  %v1154 = vpop.permute.xlu0 %1153
  %1155 = vrot.lane.b32.xlu0 %v1141, 64
  %v1156 = vpop.permute.xlu0 %1155
  %1157 = vrot.lane.b32.xlu0 %v1142, 64
  %v1158 = vpop.permute.xlu0 %1157
  %v1164 = vsel %vm811, %v1143, 0
  %v1167 = vsel %vm811, %v1144, 0
  %v1170 = vsel %vm811, %v1145, 0
  %v1173 = vsel %vm811, %v1146, 0
  %1175 = vmatprep.subr.bf16.mxu0 0
  %1176 = vmatpush1.bf16.msra.mxu0 %v1152
  %1177 = vmatprep.subr.bf16.mxu0 0
  %1178 = vmatpush1.bf16.msra.mxu0 %v1154
  %1179 = vmatprep.subr.bf16.mxu0 0
  %1180 = vmatpush1.bf16.msra.mxu0 %v1156
  %1181 = vmatprep.subr.bf16.mxu0 0
  %1182 = vmatpush1.bf16.msra.mxu0 %v1158
  %1183 = vmatprep.subr.bf16.mxu0 0
  %1184 = vmatpush1.bf16.msra.mxu0 0
  %1185 = vmatprep.subr.bf16.mxu0 0
  %1186 = vmatpush1.bf16.msra.mxu0 0
  %1187 = vmatprep.subr.bf16.mxu0 0
  %1188 = vmatpush1.bf16.msra.mxu0 0
  %1189 = vmatprep.subr.bf16.mxu0 0
  %1190 = vmatpush1.bf16.msra.mxu0 0
  %1191 = vmatprep.subr.bf16.mxu0 0
  %1192 = vmatpush1.bf16.msra.mxu0 0
  %1193 = vmatprep.subr.bf16.mxu0 0
  %1194 = vmatpush1.bf16.msra.mxu0 0
  %1195 = vmatprep.subr.bf16.mxu0 0
  %1196 = vmatpush1.bf16.msra.mxu0 0
  %1197 = vmatprep.subr.bf16.mxu0 0
  %1198 = vmatpush1.bf16.msra.mxu0 0
  %1199 = vmatprep.subr.bf16.mxu0 0
  %1200 = vmatpush1.bf16.msra.mxu0 0
  %1201 = vmatprep.subr.bf16.mxu0 0
  %1202 = vmatpush1.bf16.msra.mxu0 0
  %1203 = vmatprep.subr.bf16.mxu0 0
  %1204 = vmatpush1.bf16.msra.mxu0 0
  %1205 = vmatprep.subr.bf16.mxu0 0
  %1206 = vmatpush1.bf16.msra.mxu0 0
  %1207 = vmatprep.mubr.bf16.mxu0 0
  %1208 = vmatmul.mubr.bf16.gmra.mrb[0].mxu0 %v1164
  %v1209 = vpop.f32.mrb[0].mxu0
  %v1210 = vadd.f32 0.0, %v1209
  %v1211 = vpop.f32.mrb[0].mxu0
  %v1212 = vpop.f32.mrb[0].mxu0
  %v1213 = vadd.f32 0.0, %v1212
  %v1214 = vpop.f32.mrb[0].mxu0
  %1215 = vmatprep.mubr.bf16.mxu0 0
  %1216 = vmatmul.mubr.bf16.gmra.mrb[0].mxu0 %v1167
  %v1217 = vpop.f32.mrb[0].mxu0
  %v1218 = vadd.f32 0.0, %v1217
  %v1219 = vpop.f32.mrb[0].mxu0
  %v1220 = vpop.f32.mrb[0].mxu0
  %v1221 = vadd.f32 0.0, %v1220
  %v1222 = vpop.f32.mrb[0].mxu0
  %1223 = vmatprep.mubr.bf16.mxu0 0
  %1224 = vmatmul.mubr.bf16.gmra.mrb[0].mxu0 %v1170
  %v1225 = vpop.f32.mrb[0].mxu0
  %v1226 = vadd.f32 0.0, %v1225
  %v1227 = vpop.f32.mrb[0].mxu0
  %v1228 = vpop.f32.mrb[0].mxu0
  %v1229 = vadd.f32 0.0, %v1228
  %v1230 = vpop.f32.mrb[0].mxu0
  %1231 = vmatprep.mubr.bf16.mxu0 0
  %1232 = vmatmul.mubr.bf16.gmra.mrb[0].mxu0 %v1173
  %v1233 = vpop.f32.mrb[0].mxu0
  %v1234 = vadd.f32 0.0, %v1233
  %v1235 = vpop.f32.mrb[0].mxu0
  %v1236 = vpop.f32.mrb[0].mxu0
  %v1237 = vadd.f32 0.0, %v1236
  %v1238 = vpop.f32.mrb[0].mxu0
  %1239 = vdwg.mxu0
  %1244 = vrot.lane.b32.xlu0 %v911, 64
  %v1245 = vpop.permute.xlu0 %1244
  %1246 = vrot.lane.b32.xlu0 %v912, 64
  %v1247 = vpop.permute.xlu0 %1246
  %1248 = vrot.lane.b32.xlu0 %v913, 64
  %v1249 = vpop.permute.xlu0 %1248
  %1250 = vrot.lane.b32.xlu0 %v914, 64
  %v1251 = vpop.permute.xlu0 %1250
  %v1257 = vsel %vm811, %v915, 0
  %v1260 = vsel %vm811, %v916, 0
  %v1263 = vsel %vm811, %v917, 0
  %v1266 = vsel %vm811, %v918, 0
  %1268 = vmatprep.subr.bf16.mxu0 0
  %1269 = vmatpush1.bf16.msra.mxu0 %v1245
  %1270 = vmatprep.subr.bf16.mxu0 0
  %1271 = vmatpush1.bf16.msra.mxu0 %v1247
  %1272 = vmatprep.subr.bf16.mxu0 0
  %1273 = vmatpush1.bf16.msra.mxu0 %v1249
  %1274 = vmatprep.subr.bf16.mxu0 0
  %1275 = vmatpush1.bf16.msra.mxu0 %v1251
  %1276 = vmatprep.subr.bf16.mxu0 0
  %1277 = vmatpush1.bf16.msra.mxu0 0
  %1278 = vmatprep.subr.bf16.mxu0 0
  %1279 = vmatpush1.bf16.msra.mxu0 0
  %1280 = vmatprep.subr.bf16.mxu0 0
  %1281 = vmatpush1.bf16.msra.mxu0 0
  %1282 = vmatprep.subr.bf16.mxu0 0
  %1283 = vmatpush1.bf16.msra.mxu0 0
  %1284 = vmatprep.subr.bf16.mxu0 0
  %1285 = vmatpush1.bf16.msra.mxu0 0
  %1286 = vmatprep.subr.bf16.mxu0 0
  %1287 = vmatpush1.bf16.msra.mxu0 0
  %1288 = vmatprep.subr.bf16.mxu0 0
  %1289 = vmatpush1.bf16.msra.mxu0 0
  %1290 = vmatprep.subr.bf16.mxu0 0
  %1291 = vmatpush1.bf16.msra.mxu0 0
  %1292 = vmatprep.subr.bf16.mxu0 0
  %1293 = vmatpush1.bf16.msra.mxu0 0
  %1294 = vmatprep.subr.bf16.mxu0 0
  %1295 = vmatpush1.bf16.msra.mxu0 0
  %1296 = vmatprep.subr.bf16.mxu0 0
  %1297 = vmatpush1.bf16.msra.mxu0 0
  %1298 = vmatprep.subr.bf16.mxu0 0
  %1299 = vmatpush1.bf16.msra.mxu0 0
  %1300 = vmatprep.mubr.bf16.mxu0 0
  %1301 = vmatmul.mubr.bf16.gmra.mrb[0].mxu0 %v1257
  %v1302 = vpop.f32.mrb[0].mxu0
  %v1303 = vadd.f32 %v1210, %v1302
  %v1304 = vpop.f32.mrb[0].mxu0
  %v1305 = vpop.f32.mrb[0].mxu0
  %v1306 = vadd.f32 %v1213, %v1305
  %v1307 = vpop.f32.mrb[0].mxu0
  %1308 = vmatprep.mubr.bf16.mxu0 0
  %1309 = vmatmul.mubr.bf16.gmra.mrb[0].mxu0 %v1260
  %v1310 = vpop.f32.mrb[0].mxu0
  %v1311 = vadd.f32 %v1218, %v1310
  %v1312 = vpop.f32.mrb[0].mxu0
  %v1313 = vpop.f32.mrb[0].mxu0
  %v1314 = vadd.f32 %v1221, %v1313
  %v1315 = vpop.f32.mrb[0].mxu0
  %1316 = vmatprep.mubr.bf16.mxu0 0
  %1317 = vmatmul.mubr.bf16.gmra.mrb[0].mxu0 %v1263
  %v1318 = vpop.f32.mrb[0].mxu0
  %v1319 = vadd.f32 %v1226, %v1318
  %v1320 = vpop.f32.mrb[0].mxu0
  %v1321 = vpop.f32.mrb[0].mxu0
  %v1322 = vadd.f32 %v1229, %v1321
  %v1323 = vpop.f32.mrb[0].mxu0
  %1324 = vmatprep.mubr.bf16.mxu0 0
  %1325 = vmatmul.mubr.bf16.gmra.mrb[0].mxu0 %v1266
  %v1326 = vpop.f32.mrb[0].mxu0
  %v1327 = vadd.f32 %v1234, %v1326
  %v1328 = vpop.f32.mrb[0].mxu0
  %v1329 = vpop.f32.mrb[0].mxu0
  %v1330 = vadd.f32 %v1237, %v1329
  %v1331 = vpop.f32.mrb[0].mxu0
  %1332 = vdwg.mxu0
  %v1333 = vpack.c.bf16 %v1306, %v1303
  %v1334 = vpack.c.bf16 %v1314, %v1311
  %v1335 = vpack.c.bf16 %v1322, %v1319
  %v1336 = vpack.c.bf16 %v1330, %v1327
  %v1337 = vld [vmem:[%s6 + $0x5] sm:$0x1]
  %v1338 = vlaneseq
  %v1339 = vshrl.u32 %v1338, 7
  %v1340 = vsub.s32 0, %v1339
  %v1341 = vrot.slane %v1337, %v1340
  %1342 = vrot.lane.b32.xlu0 %v546, 32
  %v1343 = vpop.permute.xlu0 %1342
  %1344 = vrot.lane.b32.xlu0 %v547, 32
  %v1345 = vpop.permute.xlu0 %1344
  %v1349 = vsel %vm382, %v1333, 0
  %v1352 = vsel %vm382, %v1334, 0
  %v1355 = vsel %vm382, %v1335, 0
  %v1358 = vsel %vm382, %v1336, 0
  %1360 = vmatprep.subr.bf16.mxu0 0
  %1361 = vmatpush1.bf16.msra.mxu0 %v1343
  %1362 = vmatprep.subr.bf16.mxu0 0
  %1363 = vmatpush1.bf16.msra.mxu0 %v1345
  %1364 = vmatprep.subr.bf16.mxu0 0
  %1365 = vmatpush1.bf16.msra.mxu0 0
  %1366 = vmatprep.subr.bf16.mxu0 0
  %1367 = vmatpush1.bf16.msra.mxu0 0
  %1368 = vmatprep.subr.bf16.mxu0 0
  %1369 = vmatpush1.bf16.msra.mxu0 0
  %1370 = vmatprep.subr.bf16.mxu0 0
  %1371 = vmatpush1.bf16.msra.mxu0 0
  %1372 = vmatprep.subr.bf16.mxu0 0
  %1373 = vmatpush1.bf16.msra.mxu0 0
  %1374 = vmatprep.subr.bf16.mxu0 0
  %1375 = vmatpush1.bf16.msra.mxu0 0
  %1376 = vmatprep.subr.bf16.mxu0 0
  %1377 = vmatpush1.bf16.msra.mxu0 0
  %1378 = vmatprep.subr.bf16.mxu0 0
  %1379 = vmatpush1.bf16.msra.mxu0 0
  %1380 = vmatprep.subr.bf16.mxu0 0
  %1381 = vmatpush1.bf16.msra.mxu0 0
  %1382 = vmatprep.subr.bf16.mxu0 0
  %1383 = vmatpush1.bf16.msra.mxu0 0
  %1384 = vmatprep.subr.bf16.mxu0 0
  %1385 = vmatpush1.bf16.msra.mxu0 0
  %1386 = vmatprep.subr.bf16.mxu0 0
  %1387 = vmatpush1.bf16.msra.mxu0 0
  %1388 = vmatprep.subr.bf16.mxu0 0
  %1389 = vmatpush1.bf16.msra.mxu0 0
  %1390 = vmatprep.subr.bf16.mxu0 0
  %1391 = vmatpush1.bf16.msra.mxu0 0
  %1392 = vmatprep.mubr.bf16.mxu0 0
  %1393 = vmatmul.mubr.bf16.gmra.mrb[0].mxu0 %v1349
  %v1394 = vpop.f32.mrb[0].mxu0
  %v1395 = vadd.f32 %v1341, %v1394
  %v1396 = vpop.f32.mrb[0].mxu0
  %v1397 = vpop.f32.mrb[0].mxu0
  %v1398 = vadd.f32 %v1341, %v1397
  %v1399 = vpop.f32.mrb[0].mxu0
  %1400 = vmatprep.mubr.bf16.mxu0 0
  %1401 = vmatmul.mubr.bf16.gmra.mrb[0].mxu0 %v1352
  %v1402 = vpop.f32.mrb[0].mxu0
  %v1403 = vadd.f32 %v1341, %v1402
  %v1404 = vpop.f32.mrb[0].mxu0
  %v1405 = vpop.f32.mrb[0].mxu0
  %v1406 = vadd.f32 %v1341, %v1405
  %v1407 = vpop.f32.mrb[0].mxu0
  %1408 = vmatprep.mubr.bf16.mxu0 0
  %1409 = vmatmul.mubr.bf16.gmra.mrb[0].mxu0 %v1355
  %v1410 = vpop.f32.mrb[0].mxu0
  %v1411 = vadd.f32 %v1341, %v1410
  %v1412 = vpop.f32.mrb[0].mxu0
  %v1413 = vpop.f32.mrb[0].mxu0
  %v1414 = vadd.f32 %v1341, %v1413
  %v1415 = vpop.f32.mrb[0].mxu0
  %1416 = vmatprep.mubr.bf16.mxu0 0
  %1417 = vmatmul.mubr.bf16.gmra.mrb[0].mxu0 %v1358
  %v1418 = vpop.f32.mrb[0].mxu0
  %v1419 = vadd.f32 %v1341, %v1418
  %v1420 = vpop.f32.mrb[0].mxu0
  %v1421 = vpop.f32.mrb[0].mxu0
  %v1422 = vadd.f32 %v1341, %v1421
  %v1423 = vpop.f32.mrb[0].mxu0
  %1424 = vdwg.mxu0
  %v1425 = vadd.f32 %v504, %v1395
  %v1426 = vadd.f32 %v505, %v1398
  %v1427 = vadd.f32 %v506, %v1403
  %v1428 = vadd.f32 %v507, %v1406
  %v1429 = vadd.f32 %v508, %v1411
  %v1430 = vadd.f32 %v509, %v1414
  %v1431 = vadd.f32 %v510, %v1419
  %v1432 = vadd.f32 %v511, %v1422
  %v1433 = vld [vmem:[%s6 + $0x6] sm:$0x1]
  %v1434 = vld [vmem:[%s6 + $0x7] sm:$0x1]
  %v1435 = vsel %vm382, %v1425, 0.0
  %1436 = vadd.xlane.f32.xlu0 %v1435
  %v1437 = vpop.xlane.xlu0 %1436
  %v1438 = vsel %vm382, %v1426, 0.0
  %1439 = vadd.xlane.f32.xlu0 %v1438
  %v1440 = vpop.xlane.xlu0 %1439
  %v1441 = vsel %vm382, %v1427, 0.0
  %1442 = vadd.xlane.f32.xlu0 %v1441
  %v1443 = vpop.xlane.xlu0 %1442
  %v1444 = vsel %vm382, %v1428, 0.0
  %1445 = vadd.xlane.f32.xlu0 %v1444
  %v1446 = vpop.xlane.xlu0 %1445
  %v1447 = vsel %vm382, %v1429, 0.0
  %1448 = vadd.xlane.f32.xlu0 %v1447
  %v1449 = vpop.xlane.xlu0 %1448
  %v1450 = vsel %vm382, %v1430, 0.0
  %1451 = vadd.xlane.f32.xlu0 %v1450
  %v1452 = vpop.xlane.xlu0 %1451
  %v1453 = vsel %vm382, %v1431, 0.0
  %1454 = vadd.xlane.f32.xlu0 %v1453
  %v1455 = vpop.xlane.xlu0 %1454
  %v1456 = vsel %vm382, %v1432, 0.0
  %1457 = vadd.xlane.f32.xlu0 %v1456
  %v1458 = vpop.xlane.xlu0 %1457
  %v1459 = vmul.f32 %v1437, %v407
  %v1460 = vmul.f32 %v1440, %v407
  %v1461 = vmul.f32 %v1443, %v407
  %v1462 = vmul.f32 %v1446, %v407
  %v1463 = vmul.f32 %v1449, %v407
  %v1464 = vmul.f32 %v1452, %v407
  %v1465 = vmul.f32 %v1455, %v407
  %v1466 = vmul.f32 %v1458, %v407
  %v1467 = vsub.f32 %v1425, %v1459
  %v1468 = vsub.f32 %v1426, %v1460
  %v1469 = vsub.f32 %v1427, %v1461
  %v1470 = vsub.f32 %v1428, %v1462
  %v1471 = vsub.f32 %v1429, %v1463
  %v1472 = vsub.f32 %v1430, %v1464
  %v1473 = vsub.f32 %v1431, %v1465
  %v1474 = vsub.f32 %v1432, %v1466
  %v1475 = vmul.f32 %v1467, %v1467
  %v1476 = vmul.f32 %v1468, %v1468
  %v1477 = vmul.f32 %v1469, %v1469
  %v1478 = vmul.f32 %v1470, %v1470
  %v1479 = vmul.f32 %v1471, %v1471
  %v1480 = vmul.f32 %v1472, %v1472
  %v1481 = vmul.f32 %v1473, %v1473
  %v1482 = vmul.f32 %v1474, %v1474
  %v1483 = vsel %vm382, %v1475, 0.0
  %1484 = vadd.xlane.f32.xlu0 %v1483
  %v1485 = vpop.xlane.xlu0 %1484
  %v1486 = vsel %vm382, %v1476, 0.0
  %1487 = vadd.xlane.f32.xlu0 %v1486
  %v1488 = vpop.xlane.xlu0 %1487
  %v1489 = vsel %vm382, %v1477, 0.0
  %1490 = vadd.xlane.f32.xlu0 %v1489
  %v1491 = vpop.xlane.xlu0 %1490
  %v1492 = vsel %vm382, %v1478, 0.0
  %1493 = vadd.xlane.f32.xlu0 %v1492
  %v1494 = vpop.xlane.xlu0 %1493
  %v1495 = vsel %vm382, %v1479, 0.0
  %1496 = vadd.xlane.f32.xlu0 %v1495
  %v1497 = vpop.xlane.xlu0 %1496
  %v1498 = vsel %vm382, %v1480, 0.0
  %1499 = vadd.xlane.f32.xlu0 %v1498
  %v1500 = vpop.xlane.xlu0 %1499
  %v1501 = vsel %vm382, %v1481, 0.0
  %1502 = vadd.xlane.f32.xlu0 %v1501
  %v1503 = vpop.xlane.xlu0 %1502
  %v1504 = vsel %vm382, %v1482, 0.0
  %1505 = vadd.xlane.f32.xlu0 %v1504
  %v1506 = vpop.xlane.xlu0 %1505
  %v1507 = vmul.f32 %v1485, %v407
  %v1508 = vmul.f32 %v1488, %v407
  %v1509 = vmul.f32 %v1491, %v407
  %v1510 = vmul.f32 %v1494, %v407
  %v1511 = vmul.f32 %v1497, %v407
  %v1512 = vmul.f32 %v1500, %v407
  %v1513 = vmul.f32 %v1503, %v407
  %v1514 = vmul.f32 %v1506, %v407
  %v1515 = vadd.f32 %v1507, 1e-12
  %v1516 = vadd.f32 %v1508, 1e-12
  %v1517 = vadd.f32 %v1509, 1e-12
  %v1518 = vadd.f32 %v1510, 1e-12
  %v1519 = vadd.f32 %v1511, 1e-12
  %v1520 = vadd.f32 %v1512, 1e-12
  %v1521 = vadd.f32 %v1513, 1e-12
  %v1522 = vadd.f32 %v1514, 1e-12
  %v1523 = vrsqrt.pop %v1515
  %v1524 = vrsqrt.pop %v1516
  %v1525 = vrsqrt.pop %v1517
  %v1526 = vrsqrt.pop %v1518
  %v1527 = vrsqrt.pop %v1519
  %v1528 = vrsqrt.pop %v1520
  %v1529 = vrsqrt.pop %v1521
  %v1530 = vrsqrt.pop %v1522
  %v1531 = vmul.f32 %v1467, %v1523
  %v1532 = vmul.f32 %v1468, %v1524
  %v1533 = vmul.f32 %v1469, %v1525
  %v1534 = vmul.f32 %v1470, %v1526
  %v1535 = vmul.f32 %v1471, %v1527
  %v1536 = vmul.f32 %v1472, %v1528
  %v1537 = vmul.f32 %v1473, %v1529
  %v1538 = vmul.f32 %v1474, %v1530
  %v1539 = vlaneseq
  %v1540 = vshrl.u32 %v1539, 7
  %v1541 = vsub.s32 0, %v1540
  %v1542 = vrot.slane %v1433, %v1541
  %v1543 = vmul.f32 %v1531, %v1542
  %v1544 = vmul.f32 %v1532, %v1542
  %v1545 = vmul.f32 %v1533, %v1542
  %v1546 = vmul.f32 %v1534, %v1542
  %v1547 = vmul.f32 %v1535, %v1542
  %v1548 = vmul.f32 %v1536, %v1542
  %v1549 = vmul.f32 %v1537, %v1542
  %v1550 = vmul.f32 %v1538, %v1542
  %v1551 = vlaneseq
  %v1552 = vshrl.u32 %v1551, 7
  %v1553 = vsub.s32 0, %v1552
  %v1554 = vrot.slane %v1434, %v1553
  %v1555 = vadd.f32 %v1543, %v1554
  %v1556 = vadd.f32 %v1544, %v1554
  %v1557 = vadd.f32 %v1545, %v1554
  %v1558 = vadd.f32 %v1546, %v1554
  %v1559 = vadd.f32 %v1547, %v1554
  %v1560 = vadd.f32 %v1548, %v1554
  %v1561 = vadd.f32 %v1549, %v1554
  %v1562 = vadd.f32 %v1550, %v1554
  %v1563 = vpack.c.bf16 %v1556, %v1555
  %v1564 = vpack.c.bf16 %v1558, %v1557
  %v1565 = vpack.c.bf16 %v1560, %v1559
  %v1566 = vpack.c.bf16 %v1562, %v1561
  %v1567 = vld [vmem:[%s4 + $0x4] sm:$0xf]
  %v1568 = vld [vmem:[%s4 + $0xc] sm:$0xf]
  %v1569 = vld [vmem:[%s4 + $0x14] sm:$0xf]
  %v1570 = vld [vmem:[%s4 + $0x1c] sm:$0xf]
  %v1571 = vld [vmem:[%s6 + $0x8] sm:$0x1]
  %v1572 = vlaneseq
  %v1573 = vshrl.u32 %v1572, 7
  %v1574 = vsub.s32 0, %v1573
  %v1575 = vrot.slane %v1571, %v1574
  %v1580 = vunpack.c.l.b16 %v1567
  %v1581 = vunpack.c.l.b16 %v1568
  %v1582 = vunpack.c.l.b16 %v1569
  %v1583 = vunpack.c.l.b16 %v1570
  %v1584 = vpack.c.b16 %v1581, %v1580
  %v1585 = vpack.c.b16 %v1583, %v1582
  %v1589 = vsel %vm382, %v1563, 0
  %v1592 = vsel %vm382, %v1564, 0
  %v1595 = vsel %vm382, %v1565, 0
  %v1598 = vsel %vm382, %v1566, 0
  %1600 = vmatprep.subr.bf16.mxu0 0
  %1601 = vmatpush1.bf16.msra.mxu0 %v1584
  %1602 = vmatprep.subr.bf16.mxu0 0
  %1603 = vmatpush1.bf16.msra.mxu0 %v1585
  %1604 = vmatprep.subr.bf16.mxu0 0
  %1605 = vmatpush1.bf16.msra.mxu0 0
  %1606 = vmatprep.subr.bf16.mxu0 0
  %1607 = vmatpush1.bf16.msra.mxu0 0
  %1608 = vmatprep.subr.bf16.mxu0 0
  %1609 = vmatpush1.bf16.msra.mxu0 0
  %1610 = vmatprep.subr.bf16.mxu0 0
  %1611 = vmatpush1.bf16.msra.mxu0 0
  %1612 = vmatprep.subr.bf16.mxu0 0
  %1613 = vmatpush1.bf16.msra.mxu0 0
  %1614 = vmatprep.subr.bf16.mxu0 0
  %1615 = vmatpush1.bf16.msra.mxu0 0
  %1616 = vmatprep.subr.bf16.mxu0 0
  %1617 = vmatpush1.bf16.msra.mxu0 0
  %1618 = vmatprep.subr.bf16.mxu0 0
  %1619 = vmatpush1.bf16.msra.mxu0 0
  %1620 = vmatprep.subr.bf16.mxu0 0
  %1621 = vmatpush1.bf16.msra.mxu0 0
  %1622 = vmatprep.subr.bf16.mxu0 0
  %1623 = vmatpush1.bf16.msra.mxu0 0
  %1624 = vmatprep.subr.bf16.mxu0 0
  %1625 = vmatpush1.bf16.msra.mxu0 0
  %1626 = vmatprep.subr.bf16.mxu0 0
  %1627 = vmatpush1.bf16.msra.mxu0 0
  %1628 = vmatprep.subr.bf16.mxu0 0
  %1629 = vmatpush1.bf16.msra.mxu0 0
  %1630 = vmatprep.subr.bf16.mxu0 0
  %1631 = vmatpush1.bf16.msra.mxu0 0
  %1632 = vmatprep.mubr.bf16.mxu0 0
  %1633 = vmatmul.mubr.bf16.gmra.mrb[0].mxu0 %v1589
  %v1634 = vpop.f32.mrb[0].mxu0
  %v1635 = vadd.f32 %v1575, %v1634
  %v1636 = vpop.f32.mrb[0].mxu0
  %v1637 = vpop.f32.mrb[0].mxu0
  %v1638 = vadd.f32 %v1575, %v1637
  %v1639 = vpop.f32.mrb[0].mxu0
  %1640 = vmatprep.mubr.bf16.mxu0 0
  %1641 = vmatmul.mubr.bf16.gmra.mrb[0].mxu0 %v1592
  %v1642 = vpop.f32.mrb[0].mxu0
  %v1643 = vadd.f32 %v1575, %v1642
  %v1644 = vpop.f32.mrb[0].mxu0
  %v1645 = vpop.f32.mrb[0].mxu0
  %v1646 = vadd.f32 %v1575, %v1645
  %v1647 = vpop.f32.mrb[0].mxu0
  %1648 = vmatprep.mubr.bf16.mxu0 0
  %1649 = vmatmul.mubr.bf16.gmra.mrb[0].mxu0 %v1595
  %v1650 = vpop.f32.mrb[0].mxu0
  %v1651 = vadd.f32 %v1575, %v1650
  %v1652 = vpop.f32.mrb[0].mxu0
  %v1653 = vpop.f32.mrb[0].mxu0
  %v1654 = vadd.f32 %v1575, %v1653
  %v1655 = vpop.f32.mrb[0].mxu0
  %1656 = vmatprep.mubr.bf16.mxu0 0
  %1657 = vmatmul.mubr.bf16.gmra.mrb[0].mxu0 %v1598
  %v1658 = vpop.f32.mrb[0].mxu0
  %v1659 = vadd.f32 %v1575, %v1658
  %v1660 = vpop.f32.mrb[0].mxu0
  %v1661 = vpop.f32.mrb[0].mxu0
  %v1662 = vadd.f32 %v1575, %v1661
  %v1663 = vpop.f32.mrb[0].mxu0
  %1664 = vdwg.mxu0
  %v1665 = vmul.f32 %v1635, 0.5
  %v1666 = vmul.f32 %v1638, 0.5
  %v1667 = vmul.f32 %v1643, 0.5
  %v1668 = vmul.f32 %v1646, 0.5
  %v1669 = vmul.f32 %v1651, 0.5
  %v1670 = vmul.f32 %v1654, 0.5
  %v1671 = vmul.f32 %v1659, 0.5
  %v1672 = vmul.f32 %v1662, 0.5
  %v1673 = vmul.f32 %v1635, 0.044715
  %v1674 = vmul.f32 %v1638, 0.044715
  %v1675 = vmul.f32 %v1643, 0.044715
  %v1676 = vmul.f32 %v1646, 0.044715
  %v1677 = vmul.f32 %v1651, 0.044715
  %v1678 = vmul.f32 %v1654, 0.044715
  %v1679 = vmul.f32 %v1659, 0.044715
  %v1680 = vmul.f32 %v1662, 0.044715
  %v1681 = vmul.f32 %v1673, %v1635
  %v1682 = vmul.f32 %v1674, %v1638
  %v1683 = vmul.f32 %v1675, %v1643
  %v1684 = vmul.f32 %v1676, %v1646
  %v1685 = vmul.f32 %v1677, %v1651
  %v1686 = vmul.f32 %v1678, %v1654
  %v1687 = vmul.f32 %v1679, %v1659
  %v1688 = vmul.f32 %v1680, %v1662
  %v1689 = vmul.f32 %v1681, %v1635
  %v1690 = vmul.f32 %v1682, %v1638
  %v1691 = vmul.f32 %v1683, %v1643
  %v1692 = vmul.f32 %v1684, %v1646
  %v1693 = vmul.f32 %v1685, %v1651
  %v1694 = vmul.f32 %v1686, %v1654
  %v1695 = vmul.f32 %v1687, %v1659
  %v1696 = vmul.f32 %v1688, %v1662
  %v1697 = vadd.f32 %v1635, %v1689
  %v1698 = vadd.f32 %v1638, %v1690
  %v1699 = vadd.f32 %v1643, %v1691
  %v1700 = vadd.f32 %v1646, %v1692
  %v1701 = vadd.f32 %v1651, %v1693
  %v1702 = vadd.f32 %v1654, %v1694
  %v1703 = vadd.f32 %v1659, %v1695
  %v1704 = vadd.f32 %v1662, %v1696
  %v1705 = vmul.f32 %v1697, 0.7978846
  %v1706 = vmul.f32 %v1698, 0.7978846
  %v1707 = vmul.f32 %v1699, 0.7978846
  %v1708 = vmul.f32 %v1700, 0.7978846
  %v1709 = vmul.f32 %v1701, 0.7978846
  %v1710 = vmul.f32 %v1702, 0.7978846
  %v1711 = vmul.f32 %v1703, 0.7978846
  %v1712 = vmul.f32 %v1704, 0.7978846
  %v1713 = vtanh.pop %v1705
  %v1714 = vtanh.pop %v1706
  %v1715 = vtanh.pop %v1707
  %v1716 = vtanh.pop %v1708
  %v1717 = vtanh.pop %v1709
  %v1718 = vtanh.pop %v1710
  %v1719 = vtanh.pop %v1711
  %v1720 = vtanh.pop %v1712
  %v1721 = vadd.f32 %v1713, 1.0
  %v1722 = vadd.f32 %v1714, 1.0
  %v1723 = vadd.f32 %v1715, 1.0
  %v1724 = vadd.f32 %v1716, 1.0
  %v1725 = vadd.f32 %v1717, 1.0
  %v1726 = vadd.f32 %v1718, 1.0
  %v1727 = vadd.f32 %v1719, 1.0
  %v1728 = vadd.f32 %v1720, 1.0
  %v1729 = vmul.f32 %v1665, %v1721
  %v1730 = vmul.f32 %v1666, %v1722
  %v1731 = vmul.f32 %v1667, %v1723
  %v1732 = vmul.f32 %v1668, %v1724
  %v1733 = vmul.f32 %v1669, %v1725
  %v1734 = vmul.f32 %v1670, %v1726
  %v1735 = vmul.f32 %v1671, %v1727
  %v1736 = vmul.f32 %v1672, %v1728
  %v1737 = vpack.c.bf16 %v1730, %v1729
  %v1738 = vpack.c.bf16 %v1732, %v1731
  %v1739 = vpack.c.bf16 %v1734, %v1733
  %v1740 = vpack.c.bf16 %v1736, %v1735
  %v1741 = vld [vmem:[%s5] sm:$0xf]
  %v1742 = vld [vmem:[%s5 + $0x4] sm:$0xf]
  %v1743 = vld [vmem:[%s5 + $0x8] sm:$0xf]
  %v1744 = vld [vmem:[%s5 + $0xc] sm:$0xf]
  %v1745 = vld [vmem:[%s5 + $0x10] sm:$0xf]
  %v1746 = vld [vmem:[%s5 + $0x14] sm:$0xf]
  %v1747 = vld [vmem:[%s5 + $0x18] sm:$0xf]
  %v1748 = vld [vmem:[%s5 + $0x1c] sm:$0xf]
  %v1749 = vld [vmem:[%s6 + $0x9] sm:$0x1]
  %v1750 = vlaneseq
  %v1751 = vshrl.u32 %v1750, 7
  %v1752 = vsub.s32 0, %v1751
  %v1753 = vrot.slane %v1749, %v1752
  %v1762 = vunpack.c.l.b16 %v1741
  %v1763 = vunpack.c.l.b16 %v1742
  %v1764 = vunpack.c.l.b16 %v1743
  %v1765 = vunpack.c.l.b16 %v1744
  %v1766 = vunpack.c.l.b16 %v1745
  %v1767 = vunpack.c.l.b16 %v1746
  %v1768 = vunpack.c.l.b16 %v1747
  %v1769 = vunpack.c.l.b16 %v1748
  %v1770 = vpack.c.b16 %v1763, %v1762
  %v1771 = vpack.c.b16 %v1765, %v1764
  %v1772 = vpack.c.b16 %v1767, %v1766
  %v1773 = vpack.c.b16 %v1769, %v1768
  %v1779 = vsel %vm811, %v1737, 0
  %v1782 = vsel %vm811, %v1738, 0
  %v1785 = vsel %vm811, %v1739, 0
  %v1788 = vsel %vm811, %v1740, 0
  %1790 = vmatprep.subr.bf16.mxu0 0
  %1791 = vmatpush1.bf16.msra.mxu0 %v1770
  %1792 = vmatprep.subr.bf16.mxu0 0
  %1793 = vmatpush1.bf16.msra.mxu0 %v1771
  %1794 = vmatprep.subr.bf16.mxu0 0
  %1795 = vmatpush1.bf16.msra.mxu0 %v1772
  %1796 = vmatprep.subr.bf16.mxu0 0
  %1797 = vmatpush1.bf16.msra.mxu0 %v1773
  %1798 = vmatprep.subr.bf16.mxu0 0
  %1799 = vmatpush1.bf16.msra.mxu0 0
  %1800 = vmatprep.subr.bf16.mxu0 0
  %1801 = vmatpush1.bf16.msra.mxu0 0
  %1802 = vmatprep.subr.bf16.mxu0 0
  %1803 = vmatpush1.bf16.msra.mxu0 0
  %1804 = vmatprep.subr.bf16.mxu0 0
  %1805 = vmatpush1.bf16.msra.mxu0 0
  %1806 = vmatprep.subr.bf16.mxu0 0
  %1807 = vmatpush1.bf16.msra.mxu0 0
  %1808 = vmatprep.subr.bf16.mxu0 0
  %1809 = vmatpush1.bf16.msra.mxu0 0
  %1810 = vmatprep.subr.bf16.mxu0 0
  %1811 = vmatpush1.bf16.msra.mxu0 0
  %1812 = vmatprep.subr.bf16.mxu0 0
  %1813 = vmatpush1.bf16.msra.mxu0 0
  %1814 = vmatprep.subr.bf16.mxu0 0
  %1815 = vmatpush1.bf16.msra.mxu0 0
  %1816 = vmatprep.subr.bf16.mxu0 0
  %1817 = vmatpush1.bf16.msra.mxu0 0
  %1818 = vmatprep.subr.bf16.mxu0 0
  %1819 = vmatpush1.bf16.msra.mxu0 0
  %1820 = vmatprep.subr.bf16.mxu0 0
  %1821 = vmatpush1.bf16.msra.mxu0 0
  %1822 = vmatprep.mubr.bf16.mxu0 0
  %1823 = vmatmul.mubr.bf16.gmra.mrb[0].mxu0 %v1779
  %v1824 = vpop.f32.mrb[0].mxu0
  %v1825 = vadd.f32 %v1753, %v1824
  %v1826 = vpop.f32.mrb[0].mxu0
  %v1827 = vpop.f32.mrb[0].mxu0
  %v1828 = vadd.f32 %v1753, %v1827
  %v1829 = vpop.f32.mrb[0].mxu0
  %1830 = vmatprep.mubr.bf16.mxu0 0
  %1831 = vmatmul.mubr.bf16.gmra.mrb[0].mxu0 %v1782
  %v1832 = vpop.f32.mrb[0].mxu0
  %v1833 = vadd.f32 %v1753, %v1832
  %v1834 = vpop.f32.mrb[0].mxu0
  %v1835 = vpop.f32.mrb[0].mxu0
  %v1836 = vadd.f32 %v1753, %v1835
  %v1837 = vpop.f32.mrb[0].mxu0
  %1838 = vmatprep.mubr.bf16.mxu0 0
  %1839 = vmatmul.mubr.bf16.gmra.mrb[0].mxu0 %v1785
  %v1840 = vpop.f32.mrb[0].mxu0
  %v1841 = vadd.f32 %v1753, %v1840
  %v1842 = vpop.f32.mrb[0].mxu0
  %v1843 = vpop.f32.mrb[0].mxu0
  %v1844 = vadd.f32 %v1753, %v1843
  %v1845 = vpop.f32.mrb[0].mxu0
  %1846 = vmatprep.mubr.bf16.mxu0 0
  %1847 = vmatmul.mubr.bf16.gmra.mrb[0].mxu0 %v1788
  %v1848 = vpop.f32.mrb[0].mxu0
  %v1849 = vadd.f32 %v1753, %v1848
  %v1850 = vpop.f32.mrb[0].mxu0
  %v1851 = vpop.f32.mrb[0].mxu0
  %v1852 = vadd.f32 %v1753, %v1851
  %v1853 = vpop.f32.mrb[0].mxu0
  %1854 = vdwg.mxu0
  %v1855 = vadd.f32 %v1555, %v1825
  %v1856 = vadd.f32 %v1556, %v1828
  %v1857 = vadd.f32 %v1557, %v1833
  %v1858 = vadd.f32 %v1558, %v1836
  %v1859 = vadd.f32 %v1559, %v1841
  %v1860 = vadd.f32 %v1560, %v1844
  %v1861 = vadd.f32 %v1561, %v1849
  %v1862 = vadd.f32 %v1562, %v1852
  %v1863 = vld [vmem:[%s6 + $0xa] sm:$0x1]
  %v1864 = vld [vmem:[%s6 + $0xb] sm:$0x1]
  %v1865 = vsel %vm382, %v1855, 0.0
  %1866 = vadd.xlane.f32.xlu0 %v1865
  %v1867 = vpop.xlane.xlu0 %1866
  %v1868 = vsel %vm382, %v1856, 0.0
  %1869 = vadd.xlane.f32.xlu0 %v1868
  %v1870 = vpop.xlane.xlu0 %1869
  %v1871 = vsel %vm382, %v1857, 0.0
  %1872 = vadd.xlane.f32.xlu0 %v1871
  %v1873 = vpop.xlane.xlu0 %1872
  %v1874 = vsel %vm382, %v1858, 0.0
  %1875 = vadd.xlane.f32.xlu0 %v1874
  %v1876 = vpop.xlane.xlu0 %1875
  %v1877 = vsel %vm382, %v1859, 0.0
  %1878 = vadd.xlane.f32.xlu0 %v1877
  %v1879 = vpop.xlane.xlu0 %1878
  %v1880 = vsel %vm382, %v1860, 0.0
  %1881 = vadd.xlane.f32.xlu0 %v1880
  %v1882 = vpop.xlane.xlu0 %1881
  %v1883 = vsel %vm382, %v1861, 0.0
  %1884 = vadd.xlane.f32.xlu0 %v1883
  %v1885 = vpop.xlane.xlu0 %1884
  %v1886 = vsel %vm382, %v1862, 0.0
  %1887 = vadd.xlane.f32.xlu0 %v1886
  %v1888 = vpop.xlane.xlu0 %1887
  %v1889 = vmul.f32 %v1867, %v407
  %v1890 = vmul.f32 %v1870, %v407
  %v1891 = vmul.f32 %v1873, %v407
  %v1892 = vmul.f32 %v1876, %v407
  %v1893 = vmul.f32 %v1879, %v407
  %v1894 = vmul.f32 %v1882, %v407
  %v1895 = vmul.f32 %v1885, %v407
  %v1896 = vmul.f32 %v1888, %v407
  %v1897 = vsub.f32 %v1855, %v1889
  %v1898 = vsub.f32 %v1856, %v1890
  %v1899 = vsub.f32 %v1857, %v1891
  %v1900 = vsub.f32 %v1858, %v1892
  %v1901 = vsub.f32 %v1859, %v1893
  %v1902 = vsub.f32 %v1860, %v1894
  %v1903 = vsub.f32 %v1861, %v1895
  %v1904 = vsub.f32 %v1862, %v1896
  %v1905 = vmul.f32 %v1897, %v1897
  %v1906 = vmul.f32 %v1898, %v1898
  %v1907 = vmul.f32 %v1899, %v1899
  %v1908 = vmul.f32 %v1900, %v1900
  %v1909 = vmul.f32 %v1901, %v1901
  %v1910 = vmul.f32 %v1902, %v1902
  %v1911 = vmul.f32 %v1903, %v1903
  %v1912 = vmul.f32 %v1904, %v1904
  %v1913 = vsel %vm382, %v1905, 0.0
  %1914 = vadd.xlane.f32.xlu0 %v1913
  %v1915 = vpop.xlane.xlu0 %1914
  %v1916 = vsel %vm382, %v1906, 0.0
  %1917 = vadd.xlane.f32.xlu0 %v1916
  %v1918 = vpop.xlane.xlu0 %1917
  %v1919 = vsel %vm382, %v1907, 0.0
  %1920 = vadd.xlane.f32.xlu0 %v1919
  %v1921 = vpop.xlane.xlu0 %1920
  %v1922 = vsel %vm382, %v1908, 0.0
  %1923 = vadd.xlane.f32.xlu0 %v1922
  %v1924 = vpop.xlane.xlu0 %1923
  %v1925 = vsel %vm382, %v1909, 0.0
  %1926 = vadd.xlane.f32.xlu0 %v1925
  %v1927 = vpop.xlane.xlu0 %1926
  %v1928 = vsel %vm382, %v1910, 0.0
  %1929 = vadd.xlane.f32.xlu0 %v1928
  %v1930 = vpop.xlane.xlu0 %1929
  %v1931 = vsel %vm382, %v1911, 0.0
  %1932 = vadd.xlane.f32.xlu0 %v1931
  %v1933 = vpop.xlane.xlu0 %1932
  %v1934 = vsel %vm382, %v1912, 0.0
  %1935 = vadd.xlane.f32.xlu0 %v1934
  %v1936 = vpop.xlane.xlu0 %1935
  %v1937 = vmul.f32 %v1915, %v407
  %v1938 = vmul.f32 %v1918, %v407
  %v1939 = vmul.f32 %v1921, %v407
  %v1940 = vmul.f32 %v1924, %v407
  %v1941 = vmul.f32 %v1927, %v407
  %v1942 = vmul.f32 %v1930, %v407
  %v1943 = vmul.f32 %v1933, %v407
  %v1944 = vmul.f32 %v1936, %v407
  %v1945 = vadd.f32 %v1937, 1e-12
  %v1946 = vadd.f32 %v1938, 1e-12
  %v1947 = vadd.f32 %v1939, 1e-12
  %v1948 = vadd.f32 %v1940, 1e-12
  %v1949 = vadd.f32 %v1941, 1e-12
  %v1950 = vadd.f32 %v1942, 1e-12
  %v1951 = vadd.f32 %v1943, 1e-12
  %v1952 = vadd.f32 %v1944, 1e-12
  %v1953 = vrsqrt.pop %v1945
  %v1954 = vrsqrt.pop %v1946
  %v1955 = vrsqrt.pop %v1947
  %v1956 = vrsqrt.pop %v1948
  %v1957 = vrsqrt.pop %v1949
  %v1958 = vrsqrt.pop %v1950
  %v1959 = vrsqrt.pop %v1951
  %v1960 = vrsqrt.pop %v1952
  %v1961 = vmul.f32 %v1897, %v1953
  %v1962 = vmul.f32 %v1898, %v1954
  %v1963 = vmul.f32 %v1899, %v1955
  %v1964 = vmul.f32 %v1900, %v1956
  %v1965 = vmul.f32 %v1901, %v1957
  %v1966 = vmul.f32 %v1902, %v1958
  %v1967 = vmul.f32 %v1903, %v1959
  %v1968 = vmul.f32 %v1904, %v1960
  %v1969 = vlaneseq
  %v1970 = vshrl.u32 %v1969, 7
  %v1971 = vsub.s32 0, %v1970
  %v1972 = vrot.slane %v1863, %v1971
  %v1973 = vmul.f32 %v1961, %v1972
  %v1974 = vmul.f32 %v1962, %v1972
  %v1975 = vmul.f32 %v1963, %v1972
  %v1976 = vmul.f32 %v1964, %v1972
  %v1977 = vmul.f32 %v1965, %v1972
  %v1978 = vmul.f32 %v1966, %v1972
  %v1979 = vmul.f32 %v1967, %v1972
  %v1980 = vmul.f32 %v1968, %v1972
  %v1981 = vlaneseq
  %v1982 = vshrl.u32 %v1981, 7
  %v1983 = vsub.s32 0, %v1982
  %v1984 = vrot.slane %v1864, %v1983
  %v1985 = vadd.f32 %v1973, %v1984
  %v1986 = vadd.f32 %v1974, %v1984
  %v1987 = vadd.f32 %v1975, %v1984
  %v1988 = vadd.f32 %v1976, %v1984
  %v1989 = vadd.f32 %v1977, %v1984
  %v1990 = vadd.f32 %v1978, %v1984
  %v1991 = vadd.f32 %v1979, %v1984
  %v1992 = vadd.f32 %v1980, %v1984
  %v1993 = vpack.c.bf16 %v1986, %v1985
  %v1994 = vpack.c.bf16 %v1988, %v1987
  %v1995 = vpack.c.bf16 %v1990, %v1989
  %v1996 = vpack.c.bf16 %v1992, %v1991
  %s1997 = scalar_lea.vmem %s4, 32
  %v1998 = vld [vmem:[%s1997] sm:$0xf]
  %v1999 = vld [vmem:[%s1997 + $0x8] sm:$0xf]
  %v2000 = vld [vmem:[%s1997 + $0x10] sm:$0xf]
  %v2001 = vld [vmem:[%s1997 + $0x18] sm:$0xf]
  %v2006 = vunpack.c.l.b16 %v1998
  %v2007 = vunpack.c.l.b16 %v1999
  %v2008 = vunpack.c.l.b16 %v2000
  %v2009 = vunpack.c.l.b16 %v2001
  %v2010 = vpack.c.b16 %v2007, %v2006
  %v2011 = vpack.c.b16 %v2009, %v2008
  %v2015 = vsel %vm382, %v1993, 0
  %v2018 = vsel %vm382, %v1994, 0
  %v2021 = vsel %vm382, %v1995, 0
  %v2024 = vsel %vm382, %v1996, 0
  %2026 = vmatprep.subr.bf16.mxu0 0
  %2027 = vmatpush1.bf16.msra.mxu0 %v2010
  %2028 = vmatprep.subr.bf16.mxu0 0
  %2029 = vmatpush1.bf16.msra.mxu0 %v2011
  %2030 = vmatprep.subr.bf16.mxu0 0
  %2031 = vmatpush1.bf16.msra.mxu0 0
  %2032 = vmatprep.subr.bf16.mxu0 0
  %2033 = vmatpush1.bf16.msra.mxu0 0
  %2034 = vmatprep.subr.bf16.mxu0 0
  %2035 = vmatpush1.bf16.msra.mxu0 0
  %2036 = vmatprep.subr.bf16.mxu0 0
  %2037 = vmatpush1.bf16.msra.mxu0 0
  %2038 = vmatprep.subr.bf16.mxu0 0
  %2039 = vmatpush1.bf16.msra.mxu0 0
  %2040 = vmatprep.subr.bf16.mxu0 0
  %2041 = vmatpush1.bf16.msra.mxu0 0
  %2042 = vmatprep.subr.bf16.mxu0 0
  %2043 = vmatpush1.bf16.msra.mxu0 0
  %2044 = vmatprep.subr.bf16.mxu0 0
  %2045 = vmatpush1.bf16.msra.mxu0 0
  %2046 = vmatprep.subr.bf16.mxu0 0
  %2047 = vmatpush1.bf16.msra.mxu0 0
  %2048 = vmatprep.subr.bf16.mxu0 0
  %2049 = vmatpush1.bf16.msra.mxu0 0
  %2050 = vmatprep.subr.bf16.mxu0 0
  %2051 = vmatpush1.bf16.msra.mxu0 0
  %2052 = vmatprep.subr.bf16.mxu0 0
  %2053 = vmatpush1.bf16.msra.mxu0 0
  %2054 = vmatprep.subr.bf16.mxu0 0
  %2055 = vmatpush1.bf16.msra.mxu0 0
  %2056 = vmatprep.subr.bf16.mxu0 0
  %2057 = vmatpush1.bf16.msra.mxu0 0
  %2058 = vmatprep.mubr.bf16.mxu0 0
  %2059 = vmatmul.mubr.bf16.gmra.mrb[0].mxu0 %v2015
  %v2060 = vpop.f32.mrb[0].mxu0
  %v2061 = vadd.f32 0.0, %v2060
  %v2062 = vpop.f32.mrb[0].mxu0
  %v2063 = vpop.f32.mrb[0].mxu0
  %v2064 = vadd.f32 0.0, %v2063
  %v2065 = vpop.f32.mrb[0].mxu0
  %2066 = vmatprep.mubr.bf16.mxu0 0
  %2067 = vmatmul.mubr.bf16.gmra.mrb[0].mxu0 %v2018
  %v2068 = vpop.f32.mrb[0].mxu0
  %v2069 = vadd.f32 0.0, %v2068
  %v2070 = vpop.f32.mrb[0].mxu0
  %v2071 = vpop.f32.mrb[0].mxu0
  %v2072 = vadd.f32 0.0, %v2071
  %v2073 = vpop.f32.mrb[0].mxu0
  %2074 = vmatprep.mubr.bf16.mxu0 0
  %2075 = vmatmul.mubr.bf16.gmra.mrb[0].mxu0 %v2021
  %v2076 = vpop.f32.mrb[0].mxu0
  %v2077 = vadd.f32 0.0, %v2076
  %v2078 = vpop.f32.mrb[0].mxu0
  %v2079 = vpop.f32.mrb[0].mxu0
  %v2080 = vadd.f32 0.0, %v2079
  %v2081 = vpop.f32.mrb[0].mxu0
  %2082 = vmatprep.mubr.bf16.mxu0 0
  %2083 = vmatmul.mubr.bf16.gmra.mrb[0].mxu0 %v2024
  %v2084 = vpop.f32.mrb[0].mxu0
  %v2085 = vadd.f32 0.0, %v2084
  %v2086 = vpop.f32.mrb[0].mxu0
  %v2087 = vpop.f32.mrb[0].mxu0
  %v2088 = vadd.f32 0.0, %v2087
  %v2089 = vpop.f32.mrb[0].mxu0
  %2090 = vdwg.mxu0
  %v2091 = vld [vmem:[%s6 + $0xc] sm:$0x1]
  %v2092 = vlaneseq
  %v2093 = vshrl.u32 %v2092, 7
  %v2094 = vsub.s32 0, %v2093
  %v2095 = vrot.slane %v2091, %v2094
  %v2096 = vadd.f32 %v2061, %v2095
  %v2097 = vadd.f32 %v2064, %v2095
  %v2098 = vadd.f32 %v2069, %v2095
  %v2099 = vadd.f32 %v2072, %v2095
  %v2100 = vadd.f32 %v2077, %v2095
  %v2101 = vadd.f32 %v2080, %v2095
  %v2102 = vadd.f32 %v2085, %v2095
  %v2103 = vadd.f32 %v2088, %v2095
  %v2104 = vld [vmem:[%s6 + $0xd] sm:$0x1]
  %v2105 = vlaneseq
  %v2106 = vshrl.u32 %v2105, 7
  %v2107 = vsub.s32 0, %v2106
  %v2108 = vrot.slane %v2104, %v2107
  %2110 = vrot.lane.b32.xlu0 %v2108, 32
  %v2111 = vpop.permute.xlu0 %2110
  %v2113 = vadd.f32 %v2061, %v2111
  %v2114 = vadd.f32 %v2064, %v2111
  %v2115 = vadd.f32 %v2069, %v2111
  %v2116 = vadd.f32 %v2072, %v2111
  %v2117 = vadd.f32 %v2077, %v2111
  %v2118 = vadd.f32 %v2080, %v2111
  %v2119 = vadd.f32 %v2085, %v2111
  %v2120 = vadd.f32 %v2088, %v2111
  %v2121 = vld [vmem:[%s6 + $0xe] sm:$0x1]
  %v2122 = vlaneseq
  %v2123 = vshrl.u32 %v2122, 7
  %v2124 = vsub.s32 0, %v2123
  %v2125 = vrot.slane %v2121, %v2124
  %2127 = vrot.lane.b32.xlu0 %v2125, 64
  %v2128 = vpop.permute.xlu0 %2127
  %v2130 = vadd.f32 %v2061, %v2128
  %v2131 = vadd.f32 %v2064, %v2128
  %v2132 = vadd.f32 %v2069, %v2128
  %v2133 = vadd.f32 %v2072, %v2128
  %v2134 = vadd.f32 %v2077, %v2128
  %v2135 = vadd.f32 %v2080, %v2128
  %v2136 = vadd.f32 %v2085, %v2128
  %v2137 = vadd.f32 %v2088, %v2128
  %v2138 = vpack.c.bf16 %v2097, %v2096
  %v2139 = vpack.c.bf16 %v2099, %v2098
  %v2140 = vpack.c.bf16 %v2101, %v2100
  %v2141 = vpack.c.bf16 %v2103, %v2102
  %v2142 = vmul.f32 %v2113, %v680
  %v2143 = vmul.f32 %v2114, %v680
  %v2144 = vmul.f32 %v2115, %v680
  %v2145 = vmul.f32 %v2116, %v680
  %v2146 = vmul.f32 %v2117, %v680
  %v2147 = vmul.f32 %v2118, %v680
  %v2148 = vmul.f32 %v2119, %v680
  %v2149 = vmul.f32 %v2120, %v680
  %v2150 = vpack.c.bf16 %v2143, %v2142
  %v2151 = vpack.c.bf16 %v2145, %v2144
  %v2152 = vpack.c.bf16 %v2147, %v2146
  %v2153 = vpack.c.bf16 %v2149, %v2148
  %2158 = vrot.lane.b32.xlu0 %v2150, 96
  %v2159 = vpop.permute.xlu0 %2158
  %2160 = vrot.lane.b32.xlu0 %v2151, 96
  %v2161 = vpop.permute.xlu0 %2160
  %2162 = vrot.lane.b32.xlu0 %v2152, 96
  %v2163 = vpop.permute.xlu0 %2162
  %2164 = vrot.lane.b32.xlu0 %v2153, 96
  %v2165 = vpop.permute.xlu0 %2164
  %v2167 = vsel %vm382, %v2138, 0
  %v2170 = vsel %vm382, %v2139, 0
  %v2173 = vsel %vm382, %v2140, 0
  %v2176 = vsel %vm382, %v2141, 0
  %v2179 = vsel %vm382, %v2159, 0
  %v2182 = vsel %vm382, %v2161, 0
  %v2185 = vsel %vm382, %v2163, 0
  %v2188 = vsel %vm382, %v2165, 0
  %2190 = vmatprep.subr.bf16.mxu0 0
  %2191 = vmatpush1.bf16.xpose.msra.mxu0 %v2179
  %2192 = vmatprep.subr.bf16.mxu0 0
  %2193 = vmatpush1.bf16.xpose.msra.mxu0 %v2182
  %2194 = vmatprep.subr.bf16.mxu0 0
  %2195 = vmatpush1.bf16.xpose.msra.mxu0 %v2185
  %2196 = vmatprep.subr.bf16.mxu0 0
  %2197 = vmatpush1.bf16.xpose.msra.mxu0 %v2188
  %2198 = vmatprep.subr.bf16.mxu0 0
  %2199 = vmatpush1.bf16.xpose.msra.mxu0 0
  %2200 = vmatprep.subr.bf16.mxu0 0
  %2201 = vmatpush1.bf16.xpose.msra.mxu0 0
  %2202 = vmatprep.subr.bf16.mxu0 0
  %2203 = vmatpush1.bf16.xpose.msra.mxu0 0
  %2204 = vmatprep.subr.bf16.mxu0 0
  %2205 = vmatpush1.bf16.xpose.msra.mxu0 0
  %2206 = vmatprep.subr.bf16.mxu0 0
  %2207 = vmatpush1.bf16.xpose.msra.mxu0 0
  %2208 = vmatprep.subr.bf16.mxu0 0
  %2209 = vmatpush1.bf16.xpose.msra.mxu0 0
  %2210 = vmatprep.subr.bf16.mxu0 0
  %2211 = vmatpush1.bf16.xpose.msra.mxu0 0
  %2212 = vmatprep.subr.bf16.mxu0 0
  %2213 = vmatpush1.bf16.xpose.msra.mxu0 0
  %2214 = vmatprep.subr.bf16.mxu0 0
  %2215 = vmatpush1.bf16.xpose.msra.mxu0 0
  %2216 = vmatprep.subr.bf16.mxu0 0
  %2217 = vmatpush1.bf16.xpose.msra.mxu0 0
  %2218 = vmatprep.subr.bf16.mxu0 0
  %2219 = vmatpush1.bf16.xpose.msra.mxu0 0
  %2220 = vmatprep.subr.bf16.mxu0 0
  %2221 = vmatpush1.bf16.xpose.msra.mxu0 0
  %2222 = vmatprep.mubr.bf16.mxu0 0
  %2223 = vmatmul.mubr.bf16.gmra.mrb[0].mxu0 %v2167
  %v2224 = vpop.f32.mrb[0].mxu0
  %v2225 = vadd.f32 0.0, %v2224
  %v2226 = vpop.f32.mrb[0].mxu0
  %v2227 = vpop.f32.mrb[0].mxu0
  %v2228 = vadd.f32 0.0, %v2227
  %v2229 = vpop.f32.mrb[0].mxu0
  %2230 = vmatprep.mubr.bf16.mxu0 0
  %2231 = vmatmul.mubr.bf16.gmra.mrb[0].mxu0 %v2170
  %v2232 = vpop.f32.mrb[0].mxu0
  %v2233 = vadd.f32 0.0, %v2232
  %v2234 = vpop.f32.mrb[0].mxu0
  %v2235 = vpop.f32.mrb[0].mxu0
  %v2236 = vadd.f32 0.0, %v2235
  %v2237 = vpop.f32.mrb[0].mxu0
  %2238 = vmatprep.mubr.bf16.mxu0 0
  %2239 = vmatmul.mubr.bf16.gmra.mrb[0].mxu0 %v2173
  %v2240 = vpop.f32.mrb[0].mxu0
  %v2241 = vadd.f32 0.0, %v2240
  %v2242 = vpop.f32.mrb[0].mxu0
  %v2243 = vpop.f32.mrb[0].mxu0
  %v2244 = vadd.f32 0.0, %v2243
  %v2245 = vpop.f32.mrb[0].mxu0
  %2246 = vmatprep.mubr.bf16.mxu0 0
  %2247 = vmatmul.mubr.bf16.gmra.mrb[0].mxu0 %v2176
  %v2248 = vpop.f32.mrb[0].mxu0
  %v2249 = vadd.f32 0.0, %v2248
  %v2250 = vpop.f32.mrb[0].mxu0
  %v2251 = vpop.f32.mrb[0].mxu0
  %v2252 = vadd.f32 0.0, %v2251
  %v2253 = vpop.f32.mrb[0].mxu0
  %2254 = vdwg.mxu0
  %v2255 = vmul.f32 %v2225, 0.25
  %v2256 = vmul.f32 %v2228, 0.25
  %v2257 = vmul.f32 %v2233, 0.25
  %v2258 = vmul.f32 %v2236, 0.25
  %v2259 = vmul.f32 %v2241, 0.25
  %v2260 = vmul.f32 %v2244, 0.25
  %v2261 = vmul.f32 %v2249, 0.25
  %v2262 = vmul.f32 %v2252, 0.25
  %v2263 = vadd.f32 %v2255, %v512
  %v2264 = vadd.f32 %v2256, %v513
  %v2265 = vadd.f32 %v2257, %v514
  %v2266 = vadd.f32 %v2258, %v515
  %v2267 = vadd.f32 %v2259, %v516
  %v2268 = vadd.f32 %v2260, %v517
  %v2269 = vadd.f32 %v2261, %v518
  %v2270 = vadd.f32 %v2262, %v519
  %v2271 = vsel %vm811, %v2263, -inf
  %2272 = vmax.xlane.f32.xlu0 %v2271
  %v2273 = vpop.xlane.xlu0 %2272
  %v2274 = vsel %vm811, %v2264, -inf
  %2275 = vmax.xlane.f32.xlu0 %v2274
  %v2276 = vpop.xlane.xlu0 %2275
  %v2277 = vsel %vm811, %v2265, -inf
  %2278 = vmax.xlane.f32.xlu0 %v2277
  %v2279 = vpop.xlane.xlu0 %2278
  %v2280 = vsel %vm811, %v2266, -inf
  %2281 = vmax.xlane.f32.xlu0 %v2280
  %v2282 = vpop.xlane.xlu0 %2281
  %v2283 = vsel %vm811, %v2267, -inf
  %2284 = vmax.xlane.f32.xlu0 %v2283
  %v2285 = vpop.xlane.xlu0 %2284
  %v2286 = vsel %vm811, %v2268, -inf
  %2287 = vmax.xlane.f32.xlu0 %v2286
  %v2288 = vpop.xlane.xlu0 %2287
  %v2289 = vsel %vm811, %v2269, -inf
  %2290 = vmax.xlane.f32.xlu0 %v2289
  %v2291 = vpop.xlane.xlu0 %2290
  %v2292 = vsel %vm811, %v2270, -inf
  %2293 = vmax.xlane.f32.xlu0 %v2292
  %v2294 = vpop.xlane.xlu0 %2293
  %v2295 = vsub.f32 %v2263, %v2273
  %v2296 = vsub.f32 %v2264, %v2276
  %v2297 = vsub.f32 %v2265, %v2279
  %v2298 = vsub.f32 %v2266, %v2282
  %v2299 = vsub.f32 %v2267, %v2285
  %v2300 = vsub.f32 %v2268, %v2288
  %v2301 = vsub.f32 %v2269, %v2291
  %v2302 = vsub.f32 %v2270, %v2294
  %v2303 = vmul.f32 %v2295, 1.442695
  %v2304 = vpow.pop %v2303
  %v2305 = vmul.f32 %v2296, 1.442695
  %v2306 = vpow.pop %v2305
  %v2307 = vmul.f32 %v2297, 1.442695
  %v2308 = vpow.pop %v2307
  %v2309 = vmul.f32 %v2298, 1.442695
  %v2310 = vpow.pop %v2309
  %v2311 = vmul.f32 %v2299, 1.442695
  %v2312 = vpow.pop %v2311
  %v2313 = vmul.f32 %v2300, 1.442695
  %v2314 = vpow.pop %v2313
  %v2315 = vmul.f32 %v2301, 1.442695
  %v2316 = vpow.pop %v2315
  %v2317 = vmul.f32 %v2302, 1.442695
  %v2318 = vpow.pop %v2317
  %v2319 = vsel %vm811, %v2304, 0.0
  %2320 = vadd.xlane.f32.xlu0 %v2319
  %v2321 = vpop.xlane.xlu0 %2320
  %v2322 = vsel %vm811, %v2306, 0.0
  %2323 = vadd.xlane.f32.xlu0 %v2322
  %v2324 = vpop.xlane.xlu0 %2323
  %v2325 = vsel %vm811, %v2308, 0.0
  %2326 = vadd.xlane.f32.xlu0 %v2325
  %v2327 = vpop.xlane.xlu0 %2326
  %v2328 = vsel %vm811, %v2310, 0.0
  %2329 = vadd.xlane.f32.xlu0 %v2328
  %v2330 = vpop.xlane.xlu0 %2329
  %v2331 = vsel %vm811, %v2312, 0.0
  %2332 = vadd.xlane.f32.xlu0 %v2331
  %v2333 = vpop.xlane.xlu0 %2332
  %v2334 = vsel %vm811, %v2314, 0.0
  %2335 = vadd.xlane.f32.xlu0 %v2334
  %v2336 = vpop.xlane.xlu0 %2335
  %v2337 = vsel %vm811, %v2316, 0.0
  %2338 = vadd.xlane.f32.xlu0 %v2337
  %v2339 = vpop.xlane.xlu0 %2338
  %v2340 = vsel %vm811, %v2318, 0.0
  %2341 = vadd.xlane.f32.xlu0 %v2340
  %v2342 = vpop.xlane.xlu0 %2341
  %v2343 = vrcp.pop %v2321
  %v2344 = vrcp.pop %v2324
  %v2345 = vrcp.pop %v2327
  %v2346 = vrcp.pop %v2330
  %v2347 = vrcp.pop %v2333
  %v2348 = vrcp.pop %v2336
  %v2349 = vrcp.pop %v2339
  %v2350 = vrcp.pop %v2342
  %v2351 = vmul.f32 %v2304, %v2343
  %v2352 = vmul.f32 %v2306, %v2344
  %v2353 = vmul.f32 %v2308, %v2345
  %v2354 = vmul.f32 %v2310, %v2346
  %v2355 = vmul.f32 %v2312, %v2347
  %v2356 = vmul.f32 %v2314, %v2348
  %v2357 = vmul.f32 %v2316, %v2349
  %v2358 = vmul.f32 %v2318, %v2350
  %v2359 = vmul.f32 %v2130, %v901
  %v2360 = vmul.f32 %v2131, %v901
  %v2361 = vmul.f32 %v2132, %v901
  %v2362 = vmul.f32 %v2133, %v901
  %v2363 = vmul.f32 %v2134, %v901
  %v2364 = vmul.f32 %v2135, %v901
  %v2365 = vmul.f32 %v2136, %v901
  %v2366 = vmul.f32 %v2137, %v901
  %v2367 = vpack.c.bf16 %v2360, %v2359
  %v2368 = vpack.c.bf16 %v2362, %v2361
  %v2369 = vpack.c.bf16 %v2364, %v2363
  %v2370 = vpack.c.bf16 %v2366, %v2365
  %v2371 = vpack.c.bf16 %v2352, %v2351
  %v2372 = vpack.c.bf16 %v2354, %v2353
  %v2373 = vpack.c.bf16 %v2356, %v2355
  %v2374 = vpack.c.bf16 %v2358, %v2357
  %v2375 = vmul.f32 %v2113, %v921
  %v2376 = vmul.f32 %v2114, %v921
  %v2377 = vmul.f32 %v2115, %v921
  %v2378 = vmul.f32 %v2116, %v921
  %v2379 = vmul.f32 %v2117, %v921
  %v2380 = vmul.f32 %v2118, %v921
  %v2381 = vmul.f32 %v2119, %v921
  %v2382 = vmul.f32 %v2120, %v921
  %v2383 = vpack.c.bf16 %v2376, %v2375
  %v2384 = vpack.c.bf16 %v2378, %v2377
  %v2385 = vpack.c.bf16 %v2380, %v2379
  %v2386 = vpack.c.bf16 %v2382, %v2381
  %2391 = vrot.lane.b32.xlu0 %v2383, 96
  %v2392 = vpop.permute.xlu0 %2391
  %2393 = vrot.lane.b32.xlu0 %v2384, 96
  %v2394 = vpop.permute.xlu0 %2393
  %2395 = vrot.lane.b32.xlu0 %v2385, 96
  %v2396 = vpop.permute.xlu0 %2395
  %2397 = vrot.lane.b32.xlu0 %v2386, 96
  %v2398 = vpop.permute.xlu0 %2397
  %v2400 = vsel %vm382, %v2392, 0
  %v2403 = vsel %vm382, %v2394, 0
  %v2406 = vsel %vm382, %v2396, 0
  %v2409 = vsel %vm382, %v2398, 0
  %2411 = vmatprep.subr.bf16.mxu0 0
  %2412 = vmatpush1.bf16.xpose.msra.mxu0 %v2400
  %2413 = vmatprep.subr.bf16.mxu0 0
  %2414 = vmatpush1.bf16.xpose.msra.mxu0 %v2403
  %2415 = vmatprep.subr.bf16.mxu0 0
  %2416 = vmatpush1.bf16.xpose.msra.mxu0 %v2406
  %2417 = vmatprep.subr.bf16.mxu0 0
  %2418 = vmatpush1.bf16.xpose.msra.mxu0 %v2409
  %2419 = vmatprep.subr.bf16.mxu0 0
  %2420 = vmatpush1.bf16.xpose.msra.mxu0 0
  %2421 = vmatprep.subr.bf16.mxu0 0
  %2422 = vmatpush1.bf16.xpose.msra.mxu0 0
  %2423 = vmatprep.subr.bf16.mxu0 0
  %2424 = vmatpush1.bf16.xpose.msra.mxu0 0
  %2425 = vmatprep.subr.bf16.mxu0 0
  %2426 = vmatpush1.bf16.xpose.msra.mxu0 0
  %2427 = vmatprep.subr.bf16.mxu0 0
  %2428 = vmatpush1.bf16.xpose.msra.mxu0 0
  %2429 = vmatprep.subr.bf16.mxu0 0
  %2430 = vmatpush1.bf16.xpose.msra.mxu0 0
  %2431 = vmatprep.subr.bf16.mxu0 0
  %2432 = vmatpush1.bf16.xpose.msra.mxu0 0
  %2433 = vmatprep.subr.bf16.mxu0 0
  %2434 = vmatpush1.bf16.xpose.msra.mxu0 0
  %2435 = vmatprep.subr.bf16.mxu0 0
  %2436 = vmatpush1.bf16.xpose.msra.mxu0 0
  %2437 = vmatprep.subr.bf16.mxu0 0
  %2438 = vmatpush1.bf16.xpose.msra.mxu0 0
  %2439 = vmatprep.subr.bf16.mxu0 0
  %2440 = vmatpush1.bf16.xpose.msra.mxu0 0
  %2441 = vmatprep.subr.bf16.mxu0 0
  %2442 = vmatpush1.bf16.xpose.msra.mxu0 0
  %2443 = vmatprep.mubr.bf16.mxu0 0
  %2444 = vmatmul.mubr.bf16.gmra.mrb[0].mxu0 %v2167
  %v2445 = vpop.f32.mrb[0].mxu0
  %v2446 = vadd.f32 0.0, %v2445
  %v2447 = vpop.f32.mrb[0].mxu0
  %v2448 = vpop.f32.mrb[0].mxu0
  %v2449 = vadd.f32 0.0, %v2448
  %v2450 = vpop.f32.mrb[0].mxu0
  %2451 = vmatprep.mubr.bf16.mxu0 0
  %2452 = vmatmul.mubr.bf16.gmra.mrb[0].mxu0 %v2170
  %v2453 = vpop.f32.mrb[0].mxu0
  %v2454 = vadd.f32 0.0, %v2453
  %v2455 = vpop.f32.mrb[0].mxu0
  %v2456 = vpop.f32.mrb[0].mxu0
  %v2457 = vadd.f32 0.0, %v2456
  %v2458 = vpop.f32.mrb[0].mxu0
  %2459 = vmatprep.mubr.bf16.mxu0 0
  %2460 = vmatmul.mubr.bf16.gmra.mrb[0].mxu0 %v2173
  %v2461 = vpop.f32.mrb[0].mxu0
  %v2462 = vadd.f32 0.0, %v2461
  %v2463 = vpop.f32.mrb[0].mxu0
  %v2464 = vpop.f32.mrb[0].mxu0
  %v2465 = vadd.f32 0.0, %v2464
  %v2466 = vpop.f32.mrb[0].mxu0
  %2467 = vmatprep.mubr.bf16.mxu0 0
  %2468 = vmatmul.mubr.bf16.gmra.mrb[0].mxu0 %v2176
  %v2469 = vpop.f32.mrb[0].mxu0
  %v2470 = vadd.f32 0.0, %v2469
  %v2471 = vpop.f32.mrb[0].mxu0
  %v2472 = vpop.f32.mrb[0].mxu0
  %v2473 = vadd.f32 0.0, %v2472
  %v2474 = vpop.f32.mrb[0].mxu0
  %2475 = vdwg.mxu0
  %v2476 = vmul.f32 %v2446, 0.25
  %v2477 = vmul.f32 %v2449, 0.25
  %v2478 = vmul.f32 %v2454, 0.25
  %v2479 = vmul.f32 %v2457, 0.25
  %v2480 = vmul.f32 %v2462, 0.25
  %v2481 = vmul.f32 %v2465, 0.25
  %v2482 = vmul.f32 %v2470, 0.25
  %v2483 = vmul.f32 %v2473, 0.25
  %v2484 = vadd.f32 %v2476, %v512
  %v2485 = vadd.f32 %v2477, %v513
  %v2486 = vadd.f32 %v2478, %v514
  %v2487 = vadd.f32 %v2479, %v515
  %v2488 = vadd.f32 %v2480, %v516
  %v2489 = vadd.f32 %v2481, %v517
  %v2490 = vadd.f32 %v2482, %v518
  %v2491 = vadd.f32 %v2483, %v519
  %v2492 = vsel %vm811, %v2484, -inf
  %2493 = vmax.xlane.f32.xlu0 %v2492
  %v2494 = vpop.xlane.xlu0 %2493
  %v2495 = vsel %vm811, %v2485, -inf
  %2496 = vmax.xlane.f32.xlu0 %v2495
  %v2497 = vpop.xlane.xlu0 %2496
  %v2498 = vsel %vm811, %v2486, -inf
  %2499 = vmax.xlane.f32.xlu0 %v2498
  %v2500 = vpop.xlane.xlu0 %2499
  %v2501 = vsel %vm811, %v2487, -inf
  %2502 = vmax.xlane.f32.xlu0 %v2501
  %v2503 = vpop.xlane.xlu0 %2502
  %v2504 = vsel %vm811, %v2488, -inf
  %2505 = vmax.xlane.f32.xlu0 %v2504
  %v2506 = vpop.xlane.xlu0 %2505
  %v2507 = vsel %vm811, %v2489, -inf
  %2508 = vmax.xlane.f32.xlu0 %v2507
  %v2509 = vpop.xlane.xlu0 %2508
  %v2510 = vsel %vm811, %v2490, -inf
  %2511 = vmax.xlane.f32.xlu0 %v2510
  %v2512 = vpop.xlane.xlu0 %2511
  %v2513 = vsel %vm811, %v2491, -inf
  %2514 = vmax.xlane.f32.xlu0 %v2513
  %v2515 = vpop.xlane.xlu0 %2514
  %v2516 = vsub.f32 %v2484, %v2494
  %v2517 = vsub.f32 %v2485, %v2497
  %v2518 = vsub.f32 %v2486, %v2500
  %v2519 = vsub.f32 %v2487, %v2503
  %v2520 = vsub.f32 %v2488, %v2506
  %v2521 = vsub.f32 %v2489, %v2509
  %v2522 = vsub.f32 %v2490, %v2512
  %v2523 = vsub.f32 %v2491, %v2515
  %v2524 = vmul.f32 %v2516, 1.442695
  %v2525 = vpow.pop %v2524
  %v2526 = vmul.f32 %v2517, 1.442695
  %v2527 = vpow.pop %v2526
  %v2528 = vmul.f32 %v2518, 1.442695
  %v2529 = vpow.pop %v2528
  %v2530 = vmul.f32 %v2519, 1.442695
  %v2531 = vpow.pop %v2530
  %v2532 = vmul.f32 %v2520, 1.442695
  %v2533 = vpow.pop %v2532
  %v2534 = vmul.f32 %v2521, 1.442695
  %v2535 = vpow.pop %v2534
  %v2536 = vmul.f32 %v2522, 1.442695
  %v2537 = vpow.pop %v2536
  %v2538 = vmul.f32 %v2523, 1.442695
  %v2539 = vpow.pop %v2538
  %v2540 = vsel %vm811, %v2525, 0.0
  %2541 = vadd.xlane.f32.xlu0 %v2540
  %v2542 = vpop.xlane.xlu0 %2541
  %v2543 = vsel %vm811, %v2527, 0.0
  %2544 = vadd.xlane.f32.xlu0 %v2543
  %v2545 = vpop.xlane.xlu0 %2544
  %v2546 = vsel %vm811, %v2529, 0.0
  %2547 = vadd.xlane.f32.xlu0 %v2546
  %v2548 = vpop.xlane.xlu0 %2547
  %v2549 = vsel %vm811, %v2531, 0.0
  %2550 = vadd.xlane.f32.xlu0 %v2549
  %v2551 = vpop.xlane.xlu0 %2550
  %v2552 = vsel %vm811, %v2533, 0.0
  %2553 = vadd.xlane.f32.xlu0 %v2552
  %v2554 = vpop.xlane.xlu0 %2553
  %v2555 = vsel %vm811, %v2535, 0.0
  %2556 = vadd.xlane.f32.xlu0 %v2555
  %v2557 = vpop.xlane.xlu0 %2556
  %v2558 = vsel %vm811, %v2537, 0.0
  %2559 = vadd.xlane.f32.xlu0 %v2558
  %v2560 = vpop.xlane.xlu0 %2559
  %v2561 = vsel %vm811, %v2539, 0.0
  %2562 = vadd.xlane.f32.xlu0 %v2561
  %v2563 = vpop.xlane.xlu0 %2562
  %v2564 = vrcp.pop %v2542
  %v2565 = vrcp.pop %v2545
  %v2566 = vrcp.pop %v2548
  %v2567 = vrcp.pop %v2551
  %v2568 = vrcp.pop %v2554
  %v2569 = vrcp.pop %v2557
  %v2570 = vrcp.pop %v2560
  %v2571 = vrcp.pop %v2563
  %v2572 = vmul.f32 %v2525, %v2564
  %v2573 = vmul.f32 %v2527, %v2565
  %v2574 = vmul.f32 %v2529, %v2566
  %v2575 = vmul.f32 %v2531, %v2567
  %v2576 = vmul.f32 %v2533, %v2568
  %v2577 = vmul.f32 %v2535, %v2569
  %v2578 = vmul.f32 %v2537, %v2570
  %v2579 = vmul.f32 %v2539, %v2571
  %v2580 = vmul.f32 %v2130, %v1129
  %v2581 = vmul.f32 %v2131, %v1129
  %v2582 = vmul.f32 %v2132, %v1129
  %v2583 = vmul.f32 %v2133, %v1129
  %v2584 = vmul.f32 %v2134, %v1129
  %v2585 = vmul.f32 %v2135, %v1129
  %v2586 = vmul.f32 %v2136, %v1129
  %v2587 = vmul.f32 %v2137, %v1129
  %v2588 = vpack.c.bf16 %v2581, %v2580
  %v2589 = vpack.c.bf16 %v2583, %v2582
  %v2590 = vpack.c.bf16 %v2585, %v2584
  %v2591 = vpack.c.bf16 %v2587, %v2586
  %v2592 = vpack.c.bf16 %v2573, %v2572
  %v2593 = vpack.c.bf16 %v2575, %v2574
  %v2594 = vpack.c.bf16 %v2577, %v2576
  %v2595 = vpack.c.bf16 %v2579, %v2578
  %2600 = vrot.lane.b32.xlu0 %v2588, 64
  %v2601 = vpop.permute.xlu0 %2600
  %2602 = vrot.lane.b32.xlu0 %v2589, 64
  %v2603 = vpop.permute.xlu0 %2602
  %2604 = vrot.lane.b32.xlu0 %v2590, 64
  %v2605 = vpop.permute.xlu0 %2604
  %2606 = vrot.lane.b32.xlu0 %v2591, 64
  %v2607 = vpop.permute.xlu0 %2606
  %v2613 = vsel %vm811, %v2592, 0
  %v2616 = vsel %vm811, %v2593, 0
  %v2619 = vsel %vm811, %v2594, 0
  %v2622 = vsel %vm811, %v2595, 0
  %2624 = vmatprep.subr.bf16.mxu0 0
  %2625 = vmatpush1.bf16.msra.mxu0 %v2601
  %2626 = vmatprep.subr.bf16.mxu0 0
  %2627 = vmatpush1.bf16.msra.mxu0 %v2603
  %2628 = vmatprep.subr.bf16.mxu0 0
  %2629 = vmatpush1.bf16.msra.mxu0 %v2605
  %2630 = vmatprep.subr.bf16.mxu0 0
  %2631 = vmatpush1.bf16.msra.mxu0 %v2607
  %2632 = vmatprep.subr.bf16.mxu0 0
  %2633 = vmatpush1.bf16.msra.mxu0 0
  %2634 = vmatprep.subr.bf16.mxu0 0
  %2635 = vmatpush1.bf16.msra.mxu0 0
  %2636 = vmatprep.subr.bf16.mxu0 0
  %2637 = vmatpush1.bf16.msra.mxu0 0
  %2638 = vmatprep.subr.bf16.mxu0 0
  %2639 = vmatpush1.bf16.msra.mxu0 0
  %2640 = vmatprep.subr.bf16.mxu0 0
  %2641 = vmatpush1.bf16.msra.mxu0 0
  %2642 = vmatprep.subr.bf16.mxu0 0
  %2643 = vmatpush1.bf16.msra.mxu0 0
  %2644 = vmatprep.subr.bf16.mxu0 0
  %2645 = vmatpush1.bf16.msra.mxu0 0
  %2646 = vmatprep.subr.bf16.mxu0 0
  %2647 = vmatpush1.bf16.msra.mxu0 0
  %2648 = vmatprep.subr.bf16.mxu0 0
  %2649 = vmatpush1.bf16.msra.mxu0 0
  %2650 = vmatprep.subr.bf16.mxu0 0
  %2651 = vmatpush1.bf16.msra.mxu0 0
  %2652 = vmatprep.subr.bf16.mxu0 0
  %2653 = vmatpush1.bf16.msra.mxu0 0
  %2654 = vmatprep.subr.bf16.mxu0 0
  %2655 = vmatpush1.bf16.msra.mxu0 0
  %2656 = vmatprep.mubr.bf16.mxu0 0
  %2657 = vmatmul.mubr.bf16.gmra.mrb[0].mxu0 %v2613
  %v2658 = vpop.f32.mrb[0].mxu0
  %v2659 = vadd.f32 0.0, %v2658
  %v2660 = vpop.f32.mrb[0].mxu0
  %v2661 = vpop.f32.mrb[0].mxu0
  %v2662 = vadd.f32 0.0, %v2661
  %v2663 = vpop.f32.mrb[0].mxu0
  %2664 = vmatprep.mubr.bf16.mxu0 0
  %2665 = vmatmul.mubr.bf16.gmra.mrb[0].mxu0 %v2616
  %v2666 = vpop.f32.mrb[0].mxu0
  %v2667 = vadd.f32 0.0, %v2666
  %v2668 = vpop.f32.mrb[0].mxu0
  %v2669 = vpop.f32.mrb[0].mxu0
  %v2670 = vadd.f32 0.0, %v2669
  %v2671 = vpop.f32.mrb[0].mxu0
  %2672 = vmatprep.mubr.bf16.mxu0 0
  %2673 = vmatmul.mubr.bf16.gmra.mrb[0].mxu0 %v2619
  %v2674 = vpop.f32.mrb[0].mxu0
  %v2675 = vadd.f32 0.0, %v2674
  %v2676 = vpop.f32.mrb[0].mxu0
  %v2677 = vpop.f32.mrb[0].mxu0
  %v2678 = vadd.f32 0.0, %v2677
  %v2679 = vpop.f32.mrb[0].mxu0
  %2680 = vmatprep.mubr.bf16.mxu0 0
  %2681 = vmatmul.mubr.bf16.gmra.mrb[0].mxu0 %v2622
  %v2682 = vpop.f32.mrb[0].mxu0
  %v2683 = vadd.f32 0.0, %v2682
  %v2684 = vpop.f32.mrb[0].mxu0
  %v2685 = vpop.f32.mrb[0].mxu0
  %v2686 = vadd.f32 0.0, %v2685
  %v2687 = vpop.f32.mrb[0].mxu0
  %2688 = vdwg.mxu0
  %2693 = vrot.lane.b32.xlu0 %v2367, 64
  %v2694 = vpop.permute.xlu0 %2693
  %2695 = vrot.lane.b32.xlu0 %v2368, 64
  %v2696 = vpop.permute.xlu0 %2695
  %2697 = vrot.lane.b32.xlu0 %v2369, 64
  %v2698 = vpop.permute.xlu0 %2697
  %2699 = vrot.lane.b32.xlu0 %v2370, 64
  %v2700 = vpop.permute.xlu0 %2699
  %v2706 = vsel %vm811, %v2371, 0
  %v2709 = vsel %vm811, %v2372, 0
  %v2712 = vsel %vm811, %v2373, 0
  %v2715 = vsel %vm811, %v2374, 0
  %2717 = vmatprep.subr.bf16.mxu0 0
  %2718 = vmatpush1.bf16.msra.mxu0 %v2694
  %2719 = vmatprep.subr.bf16.mxu0 0
  %2720 = vmatpush1.bf16.msra.mxu0 %v2696
  %2721 = vmatprep.subr.bf16.mxu0 0
  %2722 = vmatpush1.bf16.msra.mxu0 %v2698
  %2723 = vmatprep.subr.bf16.mxu0 0
  %2724 = vmatpush1.bf16.msra.mxu0 %v2700
  %2725 = vmatprep.subr.bf16.mxu0 0
  %2726 = vmatpush1.bf16.msra.mxu0 0
  %2727 = vmatprep.subr.bf16.mxu0 0
  %2728 = vmatpush1.bf16.msra.mxu0 0
  %2729 = vmatprep.subr.bf16.mxu0 0
  %2730 = vmatpush1.bf16.msra.mxu0 0
  %2731 = vmatprep.subr.bf16.mxu0 0
  %2732 = vmatpush1.bf16.msra.mxu0 0
  %2733 = vmatprep.subr.bf16.mxu0 0
  %2734 = vmatpush1.bf16.msra.mxu0 0
  %2735 = vmatprep.subr.bf16.mxu0 0
  %2736 = vmatpush1.bf16.msra.mxu0 0
  %2737 = vmatprep.subr.bf16.mxu0 0
  %2738 = vmatpush1.bf16.msra.mxu0 0
  %2739 = vmatprep.subr.bf16.mxu0 0
  %2740 = vmatpush1.bf16.msra.mxu0 0
  %2741 = vmatprep.subr.bf16.mxu0 0
  %2742 = vmatpush1.bf16.msra.mxu0 0
  %2743 = vmatprep.subr.bf16.mxu0 0
  %2744 = vmatpush1.bf16.msra.mxu0 0
  %2745 = vmatprep.subr.bf16.mxu0 0
  %2746 = vmatpush1.bf16.msra.mxu0 0
  %2747 = vmatprep.subr.bf16.mxu0 0
  %2748 = vmatpush1.bf16.msra.mxu0 0
  %2749 = vmatprep.mubr.bf16.mxu0 0
  %2750 = vmatmul.mubr.bf16.gmra.mrb[0].mxu0 %v2706
  %v2751 = vpop.f32.mrb[0].mxu0
  %v2752 = vadd.f32 %v2659, %v2751
  %v2753 = vpop.f32.mrb[0].mxu0
  %v2754 = vpop.f32.mrb[0].mxu0
  %v2755 = vadd.f32 %v2662, %v2754
  %v2756 = vpop.f32.mrb[0].mxu0
  %2757 = vmatprep.mubr.bf16.mxu0 0
  %2758 = vmatmul.mubr.bf16.gmra.mrb[0].mxu0 %v2709
  %v2759 = vpop.f32.mrb[0].mxu0
  %v2760 = vadd.f32 %v2667, %v2759
  %v2761 = vpop.f32.mrb[0].mxu0
  %v2762 = vpop.f32.mrb[0].mxu0
  %v2763 = vadd.f32 %v2670, %v2762
  %v2764 = vpop.f32.mrb[0].mxu0
  %2765 = vmatprep.mubr.bf16.mxu0 0
  %2766 = vmatmul.mubr.bf16.gmra.mrb[0].mxu0 %v2712
  %v2767 = vpop.f32.mrb[0].mxu0
  %v2768 = vadd.f32 %v2675, %v2767
  %v2769 = vpop.f32.mrb[0].mxu0
  %v2770 = vpop.f32.mrb[0].mxu0
  %v2771 = vadd.f32 %v2678, %v2770
  %v2772 = vpop.f32.mrb[0].mxu0
  %2773 = vmatprep.mubr.bf16.mxu0 0
  %2774 = vmatmul.mubr.bf16.gmra.mrb[0].mxu0 %v2715
  %v2775 = vpop.f32.mrb[0].mxu0
  %v2776 = vadd.f32 %v2683, %v2775
  %v2777 = vpop.f32.mrb[0].mxu0
  %v2778 = vpop.f32.mrb[0].mxu0
  %v2779 = vadd.f32 %v2686, %v2778
  %v2780 = vpop.f32.mrb[0].mxu0
  %2781 = vdwg.mxu0
  %v2782 = vpack.c.bf16 %v2755, %v2752
  %v2783 = vpack.c.bf16 %v2763, %v2760
  %v2784 = vpack.c.bf16 %v2771, %v2768
  %v2785 = vpack.c.bf16 %v2779, %v2776
  %v2786 = vld [vmem:[%s6 + $0xf] sm:$0x1]
  %v2787 = vlaneseq
  %v2788 = vshrl.u32 %v2787, 7
  %v2789 = vsub.s32 0, %v2788
  %v2790 = vrot.slane %v2786, %v2789
  %2791 = vrot.lane.b32.xlu0 %v2010, 32
  %v2792 = vpop.permute.xlu0 %2791
  %2793 = vrot.lane.b32.xlu0 %v2011, 32
  %v2794 = vpop.permute.xlu0 %2793
  %v2798 = vsel %vm382, %v2782, 0
  %v2801 = vsel %vm382, %v2783, 0
  %v2804 = vsel %vm382, %v2784, 0
  %v2807 = vsel %vm382, %v2785, 0
  %2809 = vmatprep.subr.bf16.mxu0 0
  %2810 = vmatpush1.bf16.msra.mxu0 %v2792
  %2811 = vmatprep.subr.bf16.mxu0 0
  %2812 = vmatpush1.bf16.msra.mxu0 %v2794
  %2813 = vmatprep.subr.bf16.mxu0 0
  %2814 = vmatpush1.bf16.msra.mxu0 0
  %2815 = vmatprep.subr.bf16.mxu0 0
  %2816 = vmatpush1.bf16.msra.mxu0 0
  %2817 = vmatprep.subr.bf16.mxu0 0
  %2818 = vmatpush1.bf16.msra.mxu0 0
  %2819 = vmatprep.subr.bf16.mxu0 0
  %2820 = vmatpush1.bf16.msra.mxu0 0
  %2821 = vmatprep.subr.bf16.mxu0 0
  %2822 = vmatpush1.bf16.msra.mxu0 0
  %2823 = vmatprep.subr.bf16.mxu0 0
  %2824 = vmatpush1.bf16.msra.mxu0 0
  %2825 = vmatprep.subr.bf16.mxu0 0
  %2826 = vmatpush1.bf16.msra.mxu0 0
  %2827 = vmatprep.subr.bf16.mxu0 0
  %2828 = vmatpush1.bf16.msra.mxu0 0
  %2829 = vmatprep.subr.bf16.mxu0 0
  %2830 = vmatpush1.bf16.msra.mxu0 0
  %2831 = vmatprep.subr.bf16.mxu0 0
  %2832 = vmatpush1.bf16.msra.mxu0 0
  %2833 = vmatprep.subr.bf16.mxu0 0
  %2834 = vmatpush1.bf16.msra.mxu0 0
  %2835 = vmatprep.subr.bf16.mxu0 0
  %2836 = vmatpush1.bf16.msra.mxu0 0
  %2837 = vmatprep.subr.bf16.mxu0 0
  %2838 = vmatpush1.bf16.msra.mxu0 0
  %2839 = vmatprep.subr.bf16.mxu0 0
  %2840 = vmatpush1.bf16.msra.mxu0 0
  %2841 = vmatprep.mubr.bf16.mxu0 0
  %2842 = vmatmul.mubr.bf16.gmra.mrb[0].mxu0 %v2798
  %v2843 = vpop.f32.mrb[0].mxu0
  %v2844 = vadd.f32 %v2790, %v2843
  %v2845 = vpop.f32.mrb[0].mxu0
  %v2846 = vpop.f32.mrb[0].mxu0
  %v2847 = vadd.f32 %v2790, %v2846
  %v2848 = vpop.f32.mrb[0].mxu0
  %2849 = vmatprep.mubr.bf16.mxu0 0
  %2850 = vmatmul.mubr.bf16.gmra.mrb[0].mxu0 %v2801
  %v2851 = vpop.f32.mrb[0].mxu0
  %v2852 = vadd.f32 %v2790, %v2851
  %v2853 = vpop.f32.mrb[0].mxu0
  %v2854 = vpop.f32.mrb[0].mxu0
  %v2855 = vadd.f32 %v2790, %v2854
  %v2856 = vpop.f32.mrb[0].mxu0
  %2857 = vmatprep.mubr.bf16.mxu0 0
  %2858 = vmatmul.mubr.bf16.gmra.mrb[0].mxu0 %v2804
  %v2859 = vpop.f32.mrb[0].mxu0
  %v2860 = vadd.f32 %v2790, %v2859
  %v2861 = vpop.f32.mrb[0].mxu0
  %v2862 = vpop.f32.mrb[0].mxu0
  %v2863 = vadd.f32 %v2790, %v2862
  %v2864 = vpop.f32.mrb[0].mxu0
  %2865 = vmatprep.mubr.bf16.mxu0 0
  %2866 = vmatmul.mubr.bf16.gmra.mrb[0].mxu0 %v2807
  %v2867 = vpop.f32.mrb[0].mxu0
  %v2868 = vadd.f32 %v2790, %v2867
  %v2869 = vpop.f32.mrb[0].mxu0
  %v2870 = vpop.f32.mrb[0].mxu0
  %v2871 = vadd.f32 %v2790, %v2870
  %v2872 = vpop.f32.mrb[0].mxu0
  %2873 = vdwg.mxu0
  %v2874 = vadd.f32 %v1985, %v2844
  %v2875 = vadd.f32 %v1986, %v2847
  %v2876 = vadd.f32 %v1987, %v2852
  %v2877 = vadd.f32 %v1988, %v2855
  %v2878 = vadd.f32 %v1989, %v2860
  %v2879 = vadd.f32 %v1990, %v2863
  %v2880 = vadd.f32 %v1991, %v2868
  %v2881 = vadd.f32 %v1992, %v2871
  %v2882 = vld [vmem:[%s6 + $0x10] sm:$0x1]
  %v2883 = vld [vmem:[%s6 + $0x11] sm:$0x1]
  %v2884 = vsel %vm382, %v2874, 0.0
  %2885 = vadd.xlane.f32.xlu0 %v2884
  %v2886 = vpop.xlane.xlu0 %2885
  %v2887 = vsel %vm382, %v2875, 0.0
  %2888 = vadd.xlane.f32.xlu0 %v2887
  %v2889 = vpop.xlane.xlu0 %2888
  %v2890 = vsel %vm382, %v2876, 0.0
  %2891 = vadd.xlane.f32.xlu0 %v2890
  %v2892 = vpop.xlane.xlu0 %2891
  %v2893 = vsel %vm382, %v2877, 0.0
  %2894 = vadd.xlane.f32.xlu0 %v2893
  %v2895 = vpop.xlane.xlu0 %2894
  %v2896 = vsel %vm382, %v2878, 0.0
  %2897 = vadd.xlane.f32.xlu0 %v2896
  %v2898 = vpop.xlane.xlu0 %2897
  %v2899 = vsel %vm382, %v2879, 0.0
  %2900 = vadd.xlane.f32.xlu0 %v2899
  %v2901 = vpop.xlane.xlu0 %2900
  %v2902 = vsel %vm382, %v2880, 0.0
  %2903 = vadd.xlane.f32.xlu0 %v2902
  %v2904 = vpop.xlane.xlu0 %2903
  %v2905 = vsel %vm382, %v2881, 0.0
  %2906 = vadd.xlane.f32.xlu0 %v2905
  %v2907 = vpop.xlane.xlu0 %2906
  %v2908 = vmul.f32 %v2886, %v407
  %v2909 = vmul.f32 %v2889, %v407
  %v2910 = vmul.f32 %v2892, %v407
  %v2911 = vmul.f32 %v2895, %v407
  %v2912 = vmul.f32 %v2898, %v407
  %v2913 = vmul.f32 %v2901, %v407
  %v2914 = vmul.f32 %v2904, %v407
  %v2915 = vmul.f32 %v2907, %v407
  %v2916 = vsub.f32 %v2874, %v2908
  %v2917 = vsub.f32 %v2875, %v2909
  %v2918 = vsub.f32 %v2876, %v2910
  %v2919 = vsub.f32 %v2877, %v2911
  %v2920 = vsub.f32 %v2878, %v2912
  %v2921 = vsub.f32 %v2879, %v2913
  %v2922 = vsub.f32 %v2880, %v2914
  %v2923 = vsub.f32 %v2881, %v2915
  %v2924 = vmul.f32 %v2916, %v2916
  %v2925 = vmul.f32 %v2917, %v2917
  %v2926 = vmul.f32 %v2918, %v2918
  %v2927 = vmul.f32 %v2919, %v2919
  %v2928 = vmul.f32 %v2920, %v2920
  %v2929 = vmul.f32 %v2921, %v2921
  %v2930 = vmul.f32 %v2922, %v2922
  %v2931 = vmul.f32 %v2923, %v2923
  %v2932 = vsel %vm382, %v2924, 0.0
  %2933 = vadd.xlane.f32.xlu0 %v2932
  %v2934 = vpop.xlane.xlu0 %2933
  %v2935 = vsel %vm382, %v2925, 0.0
  %2936 = vadd.xlane.f32.xlu0 %v2935
  %v2937 = vpop.xlane.xlu0 %2936
  %v2938 = vsel %vm382, %v2926, 0.0
  %2939 = vadd.xlane.f32.xlu0 %v2938
  %v2940 = vpop.xlane.xlu0 %2939
  %v2941 = vsel %vm382, %v2927, 0.0
  %2942 = vadd.xlane.f32.xlu0 %v2941
  %v2943 = vpop.xlane.xlu0 %2942
  %v2944 = vsel %vm382, %v2928, 0.0
  %2945 = vadd.xlane.f32.xlu0 %v2944
  %v2946 = vpop.xlane.xlu0 %2945
  %v2947 = vsel %vm382, %v2929, 0.0
  %2948 = vadd.xlane.f32.xlu0 %v2947
  %v2949 = vpop.xlane.xlu0 %2948
  %v2950 = vsel %vm382, %v2930, 0.0
  %2951 = vadd.xlane.f32.xlu0 %v2950
  %v2952 = vpop.xlane.xlu0 %2951
  %v2953 = vsel %vm382, %v2931, 0.0
  %2954 = vadd.xlane.f32.xlu0 %v2953
  %v2955 = vpop.xlane.xlu0 %2954
  %v2956 = vmul.f32 %v2934, %v407
  %v2957 = vmul.f32 %v2937, %v407
  %v2958 = vmul.f32 %v2940, %v407
  %v2959 = vmul.f32 %v2943, %v407
  %v2960 = vmul.f32 %v2946, %v407
  %v2961 = vmul.f32 %v2949, %v407
  %v2962 = vmul.f32 %v2952, %v407
  %v2963 = vmul.f32 %v2955, %v407
  %v2964 = vadd.f32 %v2956, 1e-12
  %v2965 = vadd.f32 %v2957, 1e-12
  %v2966 = vadd.f32 %v2958, 1e-12
  %v2967 = vadd.f32 %v2959, 1e-12
  %v2968 = vadd.f32 %v2960, 1e-12
  %v2969 = vadd.f32 %v2961, 1e-12
  %v2970 = vadd.f32 %v2962, 1e-12
  %v2971 = vadd.f32 %v2963, 1e-12
  %v2972 = vrsqrt.pop %v2964
  %v2973 = vrsqrt.pop %v2965
  %v2974 = vrsqrt.pop %v2966
  %v2975 = vrsqrt.pop %v2967
  %v2976 = vrsqrt.pop %v2968
  %v2977 = vrsqrt.pop %v2969
  %v2978 = vrsqrt.pop %v2970
  %v2979 = vrsqrt.pop %v2971
  %v2980 = vmul.f32 %v2916, %v2972
  %v2981 = vmul.f32 %v2917, %v2973
  %v2982 = vmul.f32 %v2918, %v2974
  %v2983 = vmul.f32 %v2919, %v2975
  %v2984 = vmul.f32 %v2920, %v2976
  %v2985 = vmul.f32 %v2921, %v2977
  %v2986 = vmul.f32 %v2922, %v2978
  %v2987 = vmul.f32 %v2923, %v2979
  %v2988 = vlaneseq
  %v2989 = vshrl.u32 %v2988, 7
  %v2990 = vsub.s32 0, %v2989
  %v2991 = vrot.slane %v2882, %v2990
  %v2992 = vmul.f32 %v2980, %v2991
  %v2993 = vmul.f32 %v2981, %v2991
  %v2994 = vmul.f32 %v2982, %v2991
  %v2995 = vmul.f32 %v2983, %v2991
  %v2996 = vmul.f32 %v2984, %v2991
  %v2997 = vmul.f32 %v2985, %v2991
  %v2998 = vmul.f32 %v2986, %v2991
  %v2999 = vmul.f32 %v2987, %v2991
  %v3000 = vlaneseq
  %v3001 = vshrl.u32 %v3000, 7
  %v3002 = vsub.s32 0, %v3001
  %v3003 = vrot.slane %v2883, %v3002
  %v3004 = vadd.f32 %v2992, %v3003
  %v3005 = vadd.f32 %v2993, %v3003
  %v3006 = vadd.f32 %v2994, %v3003
  %v3007 = vadd.f32 %v2995, %v3003
  %v3008 = vadd.f32 %v2996, %v3003
  %v3009 = vadd.f32 %v2997, %v3003
  %v3010 = vadd.f32 %v2998, %v3003
  %v3011 = vadd.f32 %v2999, %v3003
  %v3012 = vpack.c.bf16 %v3005, %v3004
  %v3013 = vpack.c.bf16 %v3007, %v3006
  %v3014 = vpack.c.bf16 %v3009, %v3008
  %v3015 = vpack.c.bf16 %v3011, %v3010
  %v3016 = vld [vmem:[%s1997 + $0x4] sm:$0xf]
  %v3017 = vld [vmem:[%s1997 + $0xc] sm:$0xf]
  %v3018 = vld [vmem:[%s1997 + $0x14] sm:$0xf]
  %v3019 = vld [vmem:[%s1997 + $0x1c] sm:$0xf]
  %v3020 = vld [vmem:[%s6 + $0x12] sm:$0x1]
  %v3021 = vlaneseq
  %v3022 = vshrl.u32 %v3021, 7
  %v3023 = vsub.s32 0, %v3022
  %v3024 = vrot.slane %v3020, %v3023
  %v3029 = vunpack.c.l.b16 %v3016
  %v3030 = vunpack.c.l.b16 %v3017
  %v3031 = vunpack.c.l.b16 %v3018
  %v3032 = vunpack.c.l.b16 %v3019
  %v3033 = vpack.c.b16 %v3030, %v3029
  %v3034 = vpack.c.b16 %v3032, %v3031
  %v3038 = vsel %vm382, %v3012, 0
  %v3041 = vsel %vm382, %v3013, 0
  %v3044 = vsel %vm382, %v3014, 0
  %v3047 = vsel %vm382, %v3015, 0
  %3049 = vmatprep.subr.bf16.mxu0 0
  %3050 = vmatpush1.bf16.msra.mxu0 %v3033
  %3051 = vmatprep.subr.bf16.mxu0 0
  %3052 = vmatpush1.bf16.msra.mxu0 %v3034
  %3053 = vmatprep.subr.bf16.mxu0 0
  %3054 = vmatpush1.bf16.msra.mxu0 0
  %3055 = vmatprep.subr.bf16.mxu0 0
  %3056 = vmatpush1.bf16.msra.mxu0 0
  %3057 = vmatprep.subr.bf16.mxu0 0
  %3058 = vmatpush1.bf16.msra.mxu0 0
  %3059 = vmatprep.subr.bf16.mxu0 0
  %3060 = vmatpush1.bf16.msra.mxu0 0
  %3061 = vmatprep.subr.bf16.mxu0 0
  %3062 = vmatpush1.bf16.msra.mxu0 0
  %3063 = vmatprep.subr.bf16.mxu0 0
  %3064 = vmatpush1.bf16.msra.mxu0 0
  %3065 = vmatprep.subr.bf16.mxu0 0
  %3066 = vmatpush1.bf16.msra.mxu0 0
  %3067 = vmatprep.subr.bf16.mxu0 0
  %3068 = vmatpush1.bf16.msra.mxu0 0
  %3069 = vmatprep.subr.bf16.mxu0 0
  %3070 = vmatpush1.bf16.msra.mxu0 0
  %3071 = vmatprep.subr.bf16.mxu0 0
  %3072 = vmatpush1.bf16.msra.mxu0 0
  %3073 = vmatprep.subr.bf16.mxu0 0
  %3074 = vmatpush1.bf16.msra.mxu0 0
  %3075 = vmatprep.subr.bf16.mxu0 0
  %3076 = vmatpush1.bf16.msra.mxu0 0
  %3077 = vmatprep.subr.bf16.mxu0 0
  %3078 = vmatpush1.bf16.msra.mxu0 0
  %3079 = vmatprep.subr.bf16.mxu0 0
  %3080 = vmatpush1.bf16.msra.mxu0 0
  %3081 = vmatprep.mubr.bf16.mxu0 0
  %3082 = vmatmul.mubr.bf16.gmra.mrb[0].mxu0 %v3038
  %v3083 = vpop.f32.mrb[0].mxu0
  %v3084 = vadd.f32 %v3024, %v3083
  %v3085 = vpop.f32.mrb[0].mxu0
  %v3086 = vpop.f32.mrb[0].mxu0
  %v3087 = vadd.f32 %v3024, %v3086
  %v3088 = vpop.f32.mrb[0].mxu0
  %3089 = vmatprep.mubr.bf16.mxu0 0
  %3090 = vmatmul.mubr.bf16.gmra.mrb[0].mxu0 %v3041
  %v3091 = vpop.f32.mrb[0].mxu0
  %v3092 = vadd.f32 %v3024, %v3091
  %v3093 = vpop.f32.mrb[0].mxu0
  %v3094 = vpop.f32.mrb[0].mxu0
  %v3095 = vadd.f32 %v3024, %v3094
  %v3096 = vpop.f32.mrb[0].mxu0
  %3097 = vmatprep.mubr.bf16.mxu0 0
  %3098 = vmatmul.mubr.bf16.gmra.mrb[0].mxu0 %v3044
  %v3099 = vpop.f32.mrb[0].mxu0
  %v3100 = vadd.f32 %v3024, %v3099
  %v3101 = vpop.f32.mrb[0].mxu0
  %v3102 = vpop.f32.mrb[0].mxu0
  %v3103 = vadd.f32 %v3024, %v3102
  %v3104 = vpop.f32.mrb[0].mxu0
  %3105 = vmatprep.mubr.bf16.mxu0 0
  %3106 = vmatmul.mubr.bf16.gmra.mrb[0].mxu0 %v3047
  %v3107 = vpop.f32.mrb[0].mxu0
  %v3108 = vadd.f32 %v3024, %v3107
  %v3109 = vpop.f32.mrb[0].mxu0
  %v3110 = vpop.f32.mrb[0].mxu0
  %v3111 = vadd.f32 %v3024, %v3110
  %v3112 = vpop.f32.mrb[0].mxu0
  %3113 = vdwg.mxu0
  %v3114 = vmul.f32 %v3084, 0.5
  %v3115 = vmul.f32 %v3087, 0.5
  %v3116 = vmul.f32 %v3092, 0.5
  %v3117 = vmul.f32 %v3095, 0.5
  %v3118 = vmul.f32 %v3100, 0.5
  %v3119 = vmul.f32 %v3103, 0.5
  %v3120 = vmul.f32 %v3108, 0.5
  %v3121 = vmul.f32 %v3111, 0.5
  %v3122 = vmul.f32 %v3084, 0.044715
  %v3123 = vmul.f32 %v3087, 0.044715
  %v3124 = vmul.f32 %v3092, 0.044715
  %v3125 = vmul.f32 %v3095, 0.044715
  %v3126 = vmul.f32 %v3100, 0.044715
  %v3127 = vmul.f32 %v3103, 0.044715
  %v3128 = vmul.f32 %v3108, 0.044715
  %v3129 = vmul.f32 %v3111, 0.044715
  %v3130 = vmul.f32 %v3122, %v3084
  %v3131 = vmul.f32 %v3123, %v3087
  %v3132 = vmul.f32 %v3124, %v3092
  %v3133 = vmul.f32 %v3125, %v3095
  %v3134 = vmul.f32 %v3126, %v3100
  %v3135 = vmul.f32 %v3127, %v3103
  %v3136 = vmul.f32 %v3128, %v3108
  %v3137 = vmul.f32 %v3129, %v3111
  %v3138 = vmul.f32 %v3130, %v3084
  %v3139 = vmul.f32 %v3131, %v3087
  %v3140 = vmul.f32 %v3132, %v3092
  %v3141 = vmul.f32 %v3133, %v3095
  %v3142 = vmul.f32 %v3134, %v3100
  %v3143 = vmul.f32 %v3135, %v3103
  %v3144 = vmul.f32 %v3136, %v3108
  %v3145 = vmul.f32 %v3137, %v3111
  %v3146 = vadd.f32 %v3084, %v3138
  %v3147 = vadd.f32 %v3087, %v3139
  %v3148 = vadd.f32 %v3092, %v3140
  %v3149 = vadd.f32 %v3095, %v3141
  %v3150 = vadd.f32 %v3100, %v3142
  %v3151 = vadd.f32 %v3103, %v3143
  %v3152 = vadd.f32 %v3108, %v3144
  %v3153 = vadd.f32 %v3111, %v3145
  %v3154 = vmul.f32 %v3146, 0.7978846
  %v3155 = vmul.f32 %v3147, 0.7978846
  %v3156 = vmul.f32 %v3148, 0.7978846
  %v3157 = vmul.f32 %v3149, 0.7978846
  %v3158 = vmul.f32 %v3150, 0.7978846
  %v3159 = vmul.f32 %v3151, 0.7978846
  %v3160 = vmul.f32 %v3152, 0.7978846
  %v3161 = vmul.f32 %v3153, 0.7978846
  %v3162 = vtanh.pop %v3154
  %v3163 = vtanh.pop %v3155
  %v3164 = vtanh.pop %v3156
  %v3165 = vtanh.pop %v3157
  %v3166 = vtanh.pop %v3158
  %v3167 = vtanh.pop %v3159
  %v3168 = vtanh.pop %v3160
  %v3169 = vtanh.pop %v3161
  %v3170 = vadd.f32 %v3162, 1.0
  %v3171 = vadd.f32 %v3163, 1.0
  %v3172 = vadd.f32 %v3164, 1.0
  %v3173 = vadd.f32 %v3165, 1.0
  %v3174 = vadd.f32 %v3166, 1.0
  %v3175 = vadd.f32 %v3167, 1.0
  %v3176 = vadd.f32 %v3168, 1.0
  %v3177 = vadd.f32 %v3169, 1.0
  %v3178 = vmul.f32 %v3114, %v3170
  %v3179 = vmul.f32 %v3115, %v3171
  %v3180 = vmul.f32 %v3116, %v3172
  %v3181 = vmul.f32 %v3117, %v3173
  %v3182 = vmul.f32 %v3118, %v3174
  %v3183 = vmul.f32 %v3119, %v3175
  %v3184 = vmul.f32 %v3120, %v3176
  %v3185 = vmul.f32 %v3121, %v3177
  %v3186 = vpack.c.bf16 %v3179, %v3178
  %v3187 = vpack.c.bf16 %v3181, %v3180
  %v3188 = vpack.c.bf16 %v3183, %v3182
  %v3189 = vpack.c.bf16 %v3185, %v3184
  %s3190 = scalar_lea.vmem %s5, 32
  %v3191 = vld [vmem:[%s3190] sm:$0xf]
  %v3192 = vld [vmem:[%s3190 + $0x4] sm:$0xf]
  %v3193 = vld [vmem:[%s3190 + $0x8] sm:$0xf]
  %v3194 = vld [vmem:[%s3190 + $0xc] sm:$0xf]
  %v3195 = vld [vmem:[%s3190 + $0x10] sm:$0xf]
  %v3196 = vld [vmem:[%s3190 + $0x14] sm:$0xf]
  %v3197 = vld [vmem:[%s3190 + $0x18] sm:$0xf]
  %v3198 = vld [vmem:[%s3190 + $0x1c] sm:$0xf]
  %v3199 = vld [vmem:[%s6 + $0x13] sm:$0x1]
  %v3200 = vlaneseq
  %v3201 = vshrl.u32 %v3200, 7
  %v3202 = vsub.s32 0, %v3201
  %v3203 = vrot.slane %v3199, %v3202
  %v3212 = vunpack.c.l.b16 %v3191
  %v3213 = vunpack.c.l.b16 %v3192
  %v3214 = vunpack.c.l.b16 %v3193
  %v3215 = vunpack.c.l.b16 %v3194
  %v3216 = vunpack.c.l.b16 %v3195
  %v3217 = vunpack.c.l.b16 %v3196
  %v3218 = vunpack.c.l.b16 %v3197
  %v3219 = vunpack.c.l.b16 %v3198
  %v3220 = vpack.c.b16 %v3213, %v3212
  %v3221 = vpack.c.b16 %v3215, %v3214
  %v3222 = vpack.c.b16 %v3217, %v3216
  %v3223 = vpack.c.b16 %v3219, %v3218
  %v3229 = vsel %vm811, %v3186, 0
  %v3232 = vsel %vm811, %v3187, 0
  %v3235 = vsel %vm811, %v3188, 0
  %v3238 = vsel %vm811, %v3189, 0
  %3240 = vmatprep.subr.bf16.mxu0 0
  %3241 = vmatpush1.bf16.msra.mxu0 %v3220
  %3242 = vmatprep.subr.bf16.mxu0 0
  %3243 = vmatpush1.bf16.msra.mxu0 %v3221
  %3244 = vmatprep.subr.bf16.mxu0 0
  %3245 = vmatpush1.bf16.msra.mxu0 %v3222
  %3246 = vmatprep.subr.bf16.mxu0 0
  %3247 = vmatpush1.bf16.msra.mxu0 %v3223
  %3248 = vmatprep.subr.bf16.mxu0 0
  %3249 = vmatpush1.bf16.msra.mxu0 0
  %3250 = vmatprep.subr.bf16.mxu0 0
  %3251 = vmatpush1.bf16.msra.mxu0 0
  %3252 = vmatprep.subr.bf16.mxu0 0
  %3253 = vmatpush1.bf16.msra.mxu0 0
  %3254 = vmatprep.subr.bf16.mxu0 0
  %3255 = vmatpush1.bf16.msra.mxu0 0
  %3256 = vmatprep.subr.bf16.mxu0 0
  %3257 = vmatpush1.bf16.msra.mxu0 0
  %3258 = vmatprep.subr.bf16.mxu0 0
  %3259 = vmatpush1.bf16.msra.mxu0 0
  %3260 = vmatprep.subr.bf16.mxu0 0
  %3261 = vmatpush1.bf16.msra.mxu0 0
  %3262 = vmatprep.subr.bf16.mxu0 0
  %3263 = vmatpush1.bf16.msra.mxu0 0
  %3264 = vmatprep.subr.bf16.mxu0 0
  %3265 = vmatpush1.bf16.msra.mxu0 0
  %3266 = vmatprep.subr.bf16.mxu0 0
  %3267 = vmatpush1.bf16.msra.mxu0 0
  %3268 = vmatprep.subr.bf16.mxu0 0
  %3269 = vmatpush1.bf16.msra.mxu0 0
  %3270 = vmatprep.subr.bf16.mxu0 0
  %3271 = vmatpush1.bf16.msra.mxu0 0
  %3272 = vmatprep.mubr.bf16.mxu0 0
  %3273 = vmatmul.mubr.bf16.gmra.mrb[0].mxu0 %v3229
  %v3274 = vpop.f32.mrb[0].mxu0
  %v3275 = vadd.f32 %v3203, %v3274
  %v3276 = vpop.f32.mrb[0].mxu0
  %v3277 = vpop.f32.mrb[0].mxu0
  %v3278 = vadd.f32 %v3203, %v3277
  %v3279 = vpop.f32.mrb[0].mxu0
  %3280 = vmatprep.mubr.bf16.mxu0 0
  %3281 = vmatmul.mubr.bf16.gmra.mrb[0].mxu0 %v3232
  %v3282 = vpop.f32.mrb[0].mxu0
  %v3283 = vadd.f32 %v3203, %v3282
  %v3284 = vpop.f32.mrb[0].mxu0
  %v3285 = vpop.f32.mrb[0].mxu0
  %v3286 = vadd.f32 %v3203, %v3285
  %v3287 = vpop.f32.mrb[0].mxu0
  %3288 = vmatprep.mubr.bf16.mxu0 0
  %3289 = vmatmul.mubr.bf16.gmra.mrb[0].mxu0 %v3235
  %v3290 = vpop.f32.mrb[0].mxu0
  %v3291 = vadd.f32 %v3203, %v3290
  %v3292 = vpop.f32.mrb[0].mxu0
  %v3293 = vpop.f32.mrb[0].mxu0
  %v3294 = vadd.f32 %v3203, %v3293
  %v3295 = vpop.f32.mrb[0].mxu0
  %3296 = vmatprep.mubr.bf16.mxu0 0
  %3297 = vmatmul.mubr.bf16.gmra.mrb[0].mxu0 %v3238
  %v3298 = vpop.f32.mrb[0].mxu0
  %v3299 = vadd.f32 %v3203, %v3298
  %v3300 = vpop.f32.mrb[0].mxu0
  %v3301 = vpop.f32.mrb[0].mxu0
  %v3302 = vadd.f32 %v3203, %v3301
  %v3303 = vpop.f32.mrb[0].mxu0
  %3304 = vdwg.mxu0
  %v3305 = vadd.f32 %v3004, %v3275
  %v3306 = vadd.f32 %v3005, %v3278
  %v3307 = vadd.f32 %v3006, %v3283
  %v3308 = vadd.f32 %v3007, %v3286
  %v3309 = vadd.f32 %v3008, %v3291
  %v3310 = vadd.f32 %v3009, %v3294
  %v3311 = vadd.f32 %v3010, %v3299
  %v3312 = vadd.f32 %v3011, %v3302
  %v3313 = vld [vmem:[%s6 + $0x14] sm:$0x1]
  %v3314 = vld [vmem:[%s6 + $0x15] sm:$0x1]
  %v3315 = vsel %vm382, %v3305, 0.0
  %3316 = vadd.xlane.f32.xlu0 %v3315
  %v3317 = vpop.xlane.xlu0 %3316
  %v3318 = vsel %vm382, %v3306, 0.0
  %3319 = vadd.xlane.f32.xlu0 %v3318
  %v3320 = vpop.xlane.xlu0 %3319
  %v3321 = vsel %vm382, %v3307, 0.0
  %3322 = vadd.xlane.f32.xlu0 %v3321
  %v3323 = vpop.xlane.xlu0 %3322
  %v3324 = vsel %vm382, %v3308, 0.0
  %3325 = vadd.xlane.f32.xlu0 %v3324
  %v3326 = vpop.xlane.xlu0 %3325
  %v3327 = vsel %vm382, %v3309, 0.0
  %3328 = vadd.xlane.f32.xlu0 %v3327
  %v3329 = vpop.xlane.xlu0 %3328
  %v3330 = vsel %vm382, %v3310, 0.0
  %3331 = vadd.xlane.f32.xlu0 %v3330
  %v3332 = vpop.xlane.xlu0 %3331
  %v3333 = vsel %vm382, %v3311, 0.0
  %3334 = vadd.xlane.f32.xlu0 %v3333
  %v3335 = vpop.xlane.xlu0 %3334
  %v3336 = vsel %vm382, %v3312, 0.0
  %3337 = vadd.xlane.f32.xlu0 %v3336
  %v3338 = vpop.xlane.xlu0 %3337
  %v3339 = vmul.f32 %v3317, %v407
  %v3340 = vmul.f32 %v3320, %v407
  %v3341 = vmul.f32 %v3323, %v407
  %v3342 = vmul.f32 %v3326, %v407
  %v3343 = vmul.f32 %v3329, %v407
  %v3344 = vmul.f32 %v3332, %v407
  %v3345 = vmul.f32 %v3335, %v407
  %v3346 = vmul.f32 %v3338, %v407
  %v3347 = vsub.f32 %v3305, %v3339
  %v3348 = vsub.f32 %v3306, %v3340
  %v3349 = vsub.f32 %v3307, %v3341
  %v3350 = vsub.f32 %v3308, %v3342
  %v3351 = vsub.f32 %v3309, %v3343
  %v3352 = vsub.f32 %v3310, %v3344
  %v3353 = vsub.f32 %v3311, %v3345
  %v3354 = vsub.f32 %v3312, %v3346
  %v3355 = vmul.f32 %v3347, %v3347
  %v3356 = vmul.f32 %v3348, %v3348
  %v3357 = vmul.f32 %v3349, %v3349
  %v3358 = vmul.f32 %v3350, %v3350
  %v3359 = vmul.f32 %v3351, %v3351
  %v3360 = vmul.f32 %v3352, %v3352
  %v3361 = vmul.f32 %v3353, %v3353
  %v3362 = vmul.f32 %v3354, %v3354
  %v3363 = vsel %vm382, %v3355, 0.0
  %3364 = vadd.xlane.f32.xlu0 %v3363
  %v3365 = vpop.xlane.xlu0 %3364
  %v3366 = vsel %vm382, %v3356, 0.0
  %3367 = vadd.xlane.f32.xlu0 %v3366
  %v3368 = vpop.xlane.xlu0 %3367
  %v3369 = vsel %vm382, %v3357, 0.0
  %3370 = vadd.xlane.f32.xlu0 %v3369
  %v3371 = vpop.xlane.xlu0 %3370
  %v3372 = vsel %vm382, %v3358, 0.0
  %3373 = vadd.xlane.f32.xlu0 %v3372
  %v3374 = vpop.xlane.xlu0 %3373
  %v3375 = vsel %vm382, %v3359, 0.0
  %3376 = vadd.xlane.f32.xlu0 %v3375
  %v3377 = vpop.xlane.xlu0 %3376
  %v3378 = vsel %vm382, %v3360, 0.0
  %3379 = vadd.xlane.f32.xlu0 %v3378
  %v3380 = vpop.xlane.xlu0 %3379
  %v3381 = vsel %vm382, %v3361, 0.0
  %3382 = vadd.xlane.f32.xlu0 %v3381
  %v3383 = vpop.xlane.xlu0 %3382
  %v3384 = vsel %vm382, %v3362, 0.0
  %3385 = vadd.xlane.f32.xlu0 %v3384
  %v3386 = vpop.xlane.xlu0 %3385
  %v3387 = vmul.f32 %v3365, %v407
  %v3388 = vmul.f32 %v3368, %v407
  %v3389 = vmul.f32 %v3371, %v407
  %v3390 = vmul.f32 %v3374, %v407
  %v3391 = vmul.f32 %v3377, %v407
  %v3392 = vmul.f32 %v3380, %v407
  %v3393 = vmul.f32 %v3383, %v407
  %v3394 = vmul.f32 %v3386, %v407
  %v3395 = vadd.f32 %v3387, 1e-12
  %v3396 = vadd.f32 %v3388, 1e-12
  %v3397 = vadd.f32 %v3389, 1e-12
  %v3398 = vadd.f32 %v3390, 1e-12
  %v3399 = vadd.f32 %v3391, 1e-12
  %v3400 = vadd.f32 %v3392, 1e-12
  %v3401 = vadd.f32 %v3393, 1e-12
  %v3402 = vadd.f32 %v3394, 1e-12
  %v3403 = vrsqrt.pop %v3395
  %v3404 = vrsqrt.pop %v3396
  %v3405 = vrsqrt.pop %v3397
  %v3406 = vrsqrt.pop %v3398
  %v3407 = vrsqrt.pop %v3399
  %v3408 = vrsqrt.pop %v3400
  %v3409 = vrsqrt.pop %v3401
  %v3410 = vrsqrt.pop %v3402
  %v3411 = vmul.f32 %v3347, %v3403
  %v3412 = vmul.f32 %v3348, %v3404
  %v3413 = vmul.f32 %v3349, %v3405
  %v3414 = vmul.f32 %v3350, %v3406
  %v3415 = vmul.f32 %v3351, %v3407
  %v3416 = vmul.f32 %v3352, %v3408
  %v3417 = vmul.f32 %v3353, %v3409
  %v3418 = vmul.f32 %v3354, %v3410
  %v3419 = vlaneseq
  %v3420 = vshrl.u32 %v3419, 7
  %v3421 = vsub.s32 0, %v3420
  %v3422 = vrot.slane %v3313, %v3421
  %v3423 = vmul.f32 %v3411, %v3422
  %v3424 = vmul.f32 %v3412, %v3422
  %v3425 = vmul.f32 %v3413, %v3422
  %v3426 = vmul.f32 %v3414, %v3422
  %v3427 = vmul.f32 %v3415, %v3422
  %v3428 = vmul.f32 %v3416, %v3422
  %v3429 = vmul.f32 %v3417, %v3422
  %v3430 = vmul.f32 %v3418, %v3422
  %v3431 = vlaneseq
  %v3432 = vshrl.u32 %v3431, 7
  %v3433 = vsub.s32 0, %v3432
  %v3434 = vrot.slane %v3314, %v3433
  %v3435 = vadd.f32 %v3423, %v3434
  %v3436 = vadd.f32 %v3424, %v3434
  %v3437 = vadd.f32 %v3425, %v3434
  %v3438 = vadd.f32 %v3426, %v3434
  %v3439 = vadd.f32 %v3427, %v3434
  %v3440 = vadd.f32 %v3428, %v3434
  %v3441 = vadd.f32 %v3429, %v3434
  %v3442 = vadd.f32 %v3430, %v3434
  %v3443 = vld [vmem:[%s2] sm:$0xff]
  %v3444 = vld [vmem:[%s2 + $0x8] sm:$0xff]
  %v3445 = vld [vmem:[%s2 + $0x10] sm:$0xff]
  %v3446 = vld [vmem:[%s2 + $0x18] sm:$0xff]
  %v3447 = vld [vmem:[%s2 + $0x20] sm:$0xff]
  %v3448 = vld [vmem:[%s2 + $0x28] sm:$0xff]
  %v3449 = vld [vmem:[%s2 + $0x30] sm:$0xf]
  %3450 = vset.pattern.permute.xlu0 0
  %3451 = vperm.xlu0 %3450, %v3443
  %v3452 = vpop.permute.xlu0 %3451
  %3453 = vset.pattern.permute.xlu0 0
  %3454 = vperm.xlu0 %3453, %v3444
  %v3455 = vpop.permute.xlu0 %3454
  %3456 = vset.pattern.permute.xlu0 0
  %3457 = vperm.xlu0 %3456, %v3445
  %v3458 = vpop.permute.xlu0 %3457
  %3459 = vset.pattern.permute.xlu0 0
  %3460 = vperm.xlu0 %3459, %v3446
  %v3461 = vpop.permute.xlu0 %3460
  %3462 = vset.pattern.permute.xlu0 0
  %3463 = vperm.xlu0 %3462, %v3447
  %v3464 = vpop.permute.xlu0 %3463
  %3465 = vset.pattern.permute.xlu0 0
  %3466 = vperm.xlu0 %3465, %v3448
  %v3467 = vpop.permute.xlu0 %3466
  %3468 = vset.pattern.permute.xlu0 0
  %3469 = vperm.xlu0 %3468, %v3449
  %v3470 = vpop.permute.xlu0 %3469
  %vm3471 = vcmp.eq.s32.totalorder %v36, %v3452
  %vm3472 = vcmp.eq.s32.totalorder %v36, %v3455
  %vm3473 = vcmp.eq.s32.totalorder %v36, %v3458
  %vm3474 = vcmp.eq.s32.totalorder %v36, %v3461
  %vm3475 = vcmp.eq.s32.totalorder %v36, %v3464
  %vm3476 = vcmp.eq.s32.totalorder %v36, %v3467
  %vm3477 = vcmp.eq.s32.totalorder %v36, %v3470
  %v3478 = vsel %vm3471, 1, 0
  %v3479 = vsel %vm3472, 1, 0
  %v3480 = vsel %vm3473, 1, 0
  %v3481 = vsel %vm3474, 1, 0
  %v3482 = vsel %vm3475, 1, 0
  %v3483 = vsel %vm3476, 1, 0
  %v3484 = vsel %vm3477, 1, 0
  %v3485 = vcvt.s32.f32 %v3478
  %v3486 = vcvt.s32.f32 %v3479
  %v3487 = vcvt.s32.f32 %v3480
  %v3488 = vcvt.s32.f32 %v3481
  %v3489 = vcvt.s32.f32 %v3482
  %v3490 = vcvt.s32.f32 %v3483
  %v3491 = vcvt.s32.f32 %v3484
  %v3492 = vpack.c.bf16 %v3486, %v3485
  %v3493 = vpack.c.bf16 %v3488, %v3487
  %v3494 = vpack.c.bf16 %v3490, %v3489
  %v3495 = vpack.c.bf16 %v3491, %v3491
  %v3496 = vpack.c.bf16 %v3436, %v3435
  %v3497 = vpack.c.bf16 %v3438, %v3437
  %v3498 = vpack.c.bf16 %v3440, %v3439
  %v3499 = vpack.c.bf16 %v3442, %v3441
  %v3501 = vsel %vm811, %v3492, 0
  %v3504 = vsel %vm811, %v3493, 0
  %v3507 = vsel %vm811, %v3494, 0
  %v3510 = vsel %vm811, %v3495, 0
  %3512 = vmatprep.subr.bf16.mxu0 0
  %3513 = vmatpush1.bf16.msra.mxu0 %v3496
  %3514 = vmatprep.subr.bf16.mxu0 0
  %3515 = vmatpush1.bf16.msra.mxu0 %v3497
  %3516 = vmatprep.subr.bf16.mxu0 0
  %3517 = vmatpush1.bf16.msra.mxu0 %v3498
  %3518 = vmatprep.subr.bf16.mxu0 0
  %3519 = vmatpush1.bf16.msra.mxu0 %v3499
  %3520 = vmatprep.subr.bf16.mxu0 0
  %3521 = vmatpush1.bf16.msra.mxu0 0
  %3522 = vmatprep.subr.bf16.mxu0 0
  %3523 = vmatpush1.bf16.msra.mxu0 0
  %3524 = vmatprep.subr.bf16.mxu0 0
  %3525 = vmatpush1.bf16.msra.mxu0 0
  %3526 = vmatprep.subr.bf16.mxu0 0
  %3527 = vmatpush1.bf16.msra.mxu0 0
  %3528 = vmatprep.subr.bf16.mxu0 0
  %3529 = vmatpush1.bf16.msra.mxu0 0
  %3530 = vmatprep.subr.bf16.mxu0 0
  %3531 = vmatpush1.bf16.msra.mxu0 0
  %3532 = vmatprep.subr.bf16.mxu0 0
  %3533 = vmatpush1.bf16.msra.mxu0 0
  %3534 = vmatprep.subr.bf16.mxu0 0
  %3535 = vmatpush1.bf16.msra.mxu0 0
  %3536 = vmatprep.subr.bf16.mxu0 0
  %3537 = vmatpush1.bf16.msra.mxu0 0
  %3538 = vmatprep.subr.bf16.mxu0 0
  %3539 = vmatpush1.bf16.msra.mxu0 0
  %3540 = vmatprep.subr.bf16.mxu0 0
  %3541 = vmatpush1.bf16.msra.mxu0 0
  %3542 = vmatprep.subr.bf16.mxu0 0
  %3543 = vmatpush1.bf16.msra.mxu0 0
  %3544 = vmatprep.mubr.bf16.mxu0 0
  %3545 = vmatmul.mubr.bf16.gmra.mrb[0].mxu0 %v3501
  %v3546 = vpop.f32.mrb[0].mxu0
  %v3547 = vadd.f32 0.0, %v3546
  %v3548 = vpop.f32.mrb[0].mxu0
  %v3549 = vpop.f32.mrb[0].mxu0
  %v3550 = vadd.f32 0.0, %v3549
  %v3551 = vpop.f32.mrb[0].mxu0
  %3552 = vmatprep.mubr.bf16.mxu0 0
  %3553 = vmatmul.mubr.bf16.gmra.mrb[0].mxu0 %v3504
  %v3554 = vpop.f32.mrb[0].mxu0
  %v3555 = vadd.f32 0.0, %v3554
  %v3556 = vpop.f32.mrb[0].mxu0
  %v3557 = vpop.f32.mrb[0].mxu0
  %v3558 = vadd.f32 0.0, %v3557
  %v3559 = vpop.f32.mrb[0].mxu0
  %3560 = vmatprep.mubr.bf16.mxu0 0
  %3561 = vmatmul.mubr.bf16.gmra.mrb[0].mxu0 %v3507
  %v3562 = vpop.f32.mrb[0].mxu0
  %v3563 = vadd.f32 0.0, %v3562
  %v3564 = vpop.f32.mrb[0].mxu0
  %v3565 = vpop.f32.mrb[0].mxu0
  %v3566 = vadd.f32 0.0, %v3565
  %v3567 = vpop.f32.mrb[0].mxu0
  %3568 = vmatprep.mubr.bf16.mxu0 0
  %3569 = vmatmul.mubr.bf16.gmra.mrb[0].mxu0 %v3510
  %v3570 = vpop.f32.mrb[0].mxu0
  %v3571 = vadd.f32 0.0, %v3570
  %v3572 = vpop.f32.mrb[0].mxu0
  %v3573 = vpop.f32.mrb[0].mxu0
  %v3574 = vpop.f32.mrb[0].mxu0
  %3575 = vdwg.mxu0
  %3576 = vst.msk [vmem:[%s7] sm:$0xff] %vm382, %v3547
  %3577 = vst.msk [vmem:[%s7 + $0x8] sm:$0xff] %vm382, %v3550
  %3578 = vst.msk [vmem:[%s7 + $0x10] sm:$0xff] %vm382, %v3555
  %3579 = vst.msk [vmem:[%s7 + $0x18] sm:$0xff] %vm382, %v3558
  %3580 = vst.msk [vmem:[%s7 + $0x20] sm:$0xff] %vm382, %v3563
  %3581 = vst.msk [vmem:[%s7 + $0x28] sm:$0xff] %vm382, %v3566
  %vm3582 = vcmask 257024
  %3583 = vst.msk [vmem:[%s7 + $0x30] sm:$0xf] %vm3582, %v3571
  // Predicated region
  $region30: #{bert_context_embedder_forward.1} parent=0 // pred_check
    _
  $region31: #{bert_context_embedder_forward.1} parent=0 // pred_check_branch
    %3585 = sbr.rel (0) target = $region33
  $region32: #{bert_context_embedder_forward.1} parent=0 // pred_region
    _
  $region33: #{bert_context_embedder_forward.1} parent=0 // pred_fallthru
    _
  // Predicated region
  $region34: #{bert_context_embedder_forward.1} parent=0 // pred_check
    _
  $region35: #{bert_context_embedder_forward.1} parent=0 // pred_check_branch
    %3587 = sbr.rel (0) target = $region37
  $region36: #{bert_context_embedder_forward.1} parent=0 // pred_region
    _
  $region37: #{bert_context_embedder_forward.1} parent=0 // pred_fallthru
    _

</llo_original>
